<compile_context>
chip_gen: v7x
topology: tpu7x:2x2x1
jax: 0.10.0
libtpu: 0.0.40
codegen_flags: <defaults>
</compile_context>

<pallas_src>
import math

import jax
import jax.numpy as jnp
import numpy as np
from jax.experimental import pallas as pl
from jax.experimental.pallas import tpu as pltpu


def _gelu_tanh(x):
    # TODO(synk): torch nn.GELU defaults to exact erf GELU; tanh approximation used here.
    return 0.5 * x * (1.0 + jnp.tanh(0.7978845608028654 * (x + 0.044715 * x * x * x)))


def _cycle_offsets(C, k):
    # CycleFC.gen_offset for kernel (1,k) or (k,1): off[i] = (i + k//2) % k - k//2
    start = k // 2
    return (np.arange(C) + start) % k - k // 2


# ----------------------------- Pallas kernel ---------------------------------
def _make_kernel(W):
    """Kernel closure over the static feature-map width W (row stride of the flattened index)."""

    def kernel(x_ref, bm_ref, cm_ref, wc_ref, wh_ref, ww_ref, bh_ref, bw_ref,
               rw1_ref, rb1_ref, rw2_ref, rb2_ref, wp_ref, bp_ref, o_ref):
        N, C = x_ref.shape
        f32 = jnp.float32

        x = x_ref[...]                      # (N, C) compute dtype (bf16)
        xf = x.astype(f32)

        # ---- in-kernel per-channel cyclic shifts (kernel size 3 => offsets in {-1,0,+1}) ----
        def shift_rows(v, k):
            # out[i] = v[i + k] for 0 <= i + k < N, else 0  (k is a static Python int)
            z = jnp.zeros((abs(k), v.shape[1]), dtype=v.dtype)
            if k > 0:
                return jnp.concatenate([v[k:, :], z], axis=0)
            return jnp.concatenate([z, v[: v.shape[0] + k, :]], axis=0)

        c_0 = cm_ref[0:1, :]                # channels with offset  0   (1, C)
        c_p1 = cm_ref[1:2, :]               # channels with offset +1
        c_m1 = cm_ref[2:3, :]               # channels with offset -1
        w_has_next = bm_ref[:, 0:1]         # w < W-1                   (N, 1)
        w_has_prev = bm_ref[:, 1:2]         # w > 0

        # sfc_h input: shift along W -> flattened-row shift by +/-1 + row-boundary mask
        xh = (xf * c_0
              + shift_rows(xf, 1) * w_has_next * c_p1
              + shift_rows(xf, -1) * w_has_prev * c_m1)
        # sfc_w input: shift along H -> flattened-row shift by +/-W (zero pad covers H edges)
        xw = (xf * c_0
              + shift_rows(xf, W) * c_p1
              + shift_rows(xf, -W) * c_m1)

        # ---- gates from the global average pool (linearity of the mean) ----
        mean_x = jnp.mean(xf, axis=0, keepdims=True)     # (1, C) f32
        mean_h = jnp.mean(xh, axis=0, keepdims=True)
        mean_w = jnp.mean(xw, axis=0, keepdims=True)

        wc_t = wc_ref[...].astype(f32)      # (C, C) = mlp_c.weight^T
        wh_t = wh_ref[...].astype(f32)      # sfc_h.weight^T
        ww_t = ww_ref[...].astype(f32)      # sfc_w.weight^T

        pooled = (jnp.dot(mean_h, wh_t, preferred_element_type=f32)
                  + jnp.dot(mean_w, ww_t, preferred_element_type=f32)
                  + jnp.dot(mean_x, wc_t, preferred_element_type=f32)
                  + bh_ref[...] + bw_ref[...])           # (1, C) == mean(h + w + c)

        z = jnp.dot(pooled, rw1_ref[...], preferred_element_type=f32) + rb1_ref[...]
        z = _gelu_tanh(z)
        z = jnp.dot(z, rw2_ref[...], preferred_element_type=f32) + rb2_ref[...]   # (1, 3C)

        l_h = z[:, 0:C]
        l_w = z[:, C:2 * C]
        l_c = z[:, 2 * C:3 * C]
        m = jnp.maximum(jnp.maximum(l_h, l_w), l_c)
        e_h = jnp.exp(l_h - m)
        e_w = jnp.exp(l_w - m)
        e_c = jnp.exp(l_c - m)
        s = e_h + e_w + e_c
        g_h = e_h / s
        g_w = e_w / s
        g_c = e_c / s                                    # (1, C) softmax gates

        # ---- fold gates AND proj into per-branch fused weights (per-step cost ~3*C^3) ----
        wp_t = wp_ref[...]                               # (C, C) f32 = proj.weight^T
        cdt = x.dtype
        wf_h = jnp.dot(wh_t * g_h, wp_t, preferred_element_type=f32).astype(cdt)
        wf_w = jnp.dot(ww_t * g_w, wp_t, preferred_element_type=f32).astype(cdt)
        wf_c = jnp.dot(wc_t * g_c, wp_t, preferred_element_type=f32).astype(cdt)
        # biases must be gated too (mlp_c has no bias)
        bias = jnp.dot(g_h * bh_ref[...] + g_w * bw_ref[...], wp_t,
                       preferred_element_type=f32) + bp_ref[...]          # (1, C)

        # ---- single pass over the spatial data: three bf16 MXU dots + bias ----
        y = (jnp.dot(x, wf_c, preferred_element_type=f32)
             + jnp.dot(xh.astype(cdt), wf_h, preferred_element_type=f32)
             + jnp.dot(xw.astype(cdt), wf_w, preferred_element_type=f32)
             + bias)
        o_ref[...] = y.astype(o_ref.dtype)

    return kernel


# ----------------------------- wrapper ----------------------------------------
def cycle_attn(x, p, *, compute_dtype=jnp.bfloat16):
    B, H, W, C = x.shape
    N = H * W
    hid = C // 4
    cd = compute_dtype
    f32 = jnp.float32

    # per-channel cyclic offsets (kernel size 3; identical pattern for the W and H shifts)
    off = _cycle_offsets(C, 3)
    cmask = np.stack([off == 0, off == 1, off == -1]).astype(np.float32)      # (3, C)

    # W-direction validity masks on the flattened spatial index n = h*W + w
    w_idx = np.arange(N) % W
    bmask = np.stack([w_idx < W - 1, w_idx > 0], axis=1).astype(np.float32)   # (N, 2)

    # permute reweight fc2 rows so the gates come out as [gate_h | gate_w | gate_c]:
    # permuted row (j*C + c) <- original row (c*3 + j)
    pos = np.arange(3 * C)
    perm = (pos % C) * 3 + (pos // C)

    # pre-transposed weights (in_features, out_features) -> no in-kernel transposes
    wc_t = p["wc"].T.astype(cd)
    wh_t = p["wh"].T.astype(cd)
    ww_t = p["ww"].T.astype(cd)
    wp_t = p["wp"].T.astype(f32)          # f32: only used in the tiny per-step weight fusion
    rw1_t = p["rw1"].T.astype(f32)
    rw2_t = p["rw2"][perm].T.astype(f32)
    rb2 = p["rb2"][perm].reshape(1, 3 * C).astype(f32)

    x_flat = x.reshape(B, N, C).astype(cd)

    def const_spec(shape):
        nd = len(shape)

        def imap(b):
            return (0,) * nd

        return pl.BlockSpec(shape, imap)

    spatial_in = pl.BlockSpec((None, N, C), lambda b: (b, 0, 0))
    spatial_out = pl.BlockSpec((None, N, C), lambda b: (b, 0, 0))

    out = pl.pallas_call(
        _make_kernel(W),
        out_shape=jax.ShapeDtypeStruct((B, N, C), x.dtype),
        grid_spec=pltpu.PrefetchScalarGridSpec(
            num_scalar_prefetch=0,
            grid=(B,),
            in_specs=[
                spatial_in,                   # x (flattened, bf16)
                const_spec((N, 2)),           # W-boundary masks
                const_spec((3, C)),           # channel offset masks
                const_spec((C, C)),           # mlp_c.weight^T
                const_spec((C, C)),           # sfc_h.weight^T
                const_spec((C, C)),           # sfc_w.weight^T
                const_spec((1, C)),           # sfc_h.bias
                const_spec((1, C)),           # sfc_w.bias
                const_spec((C, hid)),         # reweight fc1^T
                const_spec((1, hid)),         # reweight fc1 bias
                const_spec((hid, 3 * C)),     # reweight fc2^T (permuted)
                const_spec((1, 3 * C)),       # reweight fc2 bias (permuted)
                const_spec((C, C)),           # proj.weight^T
                const_spec((1, C)),           # proj.bias
            ],
            out_specs=spatial_out,
        ),
        compiler_params=pltpu.CompilerParams(
            dimension_semantics=("parallel",),
        ),
    )(x_flat, jnp.asarray(bmask), jnp.asarray(cmask),
      wc_t, wh_t, ww_t,
      p["bh"].reshape(1, C).astype(f32), p["bw"].reshape(1, C).astype(f32),
      rw1_t, p["rb1"].reshape(1, hid).astype(f32),
      rw2_t, rb2,
      wp_t, p["bp"].reshape(1, C).astype(f32))

    return out.reshape(B, H, W, C)


# ----------------------------- parameters -------------------------------------
def _linear_init(key, out_f, in_f, bias=True):
    # matches torch Linear default / kaiming_uniform_(a=sqrt(5)) bound = 1/sqrt(fan_in)
    kw, kb = jax.random.split(key)
    bound = 1.0 / math.sqrt(in_f)
    w = jax.random.uniform(kw, (out_f, in_f), jnp.float32, -bound, bound)
    b = jax.random.uniform(kb, (out_f,), jnp.float32, -bound, bound) if bias else None
    return w, b


def init_params(key, C):
    hid = C // 4
    k1, k2, k3, k4, k5, k6 = jax.random.split(key, 6)
    wc, _ = _linear_init(k1, C, C, bias=False)        # mlp_c (no bias)
    wh, bh = _linear_init(k2, C, C)                    # sfc_h: weight [C,C,1,1] -> [C,C]
    ww, bw = _linear_init(k3, C, C)                    # sfc_w
    rw1, rb1 = _linear_init(k4, hid, C)                # reweight fc1
    rw2, rb2 = _linear_init(k5, 3 * C, hid)            # reweight fc2
    wp, bp = _linear_init(k6, C, C)                    # proj
    return dict(wc=wc, wh=wh, bh=bh, ww=ww, bw=bw,
                rw1=rw1, rb1=rb1, rw2=rw2, rb2=rb2, wp=wp, bp=bp)


# ----------------------------- pure-JAX reference ------------------------------
def _shift(x, d, axis):
    """x_shift[..., i, ...] = x[..., i + d, ...], zero outside bounds."""
    if d == 0:
        return x
    n = x.shape[axis]
    sl = [slice(None)] * x.ndim
    pad = [(0, 0)] * x.ndim
    if d > 0:
        sl[axis] = slice(d, None)
        pad[axis] = (0, d)
    else:
        sl[axis] = slice(0, n + d)
        pad[axis] = (-d, 0)
    return jnp.pad(x[tuple(sl)], pad)


def _cycle_shift(x, offs, axis):
    """Per-channel shift: out[..., p, ci] = x[..., p + offs[ci], ci] (zeros OOB)."""
    out = jnp.zeros_like(x)
    for d in (-1, 0, 1):
        mask = jnp.asarray((offs == d).astype(np.float32), dtype=x.dtype)  # [C]
        out = out + _shift(x, d, axis) * mask
    return out


def cycle_attn_ref(x, p):
    B, H, W, C = x.shape
    dx = _cycle_offsets(C, 3)   # sfc_h: shift along W
    dy = _cycle_offsets(C, 3)   # sfc_w: shift along H
    xh = _cycle_shift(x, dx, axis=2)
    xw = _cycle_shift(x, dy, axis=1)
    h = jnp.einsum("bhwc,oc->bhwo", xh, p["wh"]) + p["bh"]
    w = jnp.einsum("bhwc,oc->bhwo", xw, p["ww"]) + p["bw"]
    c = jnp.einsum("bhwc,oc->bhwo", x, p["wc"])
    a = (h + w + c).mean(axis=(1, 2))                        # [B, C]
    z = a @ p["rw1"].T + p["rb1"]
    z = _gelu_tanh(z)
    z = z @ p["rw2"].T + p["rb2"]                            # [B, 3C] interleaved (c*3+j)
    attn = jax.nn.softmax(z.reshape(B, C, 3), axis=2)        # softmax over the 3 branches
    a0 = attn[:, :, 0][:, None, None, :]
    a1 = attn[:, :, 1][:, None, None, :]
    a2 = attn[:, :, 2][:, None, None, :]
    y = h * a0 + w * a1 + c * a2
    return jnp.einsum("bhwc,oc->bhwo", y, p["wp"]) + p["bp"]


if __name__ == "__main__":
    B, H, W, C = 2, 16, 16, 32
    key = jax.random.PRNGKey(0)
    kx, kp = jax.random.split(key)
    x = jax.random.normal(kx, (B, H, W, C), jnp.float32)
    params = init_params(kp, C)

    out = jax.jit(cycle_attn)(x, params)
    out = jax.block_until_ready(out)

    ref = cycle_attn_ref(x, params)
    # kernel runs its spatial matmul path in bf16 -> compare against f32 reference loosely
    np.testing.assert_allclose(np.asarray(out), np.asarray(ref), atol=2e-2, rtol=2e-2)
    print("KERNEL_OK")
</pallas_src>

<mosaic_0001>
module attributes {stable_mosaic.version = 11 : i64} {
  func.func @kernel(%arg0: i32, %arg1: memref<1x256x32xbf16, #tpu.memory_space<vmem>>, %arg2: memref<256x2xf32, #tpu.memory_space<vmem>>, %arg3: memref<3x32xf32, #tpu.memory_space<vmem>>, %arg4: memref<32x32xbf16, #tpu.memory_space<vmem>>, %arg5: memref<32x32xbf16, #tpu.memory_space<vmem>>, %arg6: memref<32x32xbf16, #tpu.memory_space<vmem>>, %arg7: memref<1x32xf32, #tpu.memory_space<vmem>>, %arg8: memref<1x32xf32, #tpu.memory_space<vmem>>, %arg9: memref<32x8xf32, #tpu.memory_space<vmem>>, %arg10: memref<1x8xf32, #tpu.memory_space<vmem>>, %arg11: memref<8x96xf32, #tpu.memory_space<vmem>>, %arg12: memref<1x96xf32, #tpu.memory_space<vmem>>, %arg13: memref<32x32xf32, #tpu.memory_space<vmem>>, %arg14: memref<1x32xf32, #tpu.memory_space<vmem>>, %arg15: memref<1x256x32xf32, #tpu.memory_space<vmem>>) attributes {dimension_semantics = [#tpu.dimension_semantics<parallel>], iteration_bounds = array<i64: 2>, scalar_prefetch = 0 : i64, scratch_operands = 0 : i64, tpu.core_type = #tpu.core_type<tc>, window_params = [{transform_indices = @transform_0, window_bounds = array<i64: 1, 256, 32>}, {pipeline_mode = #tpu.pipeline_mode<synchronous>, transform_indices = @transform_1, window_bounds = array<i64: 256, 2>}, {pipeline_mode = #tpu.pipeline_mode<synchronous>, transform_indices = @transform_2, window_bounds = array<i64: 3, 32>}, {pipeline_mode = #tpu.pipeline_mode<synchronous>, transform_indices = @transform_3, window_bounds = array<i64: 32, 32>}, {pipeline_mode = #tpu.pipeline_mode<synchronous>, transform_indices = @transform_4, window_bounds = array<i64: 32, 32>}, {pipeline_mode = #tpu.pipeline_mode<synchronous>, transform_indices = @transform_5, window_bounds = array<i64: 32, 32>}, {pipeline_mode = #tpu.pipeline_mode<synchronous>, transform_indices = @transform_6, window_bounds = array<i64: 1, 32>}, {pipeline_mode = #tpu.pipeline_mode<synchronous>, transform_indices = @transform_7, window_bounds = array<i64: 1, 32>}, {pipeline_mode = #tpu.pipeline_mode<synchronous>, transform_indices = @transform_8, window_bounds = array<i64: 32, 8>}, {pipeline_mode = #tpu.pipeline_mode<synchronous>, transform_indices = @transform_9, window_bounds = array<i64: 1, 8>}, {pipeline_mode = #tpu.pipeline_mode<synchronous>, transform_indices = @transform_10, window_bounds = array<i64: 8, 96>}, {pipeline_mode = #tpu.pipeline_mode<synchronous>, transform_indices = @transform_11, window_bounds = array<i64: 1, 96>}, {pipeline_mode = #tpu.pipeline_mode<synchronous>, transform_indices = @transform_12, window_bounds = array<i64: 32, 32>}, {pipeline_mode = #tpu.pipeline_mode<synchronous>, transform_indices = @transform_13, window_bounds = array<i64: 1, 32>}, {transform_indices = @transform_14, window_bounds = array<i64: 1, 256, 32>}]} {
    %c0 = arith.constant 0 : index
    %c0_0 = arith.constant 0 : index
    %c0_1 = arith.constant 0 : index
    %0 = vector.load %arg1[%c0, %c0_0, %c0_1] : memref<1x256x32xbf16, #tpu.memory_space<vmem>>, vector<1x256x32xbf16>
    %1 = vector.shape_cast %0 : vector<1x256x32xbf16> to vector<256x32xbf16>
    %2 = arith.extf %1 : vector<256x32xbf16> to vector<256x32xf32>
    %c0_2 = arith.constant 0 : index
    %c0_3 = arith.constant 0 : index
    %3 = vector.load %arg3[%c0_2, %c0_3] : memref<3x32xf32, #tpu.memory_space<vmem>>, vector<1x32xf32>
    %c1 = arith.constant 1 : index
    %c0_4 = arith.constant 0 : index
    %4 = vector.load %arg3[%c1, %c0_4] : memref<3x32xf32, #tpu.memory_space<vmem>>, vector<1x32xf32>
    %c2 = arith.constant 2 : index
    %c0_5 = arith.constant 0 : index
    %5 = vector.load %arg3[%c2, %c0_5] : memref<3x32xf32, #tpu.memory_space<vmem>>, vector<1x32xf32>
    %c0_6 = arith.constant 0 : index
    %c0_7 = arith.constant 0 : index
    %6 = vector.load %arg2[%c0_6, %c0_7] : memref<256x2xf32, #tpu.memory_space<vmem>>, vector<256x1xf32>
    %c0_8 = arith.constant 0 : index
    %c1_9 = arith.constant 1 : index
    %7 = vector.load %arg2[%c0_8, %c1_9] : memref<256x2xf32, #tpu.memory_space<vmem>>, vector<256x1xf32>
    %8 = vector.broadcast %3 : vector<1x32xf32> to vector<256x32xf32>
    %9 = arith.mulf %2, %8 : vector<256x32xf32>
    %cst = arith.constant 0.000000e+00 : f32
    %10 = vector.broadcast %cst : f32 to vector<1x32xf32>
    %11 = vector.extract_strided_slice %2 {offsets = [1, 0], sizes = [255, 32], strides = [1, 1]} : vector<256x32xf32> to vector<255x32xf32>
    %12 = tpu.concatenate %11, %10 in 0 : vector<255x32xf32>, vector<1x32xf32> -> vector<256x32xf32>
    %13 = vector.broadcast %6 : vector<256x1xf32> to vector<256x32xf32>
    %14 = arith.mulf %12, %13 : vector<256x32xf32>
    %15 = vector.broadcast %4 : vector<1x32xf32> to vector<256x32xf32>
    %16 = arith.mulf %14, %15 : vector<256x32xf32>
    %17 = arith.addf %9, %16 : vector<256x32xf32>
    %cst_10 = arith.constant 0.000000e+00 : f32
    %18 = vector.broadcast %cst_10 : f32 to vector<1x32xf32>
    %19 = vector.extract_strided_slice %2 {offsets = [0, 0], sizes = [255, 32], strides = [1, 1]} : vector<256x32xf32> to vector<255x32xf32>
    %20 = tpu.concatenate %18, %19 in 0 : vector<1x32xf32>, vector<255x32xf32> -> vector<256x32xf32>
    %21 = vector.broadcast %7 : vector<256x1xf32> to vector<256x32xf32>
    %22 = arith.mulf %20, %21 : vector<256x32xf32>
    %23 = vector.broadcast %5 : vector<1x32xf32> to vector<256x32xf32>
    %24 = arith.mulf %22, %23 : vector<256x32xf32>
    %25 = arith.addf %17, %24 : vector<256x32xf32>
    %26 = vector.broadcast %3 : vector<1x32xf32> to vector<256x32xf32>
    %27 = arith.mulf %2, %26 : vector<256x32xf32>
    %cst_11 = arith.constant 0.000000e+00 : f32
    %28 = vector.broadcast %cst_11 : f32 to vector<16x32xf32>
    %29 = vector.extract_strided_slice %2 {offsets = [16, 0], sizes = [240, 32], strides = [1, 1]} : vector<256x32xf32> to vector<240x32xf32>
    %30 = tpu.concatenate %29, %28 in 0 : vector<240x32xf32>, vector<16x32xf32> -> vector<256x32xf32>
    %31 = vector.broadcast %4 : vector<1x32xf32> to vector<256x32xf32>
    %32 = arith.mulf %30, %31 : vector<256x32xf32>
    %33 = arith.addf %27, %32 : vector<256x32xf32>
    %cst_12 = arith.constant 0.000000e+00 : f32
    %34 = vector.broadcast %cst_12 : f32 to vector<16x32xf32>
    %35 = vector.extract_strided_slice %2 {offsets = [0, 0], sizes = [240, 32], strides = [1, 1]} : vector<256x32xf32> to vector<240x32xf32>
    %36 = tpu.concatenate %34, %35 in 0 : vector<16x32xf32>, vector<240x32xf32> -> vector<256x32xf32>
    %37 = vector.broadcast %5 : vector<1x32xf32> to vector<256x32xf32>
    %38 = arith.mulf %36, %37 : vector<256x32xf32>
    %39 = arith.addf %33, %38 : vector<256x32xf32>
    %cst_13 = arith.constant dense<0.000000e+00> : vector<32xf32>
    %40 = vector.multi_reduction <add>, %2, %cst_13 [0] : vector<256x32xf32> to vector<32xf32>
    %41 = vector.shape_cast %40 : vector<32xf32> to vector<1x32xf32>
    %cst_14 = arith.constant 2.560000e+02 : f32
    %42 = vector.broadcast %cst_14 : f32 to vector<1x32xf32>
    %43 = arith.divf %41, %42 : vector<1x32xf32>
    %cst_15 = arith.constant dense<0.000000e+00> : vector<32xf32>
    %44 = vector.multi_reduction <add>, %25, %cst_15 [0] : vector<256x32xf32> to vector<32xf32>
    %45 = vector.shape_cast %44 : vector<32xf32> to vector<1x32xf32>
    %cst_16 = arith.constant 2.560000e+02 : f32
    %46 = vector.broadcast %cst_16 : f32 to vector<1x32xf32>
    %47 = arith.divf %45, %46 : vector<1x32xf32>
    %cst_17 = arith.constant dense<0.000000e+00> : vector<32xf32>
    %48 = vector.multi_reduction <add>, %39, %cst_17 [0] : vector<256x32xf32> to vector<32xf32>
    %49 = vector.shape_cast %48 : vector<32xf32> to vector<1x32xf32>
    %cst_18 = arith.constant 2.560000e+02 : f32
    %50 = vector.broadcast %cst_18 : f32 to vector<1x32xf32>
    %51 = arith.divf %49, %50 : vector<1x32xf32>
    %c0_19 = arith.constant 0 : index
    %c0_20 = arith.constant 0 : index
    %52 = vector.load %arg4[%c0_19, %c0_20] : memref<32x32xbf16, #tpu.memory_space<vmem>>, vector<32x32xbf16>
    %53 = arith.extf %52 : vector<32x32xbf16> to vector<32x32xf32>
    %c0_21 = arith.constant 0 : index
    %c0_22 = arith.constant 0 : index
    %54 = vector.load %arg5[%c0_21, %c0_22] : memref<32x32xbf16, #tpu.memory_space<vmem>>, vector<32x32xbf16>
    %55 = arith.extf %54 : vector<32x32xbf16> to vector<32x32xf32>
    %c0_23 = arith.constant 0 : index
    %c0_24 = arith.constant 0 : index
    %56 = vector.load %arg6[%c0_23, %c0_24] : memref<32x32xbf16, #tpu.memory_space<vmem>>, vector<32x32xbf16>
    %57 = arith.extf %56 : vector<32x32xbf16> to vector<32x32xf32>
    %cst_25 = arith.constant dense<0.000000e+00> : vector<1x32xf32>
    %58 = tpu.matmul %47, %55, %cst_25 {dimension_numbers = #tpu.dot_dimension_numbers<[1], [0], [0], [1], [0, 0, 1, 1], [], []>} : vector<1x32xf32>, vector<32x32xf32>, vector<1x32xf32> -> vector<1x32xf32>
    %cst_26 = arith.constant dense<0.000000e+00> : vector<1x32xf32>
    %59 = tpu.matmul %51, %57, %cst_26 {dimension_numbers = #tpu.dot_dimension_numbers<[1], [0], [0], [1], [0, 0, 1, 1], [], []>} : vector<1x32xf32>, vector<32x32xf32>, vector<1x32xf32> -> vector<1x32xf32>
    %60 = arith.addf %58, %59 : vector<1x32xf32>
    %cst_27 = arith.constant dense<0.000000e+00> : vector<1x32xf32>
    %61 = tpu.matmul %43, %53, %cst_27 {dimension_numbers = #tpu.dot_dimension_numbers<[1], [0], [0], [1], [0, 0, 1, 1], [], []>} : vector<1x32xf32>, vector<32x32xf32>, vector<1x32xf32> -> vector<1x32xf32>
    %62 = arith.addf %60, %61 : vector<1x32xf32>
    %c0_28 = arith.constant 0 : index
    %c0_29 = arith.constant 0 : index
    %63 = vector.load %arg7[%c0_28, %c0_29] : memref<1x32xf32, #tpu.memory_space<vmem>>, vector<1x32xf32>
    %64 = arith.addf %62, %63 : vector<1x32xf32>
    %c0_30 = arith.constant 0 : index
    %c0_31 = arith.constant 0 : index
    %65 = vector.load %arg8[%c0_30, %c0_31] : memref<1x32xf32, #tpu.memory_space<vmem>>, vector<1x32xf32>
    %66 = arith.addf %64, %65 : vector<1x32xf32>
    %c0_32 = arith.constant 0 : index
    %c0_33 = arith.constant 0 : index
    %67 = vector.load %arg9[%c0_32, %c0_33] : memref<32x8xf32, #tpu.memory_space<vmem>>, vector<32x8xf32>
    %cst_34 = arith.constant dense<0.000000e+00> : vector<1x8xf32>
    %68 = tpu.matmul %66, %67, %cst_34 {dimension_numbers = #tpu.dot_dimension_numbers<[1], [0], [0], [1], [0, 0, 1, 1], [], []>} : vector<1x32xf32>, vector<32x8xf32>, vector<1x8xf32> -> vector<1x8xf32>
    %c0_35 = arith.constant 0 : index
    %c0_36 = arith.constant 0 : index
    %69 = vector.load %arg10[%c0_35, %c0_36] : memref<1x8xf32, #tpu.memory_space<vmem>>, vector<1x8xf32>
    %70 = arith.addf %68, %69 : vector<1x8xf32>
    %cst_37 = arith.constant 5.000000e-01 : f32
    %71 = vector.broadcast %cst_37 : f32 to vector<1x8xf32>
    %72 = arith.mulf %71, %70 : vector<1x8xf32>
    %cst_38 = arith.constant 4.471500e-02 : f32
    %73 = vector.broadcast %cst_38 : f32 to vector<1x8xf32>
    %74 = arith.mulf %73, %70 : vector<1x8xf32>
    %75 = arith.mulf %74, %70 : vector<1x8xf32>
    %76 = arith.mulf %75, %70 : vector<1x8xf32>
    %77 = arith.addf %70, %76 : vector<1x8xf32>
    %cst_39 = arith.constant 0.797884583 : f32
    %78 = vector.broadcast %cst_39 : f32 to vector<1x8xf32>
    %79 = arith.mulf %78, %77 : vector<1x8xf32>
    %80 = math.tanh %79 : vector<1x8xf32>
    %cst_40 = arith.constant 1.000000e+00 : f32
    %81 = vector.broadcast %cst_40 : f32 to vector<1x8xf32>
    %82 = arith.addf %81, %80 : vector<1x8xf32>
    %83 = arith.mulf %72, %82 : vector<1x8xf32>
    %c0_41 = arith.constant 0 : index
    %c0_42 = arith.constant 0 : index
    %84 = vector.load %arg11[%c0_41, %c0_42] : memref<8x96xf32, #tpu.memory_space<vmem>>, vector<8x96xf32>
    %cst_43 = arith.constant dense<0.000000e+00> : vector<1x96xf32>
    %85 = tpu.matmul %83, %84, %cst_43 {dimension_numbers = #tpu.dot_dimension_numbers<[1], [0], [0], [1], [0, 0, 1, 1], [], []>} : vector<1x8xf32>, vector<8x96xf32>, vector<1x96xf32> -> vector<1x96xf32>
    %c0_44 = arith.constant 0 : index
    %c0_45 = arith.constant 0 : index
    %86 = vector.load %arg12[%c0_44, %c0_45] : memref<1x96xf32, #tpu.memory_space<vmem>>, vector<1x96xf32>
    %87 = arith.addf %85, %86 : vector<1x96xf32>
    %88 = vector.extract_strided_slice %87 {offsets = [0, 0], sizes = [1, 32], strides = [1, 1]} : vector<1x96xf32> to vector<1x32xf32>
    %89 = vector.extract_strided_slice %87 {offsets = [0, 32], sizes = [1, 32], strides = [1, 1]} : vector<1x96xf32> to vector<1x32xf32>
    %90 = vector.extract_strided_slice %87 {offsets = [0, 64], sizes = [1, 32], strides = [1, 1]} : vector<1x96xf32> to vector<1x32xf32>
    %91 = arith.maximumf %88, %89 : vector<1x32xf32>
    %92 = arith.maximumf %91, %90 : vector<1x32xf32>
    %93 = arith.subf %88, %92 : vector<1x32xf32>
    %94 = math.exp %93 : vector<1x32xf32>
    %95 = arith.subf %89, %92 : vector<1x32xf32>
    %96 = math.exp %95 : vector<1x32xf32>
    %97 = arith.subf %90, %92 : vector<1x32xf32>
    %98 = math.exp %97 : vector<1x32xf32>
    %99 = arith.addf %94, %96 : vector<1x32xf32>
    %100 = arith.addf %99, %98 : vector<1x32xf32>
    %101 = arith.divf %94, %100 : vector<1x32xf32>
    %102 = arith.divf %96, %100 : vector<1x32xf32>
    %103 = arith.divf %98, %100 : vector<1x32xf32>
    %c0_46 = arith.constant 0 : index
    %c0_47 = arith.constant 0 : index
    %104 = vector.load %arg13[%c0_46, %c0_47] : memref<32x32xf32, #tpu.memory_space<vmem>>, vector<32x32xf32>
    %105 = vector.broadcast %101 : vector<1x32xf32> to vector<32x32xf32>
    %106 = arith.mulf %55, %105 : vector<32x32xf32>
    %cst_48 = arith.constant dense<0.000000e+00> : vector<32x32xf32>
    %107 = tpu.matmul %106, %104, %cst_48 {dimension_numbers = #tpu.dot_dimension_numbers<[1], [0], [0], [1], [0, 0, 1, 1], [], []>} : vector<32x32xf32>, vector<32x32xf32>, vector<32x32xf32> -> vector<32x32xf32>
    %108 = arith.truncf %107 : vector<32x32xf32> to vector<32x32xbf16>
    %109 = vector.broadcast %102 : vector<1x32xf32> to vector<32x32xf32>
    %110 = arith.mulf %57, %109 : vector<32x32xf32>
    %cst_49 = arith.constant dense<0.000000e+00> : vector<32x32xf32>
    %111 = tpu.matmul %110, %104, %cst_49 {dimension_numbers = #tpu.dot_dimension_numbers<[1], [0], [0], [1], [0, 0, 1, 1], [], []>} : vector<32x32xf32>, vector<32x32xf32>, vector<32x32xf32> -> vector<32x32xf32>
    %112 = arith.truncf %111 : vector<32x32xf32> to vector<32x32xbf16>
    %113 = vector.broadcast %103 : vector<1x32xf32> to vector<32x32xf32>
    %114 = arith.mulf %53, %113 : vector<32x32xf32>
    %cst_50 = arith.constant dense<0.000000e+00> : vector<32x32xf32>
    %115 = tpu.matmul %114, %104, %cst_50 {dimension_numbers = #tpu.dot_dimension_numbers<[1], [0], [0], [1], [0, 0, 1, 1], [], []>} : vector<32x32xf32>, vector<32x32xf32>, vector<32x32xf32> -> vector<32x32xf32>
    %116 = arith.truncf %115 : vector<32x32xf32> to vector<32x32xbf16>
    %c0_51 = arith.constant 0 : index
    %c0_52 = arith.constant 0 : index
    %117 = vector.load %arg7[%c0_51, %c0_52] : memref<1x32xf32, #tpu.memory_space<vmem>>, vector<1x32xf32>
    %118 = arith.mulf %101, %117 : vector<1x32xf32>
    %c0_53 = arith.constant 0 : index
    %c0_54 = arith.constant 0 : index
    %119 = vector.load %arg8[%c0_53, %c0_54] : memref<1x32xf32, #tpu.memory_space<vmem>>, vector<1x32xf32>
    %120 = arith.mulf %102, %119 : vector<1x32xf32>
    %121 = arith.addf %118, %120 : vector<1x32xf32>
    %cst_55 = arith.constant dense<0.000000e+00> : vector<1x32xf32>
    %122 = tpu.matmul %121, %104, %cst_55 {dimension_numbers = #tpu.dot_dimension_numbers<[1], [0], [0], [1], [0, 0, 1, 1], [], []>} : vector<1x32xf32>, vector<32x32xf32>, vector<1x32xf32> -> vector<1x32xf32>
    %c0_56 = arith.constant 0 : index
    %c0_57 = arith.constant 0 : index
    %123 = vector.load %arg14[%c0_56, %c0_57] : memref<1x32xf32, #tpu.memory_space<vmem>>, vector<1x32xf32>
    %124 = arith.addf %122, %123 : vector<1x32xf32>
    %cst_58 = arith.constant dense<0.000000e+00> : vector<256x32xf32>
    %125 = tpu.matmul %1, %116, %cst_58 {dimension_numbers = #tpu.dot_dimension_numbers<[1], [0], [0], [1], [0, 0, 1, 1], [], []>} : vector<256x32xbf16>, vector<32x32xbf16>, vector<256x32xf32> -> vector<256x32xf32>
    %126 = arith.truncf %25 : vector<256x32xf32> to vector<256x32xbf16>
    %cst_59 = arith.constant dense<0.000000e+00> : vector<256x32xf32>
    %127 = tpu.matmul %126, %108, %cst_59 {dimension_numbers = #tpu.dot_dimension_numbers<[1], [0], [0], [1], [0, 0, 1, 1], [], []>} : vector<256x32xbf16>, vector<32x32xbf16>, vector<256x32xf32> -> vector<256x32xf32>
    %128 = arith.addf %125, %127 : vector<256x32xf32>
    %129 = arith.truncf %39 : vector<256x32xf32> to vector<256x32xbf16>
    %cst_60 = arith.constant dense<0.000000e+00> : vector<256x32xf32>
    %130 = tpu.matmul %129, %112, %cst_60 {dimension_numbers = #tpu.dot_dimension_numbers<[1], [0], [0], [1], [0, 0, 1, 1], [], []>} : vector<256x32xbf16>, vector<32x32xbf16>, vector<256x32xf32> -> vector<256x32xf32>
    %131 = arith.addf %128, %130 : vector<256x32xf32>
    %132 = vector.broadcast %124 : vector<1x32xf32> to vector<256x32xf32>
    %133 = arith.addf %131, %132 : vector<256x32xf32>
    %c0_61 = arith.constant 0 : index
    %c0_62 = arith.constant 0 : index
    %c0_63 = arith.constant 0 : index
    %134 = vector.load %arg15[%c0_61, %c0_62, %c0_63] : memref<1x256x32xf32, #tpu.memory_space<vmem>>, vector<1x256x32xf32>
    %135 = vector.shape_cast %134 : vector<1x256x32xf32> to vector<256x32xf32>
    %136 = vector.shape_cast %133 : vector<256x32xf32> to vector<1x256x32xf32>
    tpu.vector_store %arg15[%c0_61, %c0_62, %c0_63], %136 {strides = array<i32>} : memref<1x256x32xf32, #tpu.memory_space<vmem>>, vector<1x256x32xf32>,
    return
  }
  func.func @transform_0(%arg0: i32) -> (i32, i32, i32) {
    %c0_i32 = arith.constant 0 : i32
    %c0_i32_0 = arith.constant 0 : i32
    %c0_i32_1 = arith.constant 0 : i32
    return %arg0, %c0_i32, %c0_i32_0 : i32, i32, i32
  }
  func.func @transform_1(%arg0: i32) -> (i32, i32) {
    %c0_i32 = arith.constant 0 : i32
    %c0_i32_0 = arith.constant 0 : i32
    %c0_i32_1 = arith.constant 0 : i32
    return %c0_i32, %c0_i32_0 : i32, i32
  }
  func.func @transform_2(%arg0: i32) -> (i32, i32) {
    %c0_i32 = arith.constant 0 : i32
    %c0_i32_0 = arith.constant 0 : i32
    %c0_i32_1 = arith.constant 0 : i32
    return %c0_i32, %c0_i32_0 : i32, i32
  }
  func.func @transform_3(%arg0: i32) -> (i32, i32) {
    %c0_i32 = arith.constant 0 : i32
    %c0_i32_0 = arith.constant 0 : i32
    %c0_i32_1 = arith.constant 0 : i32
    return %c0_i32, %c0_i32_0 : i32, i32
  }
  func.func @transform_4(%arg0: i32) -> (i32, i32) {
    %c0_i32 = arith.constant 0 : i32
    %c0_i32_0 = arith.constant 0 : i32
    %c0_i32_1 = arith.constant 0 : i32
    return %c0_i32, %c0_i32_0 : i32, i32
  }
  func.func @transform_5(%arg0: i32) -> (i32, i32) {
    %c0_i32 = arith.constant 0 : i32
    %c0_i32_0 = arith.constant 0 : i32
    %c0_i32_1 = arith.constant 0 : i32
    return %c0_i32, %c0_i32_0 : i32, i32
  }
  func.func @transform_6(%arg0: i32) -> (i32, i32) {
    %c0_i32 = arith.constant 0 : i32
    %c0_i32_0 = arith.constant 0 : i32
    %c0_i32_1 = arith.constant 0 : i32
    return %c0_i32, %c0_i32_0 : i32, i32
  }
  func.func @transform_7(%arg0: i32) -> (i32, i32) {
    %c0_i32 = arith.constant 0 : i32
    %c0_i32_0 = arith.constant 0 : i32
    %c0_i32_1 = arith.constant 0 : i32
    return %c0_i32, %c0_i32_0 : i32, i32
  }
  func.func @transform_8(%arg0: i32) -> (i32, i32) {
    %c0_i32 = arith.constant 0 : i32
    %c0_i32_0 = arith.constant 0 : i32
    %c0_i32_1 = arith.constant 0 : i32
    return %c0_i32, %c0_i32_0 : i32, i32
  }
  func.func @transform_9(%arg0: i32) -> (i32, i32) {
    %c0_i32 = arith.constant 0 : i32
    %c0_i32_0 = arith.constant 0 : i32
    %c0_i32_1 = arith.constant 0 : i32
    return %c0_i32, %c0_i32_0 : i32, i32
  }
  func.func @transform_10(%arg0: i32) -> (i32, i32) {
    %c0_i32 = arith.constant 0 : i32
    %c0_i32_0 = arith.constant 0 : i32
    %c0_i32_1 = arith.constant 0 : i32
    return %c0_i32, %c0_i32_0 : i32, i32
  }
  func.func @transform_11(%arg0: i32) -> (i32, i32) {
    %c0_i32 = arith.constant 0 : i32
    %c0_i32_0 = arith.constant 0 : i32
    %c0_i32_1 = arith.constant 0 : i32
    return %c0_i32, %c0_i32_0 : i32, i32
  }
  func.func @transform_12(%arg0: i32) -> (i32, i32) {
    %c0_i32 = arith.constant 0 : i32
    %c0_i32_0 = arith.constant 0 : i32
    %c0_i32_1 = arith.constant 0 : i32
    return %c0_i32, %c0_i32_0 : i32, i32
  }
  func.func @transform_13(%arg0: i32) -> (i32, i32) {
    %c0_i32 = arith.constant 0 : i32
    %c0_i32_0 = arith.constant 0 : i32
    %c0_i32_1 = arith.constant 0 : i32
    return %c0_i32, %c0_i32_0 : i32, i32
  }
  func.func @transform_14(%arg0: i32) -> (i32, i32, i32) {
    %c0_i32 = arith.constant 0 : i32
    %c0_i32_0 = arith.constant 0 : i32
    %c0_i32_1 = arith.constant 0 : i32
    return %arg0, %c0_i32, %c0_i32_0 : i32, i32, i32
  }
}

</mosaic_0001>

<llo_original>
// kernel: cycle_attn.1
$region0: #{cycle_attn.1}
  #allocation0 [shape = 'u32[]', space=smem, size = 0x4, offset = 0x4, fixed_abs, tag = 'smem constant byte address 0x4 - core index']
  #allocation1 [shape = 'u32[144,128]{1,0:T(1,128)}', space=vmem, size = 0x12000, scoped, tag = 'internal scratch']
  %s0 = inlined_call_operand.vmem [shape: bf16[2,256,32], index: 0, kind: input, shape index: {}]
  %s1 = inlined_call_operand.vmem [shape: f32[256,2], index: 1, kind: input, shape index: {}]
  %s2 = inlined_call_operand.vmem [shape: f32[3,32], index: 2, kind: input, shape index: {}]
  %s3 = inlined_call_operand.vmem [shape: bf16[32,32], index: 3, kind: input, shape index: {}]
  %s4 = inlined_call_operand.vmem [shape: bf16[32,32], index: 4, kind: input, shape index: {}]
  %s5 = inlined_call_operand.vmem [shape: bf16[32,32], index: 5, kind: input, shape index: {}]
  %s6 = inlined_call_operand.vmem [shape: f32[1,32], index: 6, kind: input, shape index: {}]
  %s7 = inlined_call_operand.vmem [shape: f32[1,32], index: 7, kind: input, shape index: {}]
  %s8 = inlined_call_operand.vmem [shape: f32[32,8], index: 8, kind: input, shape index: {}]
  %s9 = inlined_call_operand.vmem [shape: f32[1,8], index: 9, kind: input, shape index: {}]
  %s10 = inlined_call_operand.vmem [shape: f32[8,96], index: 10, kind: input, shape index: {}]
  %s11 = inlined_call_operand.vmem [shape: f32[1,96], index: 11, kind: input, shape index: {}]
  %s12 = inlined_call_operand.vmem [shape: f32[32,32], index: 12, kind: input, shape index: {}]
  %s13 = inlined_call_operand.vmem [shape: f32[1,32], index: 13, kind: input, shape index: {}]
  %s14 = inlined_call_operand.hbm [shape: f32[2,256,32], index: 14, kind: output, shape index: {}]
  %s15 = sld [smem:[#allocation0]]
  $region89: #{cycle_attn.1} parent=0
    _
  %s17 = ssub.s32 1, %s15
  %s18 = scalar_select 0, %s17, %s15
  $region1: #{cycle_attn.1} parent=0
    #allocation2 [shape = 'u8[262144]{0}', space=vmem, size = 0x40000, scoped, tag = 'output window, operand 0']
    #allocation3 [shape = 's32[2]{0}', space=sflag, size = 0x8, scoped, tag = 'scoped memory for cycle_attn.1']
    %19 = vsyncpa [#allocation3], 0
    %s20 = scalar_lea.sflag [#allocation3], 1
    %21 = vsyncpa %s20, 0
    loop: start=0, step=1, limit=4
    $region2: #{cycle_attn.1} parent=1 // loop_pre_header
      _
    $region3: #{cycle_attn.1} parent=1 // loop_header
      %s23 = sphi 0, %s27
      %p24 = scmp.ge.s32.totalorder %s23, 4
      %s33 = sphi 0, %s35
      %s36 = sphi 0, %s33
      %s37 = sphi 0, %s36
      %s53 = sphi 0, %s37
      %s57 = sphi 0, %s57
      %s59 = sphi 0, %s57
      %s60 = sphi 0, %s59
      %s74 = sphi 0, %s60
      %s78 = sphi 0, %s78
      %s80 = sphi 0, %s78
      %s81 = sphi 0, %s80
      %s95 = sphi 0, %s81
      %s99 = sphi 0, %s99
      %s101 = sphi 0, %s99
      %s102 = sphi 0, %s101
      %s116 = sphi 0, %s102
      %s120 = sphi 0, %s120
      %s122 = sphi 0, %s120
      %s123 = sphi 0, %s122
      %s137 = sphi 0, %s123
      %s141 = sphi 0, %s141
      %s143 = sphi 0, %s141
      %s144 = sphi 0, %s143
      %s158 = sphi 0, %s144
      %s162 = sphi 0, %s162
      %s164 = sphi 0, %s162
      %s165 = sphi 0, %s164
      %s179 = sphi 0, %s165
      %s183 = sphi 0, %s183
      %s185 = sphi 0, %s183
      %s186 = sphi 0, %s185
      %s200 = sphi 0, %s186
      %s204 = sphi 0, %s204
      %s206 = sphi 0, %s204
      %s207 = sphi 0, %s206
      %s221 = sphi 0, %s207
      %s225 = sphi 0, %s225
      %s227 = sphi 0, %s225
      %s228 = sphi 0, %s227
      %s242 = sphi 0, %s228
      %s246 = sphi 0, %s246
      %s248 = sphi 0, %s246
      %s249 = sphi 0, %s248
      %s263 = sphi 0, %s249
      %s267 = sphi 0, %s267
      %s269 = sphi 0, %s267
      %s270 = sphi 0, %s269
      %s284 = sphi 0, %s270
      %s288 = sphi 0, %s288
      %s290 = sphi 0, %s288
      %s291 = sphi 0, %s290
      %s305 = sphi 0, %s291
      %s309 = sphi 0, %s309
      %s311 = sphi 0, %s309
      %s312 = sphi 0, %s311
      %s326 = sphi 0, %s312
      %s332 = sphi 0, %s334
      %s335 = sphi 0, %s332
      %s336 = sphi 0, %s335
      %s352 = sphi 0, %s336
    $region4: #{cycle_attn.1} parent=1 // loop_header_branch
      %26 = sbr.rel (%p24) target = $region8
    $region5: #{cycle_attn.1} parent=1 // loop_body
      %s28 = ssub.s32 %s23, 1
      %s29 = ssub.s32 %s23, 2
      %s30 = sadd.s32 %s23, 1
      %s31 = ssub.s32 %s23, %s30
      %p32 = scmp.eq.s32.totalorder %s31, 0
      %s34 = sadd.s32 %s33, 1
      %s35 = scalar_select %p32, %s33, %s34
      %p38 = pneg %p32
      %p39 = scmp.eq.s32.totalorder %s23, 1
      %p40 = por %p38, %p39
      %p41 = scmp.ne.s32.totalorder %s33, %s36
      %p42 = scmp.eq.s32.totalorder %s23, 0
      %p43 = por %p41, %p42
      %p44 = scmp.ne.s32.totalorder %s33, %s36
      %p45 = scmp.eq.s32.totalorder %s28, 1
      %p46 = por %p44, %p45
      %p47 = scmp.ne.s32.totalorder %s36, %s37
      %p48 = scmp.eq.s32.totalorder %s28, 0
      %p49 = por %p47, %p48
      %p50 = scmp.ne.s32.totalorder %s36, %s37
      %p51 = scmp.eq.s32.totalorder %s29, 1
      %p52 = por %p50, %p51
      %p54 = scmp.ne.s32.totalorder %s37, %s53
      %p55 = scmp.eq.s32.totalorder %s29, 0
      %p56 = por %p54, %p55
      %s58 = sadd.s32 %s57, 1
      %p61 = scmp.eq.s32.totalorder %s23, 1
      %p62 = scmp.ne.s32.totalorder %s57, %s59
      %p63 = scmp.eq.s32.totalorder %s23, 0
      %p64 = por %p62, %p63
      %p65 = scmp.ne.s32.totalorder %s57, %s59
      %p66 = scmp.eq.s32.totalorder %s28, 1
      %p67 = por %p65, %p66
      %p68 = scmp.ne.s32.totalorder %s59, %s60
      %p69 = scmp.eq.s32.totalorder %s28, 0
      %p70 = por %p68, %p69
      %p71 = scmp.ne.s32.totalorder %s59, %s60
      %p72 = scmp.eq.s32.totalorder %s29, 1
      %p73 = por %p71, %p72
      %p75 = scmp.ne.s32.totalorder %s60, %s74
      %p76 = scmp.eq.s32.totalorder %s29, 0
      %p77 = por %p75, %p76
      %s79 = sadd.s32 %s78, 1
      %p82 = scmp.eq.s32.totalorder %s23, 1
      %p83 = scmp.ne.s32.totalorder %s78, %s80
      %p84 = scmp.eq.s32.totalorder %s23, 0
      %p85 = por %p83, %p84
      %p86 = scmp.ne.s32.totalorder %s78, %s80
      %p87 = scmp.eq.s32.totalorder %s28, 1
      %p88 = por %p86, %p87
      %p89 = scmp.ne.s32.totalorder %s80, %s81
      %p90 = scmp.eq.s32.totalorder %s28, 0
      %p91 = por %p89, %p90
      %p92 = scmp.ne.s32.totalorder %s80, %s81
      %p93 = scmp.eq.s32.totalorder %s29, 1
      %p94 = por %p92, %p93
      %p96 = scmp.ne.s32.totalorder %s81, %s95
      %p97 = scmp.eq.s32.totalorder %s29, 0
      %p98 = por %p96, %p97
      %s100 = sadd.s32 %s99, 1
      %p103 = scmp.eq.s32.totalorder %s23, 1
      %p104 = scmp.ne.s32.totalorder %s99, %s101
      %p105 = scmp.eq.s32.totalorder %s23, 0
      %p106 = por %p104, %p105
      %p107 = scmp.ne.s32.totalorder %s99, %s101
      %p108 = scmp.eq.s32.totalorder %s28, 1
      %p109 = por %p107, %p108
      %p110 = scmp.ne.s32.totalorder %s101, %s102
      %p111 = scmp.eq.s32.totalorder %s28, 0
      %p112 = por %p110, %p111
      %p113 = scmp.ne.s32.totalorder %s101, %s102
      %p114 = scmp.eq.s32.totalorder %s29, 1
      %p115 = por %p113, %p114
      %p117 = scmp.ne.s32.totalorder %s102, %s116
      %p118 = scmp.eq.s32.totalorder %s29, 0
      %p119 = por %p117, %p118
      %s121 = sadd.s32 %s120, 1
      %p124 = scmp.eq.s32.totalorder %s23, 1
      %p125 = scmp.ne.s32.totalorder %s120, %s122
      %p126 = scmp.eq.s32.totalorder %s23, 0
      %p127 = por %p125, %p126
      %p128 = scmp.ne.s32.totalorder %s120, %s122
      %p129 = scmp.eq.s32.totalorder %s28, 1
      %p130 = por %p128, %p129
      %p131 = scmp.ne.s32.totalorder %s122, %s123
      %p132 = scmp.eq.s32.totalorder %s28, 0
      %p133 = por %p131, %p132
      %p134 = scmp.ne.s32.totalorder %s122, %s123
      %p135 = scmp.eq.s32.totalorder %s29, 1
      %p136 = por %p134, %p135
      %p138 = scmp.ne.s32.totalorder %s123, %s137
      %p139 = scmp.eq.s32.totalorder %s29, 0
      %p140 = por %p138, %p139
      %s142 = sadd.s32 %s141, 1
      %p145 = scmp.eq.s32.totalorder %s23, 1
      %p146 = scmp.ne.s32.totalorder %s141, %s143
      %p147 = scmp.eq.s32.totalorder %s23, 0
      %p148 = por %p146, %p147
      %p149 = scmp.ne.s32.totalorder %s141, %s143
      %p150 = scmp.eq.s32.totalorder %s28, 1
      %p151 = por %p149, %p150
      %p152 = scmp.ne.s32.totalorder %s143, %s144
      %p153 = scmp.eq.s32.totalorder %s28, 0
      %p154 = por %p152, %p153
      %p155 = scmp.ne.s32.totalorder %s143, %s144
      %p156 = scmp.eq.s32.totalorder %s29, 1
      %p157 = por %p155, %p156
      %p159 = scmp.ne.s32.totalorder %s144, %s158
      %p160 = scmp.eq.s32.totalorder %s29, 0
      %p161 = por %p159, %p160
      %s163 = sadd.s32 %s162, 1
      %p166 = scmp.eq.s32.totalorder %s23, 1
      %p167 = scmp.ne.s32.totalorder %s162, %s164
      %p168 = scmp.eq.s32.totalorder %s23, 0
      %p169 = por %p167, %p168
      %p170 = scmp.ne.s32.totalorder %s162, %s164
      %p171 = scmp.eq.s32.totalorder %s28, 1
      %p172 = por %p170, %p171
      %p173 = scmp.ne.s32.totalorder %s164, %s165
      %p174 = scmp.eq.s32.totalorder %s28, 0
      %p175 = por %p173, %p174
      %p176 = scmp.ne.s32.totalorder %s164, %s165
      %p177 = scmp.eq.s32.totalorder %s29, 1
      %p178 = por %p176, %p177
      %p180 = scmp.ne.s32.totalorder %s165, %s179
      %p181 = scmp.eq.s32.totalorder %s29, 0
      %p182 = por %p180, %p181
      %s184 = sadd.s32 %s183, 1
      %p187 = scmp.eq.s32.totalorder %s23, 1
      %p188 = scmp.ne.s32.totalorder %s183, %s185
      %p189 = scmp.eq.s32.totalorder %s23, 0
      %p190 = por %p188, %p189
      %p191 = scmp.ne.s32.totalorder %s183, %s185
      %p192 = scmp.eq.s32.totalorder %s28, 1
      %p193 = por %p191, %p192
      %p194 = scmp.ne.s32.totalorder %s185, %s186
      %p195 = scmp.eq.s32.totalorder %s28, 0
      %p196 = por %p194, %p195
      %p197 = scmp.ne.s32.totalorder %s185, %s186
      %p198 = scmp.eq.s32.totalorder %s29, 1
      %p199 = por %p197, %p198
      %p201 = scmp.ne.s32.totalorder %s186, %s200
      %p202 = scmp.eq.s32.totalorder %s29, 0
      %p203 = por %p201, %p202
      %s205 = sadd.s32 %s204, 1
      %p208 = scmp.eq.s32.totalorder %s23, 1
      %p209 = scmp.ne.s32.totalorder %s204, %s206
      %p210 = scmp.eq.s32.totalorder %s23, 0
      %p211 = por %p209, %p210
      %p212 = scmp.ne.s32.totalorder %s204, %s206
      %p213 = scmp.eq.s32.totalorder %s28, 1
      %p214 = por %p212, %p213
      %p215 = scmp.ne.s32.totalorder %s206, %s207
      %p216 = scmp.eq.s32.totalorder %s28, 0
      %p217 = por %p215, %p216
      %p218 = scmp.ne.s32.totalorder %s206, %s207
      %p219 = scmp.eq.s32.totalorder %s29, 1
      %p220 = por %p218, %p219
      %p222 = scmp.ne.s32.totalorder %s207, %s221
      %p223 = scmp.eq.s32.totalorder %s29, 0
      %p224 = por %p222, %p223
      %s226 = sadd.s32 %s225, 1
      %p229 = scmp.eq.s32.totalorder %s23, 1
      %p230 = scmp.ne.s32.totalorder %s225, %s227
      %p231 = scmp.eq.s32.totalorder %s23, 0
      %p232 = por %p230, %p231
      %p233 = scmp.ne.s32.totalorder %s225, %s227
      %p234 = scmp.eq.s32.totalorder %s28, 1
      %p235 = por %p233, %p234
      %p236 = scmp.ne.s32.totalorder %s227, %s228
      %p237 = scmp.eq.s32.totalorder %s28, 0
      %p238 = por %p236, %p237
      %p239 = scmp.ne.s32.totalorder %s227, %s228
      %p240 = scmp.eq.s32.totalorder %s29, 1
      %p241 = por %p239, %p240
      %p243 = scmp.ne.s32.totalorder %s228, %s242
      %p244 = scmp.eq.s32.totalorder %s29, 0
      %p245 = por %p243, %p244
      %s247 = sadd.s32 %s246, 1
      %p250 = scmp.eq.s32.totalorder %s23, 1
      %p251 = scmp.ne.s32.totalorder %s246, %s248
      %p252 = scmp.eq.s32.totalorder %s23, 0
      %p253 = por %p251, %p252
      %p254 = scmp.ne.s32.totalorder %s246, %s248
      %p255 = scmp.eq.s32.totalorder %s28, 1
      %p256 = por %p254, %p255
      %p257 = scmp.ne.s32.totalorder %s248, %s249
      %p258 = scmp.eq.s32.totalorder %s28, 0
      %p259 = por %p257, %p258
      %p260 = scmp.ne.s32.totalorder %s248, %s249
      %p261 = scmp.eq.s32.totalorder %s29, 1
      %p262 = por %p260, %p261
      %p264 = scmp.ne.s32.totalorder %s249, %s263
      %p265 = scmp.eq.s32.totalorder %s29, 0
      %p266 = por %p264, %p265
      %s268 = sadd.s32 %s267, 1
      %p271 = scmp.eq.s32.totalorder %s23, 1
      %p272 = scmp.ne.s32.totalorder %s267, %s269
      %p273 = scmp.eq.s32.totalorder %s23, 0
      %p274 = por %p272, %p273
      %p275 = scmp.ne.s32.totalorder %s267, %s269
      %p276 = scmp.eq.s32.totalorder %s28, 1
      %p277 = por %p275, %p276
      %p278 = scmp.ne.s32.totalorder %s269, %s270
      %p279 = scmp.eq.s32.totalorder %s28, 0
      %p280 = por %p278, %p279
      %p281 = scmp.ne.s32.totalorder %s269, %s270
      %p282 = scmp.eq.s32.totalorder %s29, 1
      %p283 = por %p281, %p282
      %p285 = scmp.ne.s32.totalorder %s270, %s284
      %p286 = scmp.eq.s32.totalorder %s29, 0
      %p287 = por %p285, %p286
      %s289 = sadd.s32 %s288, 1
      %p292 = scmp.eq.s32.totalorder %s23, 1
      %p293 = scmp.ne.s32.totalorder %s288, %s290
      %p294 = scmp.eq.s32.totalorder %s23, 0
      %p295 = por %p293, %p294
      %p296 = scmp.ne.s32.totalorder %s288, %s290
      %p297 = scmp.eq.s32.totalorder %s28, 1
      %p298 = por %p296, %p297
      %p299 = scmp.ne.s32.totalorder %s290, %s291
      %p300 = scmp.eq.s32.totalorder %s28, 0
      %p301 = por %p299, %p300
      %p302 = scmp.ne.s32.totalorder %s290, %s291
      %p303 = scmp.eq.s32.totalorder %s29, 1
      %p304 = por %p302, %p303
      %p306 = scmp.ne.s32.totalorder %s291, %s305
      %p307 = scmp.eq.s32.totalorder %s29, 0
      %p308 = por %p306, %p307
      %s310 = sadd.s32 %s309, 1
      %p313 = scmp.eq.s32.totalorder %s23, 1
      %p314 = scmp.ne.s32.totalorder %s309, %s311
      %p315 = scmp.eq.s32.totalorder %s23, 0
      %p316 = por %p314, %p315
      %p317 = scmp.ne.s32.totalorder %s309, %s311
      %p318 = scmp.eq.s32.totalorder %s28, 1
      %p319 = por %p317, %p318
      %p320 = scmp.ne.s32.totalorder %s311, %s312
      %p321 = scmp.eq.s32.totalorder %s28, 0
      %p322 = por %p320, %p321
      %p323 = scmp.ne.s32.totalorder %s311, %s312
      %p324 = scmp.eq.s32.totalorder %s29, 1
      %p325 = por %p323, %p324
      %p327 = scmp.ne.s32.totalorder %s312, %s326
      %p328 = scmp.eq.s32.totalorder %s29, 0
      %p329 = por %p327, %p328
      %s330 = ssub.s32 %s23, %s30
      %p331 = scmp.eq.s32.totalorder %s330, 0
      %s333 = sadd.s32 %s332, 1
      %s334 = scalar_select %p331, %s332, %s333
      %p337 = pneg %p331
      %p338 = scmp.eq.s32.totalorder %s23, 1
      %p339 = por %p337, %p338
      %p340 = scmp.ne.s32.totalorder %s332, %s335
      %p341 = scmp.eq.s32.totalorder %s23, 0
      %p342 = por %p340, %p341
      %p343 = scmp.ne.s32.totalorder %s332, %s335
      %p344 = scmp.eq.s32.totalorder %s28, 1
      %p345 = por %p343, %p344
      %p346 = scmp.ne.s32.totalorder %s335, %s336
      %p347 = scmp.eq.s32.totalorder %s28, 0
      %p348 = por %p346, %p347
      %p349 = scmp.ne.s32.totalorder %s335, %s336
      %p350 = scmp.eq.s32.totalorder %s29, 1
      %p351 = por %p349, %p350
      %p353 = scmp.ne.s32.totalorder %s336, %s352
      %p354 = scmp.eq.s32.totalorder %s29, 0
      %p355 = por %p353, %p354
      %p356 = scmp.le.s32.totalorder 1, %s23
      %p357 = scmp.lt.s32.totalorder %s23, 3
      %p358 = pnand %p356, %p357
      %p359 = pneg %p358
      // Predicated region
      $region9: #{cycle_attn.1} parent=5 // pred_check
        _
      $region10: #{cycle_attn.1} parent=5 // pred_check_branch
        %361 = sbr.rel (%p358) target = $region12
      $region11: #{cycle_attn.1} parent=5 // pred_region
        %s362 = ssub.s32 %s23, 1
        // Predicated region
        $region13: #{cycle_attn.1} parent=11 // pred_check
          %p363 = pneg %p70
        $region14: #{cycle_attn.1} parent=11 // pred_check_branch
          %365 = sbr.rel (%p363) target = $region16
        $region15: #{cycle_attn.1} parent=11 // pred_region
          _
        $region16: #{cycle_attn.1} parent=11 // pred_fallthru
          _
        // Predicated region
        $region17: #{cycle_attn.1} parent=11 // pred_check
          %p366 = pneg %p91
        $region18: #{cycle_attn.1} parent=11 // pred_check_branch
          %368 = sbr.rel (%p366) target = $region20
        $region19: #{cycle_attn.1} parent=11 // pred_region
          _
        $region20: #{cycle_attn.1} parent=11 // pred_fallthru
          _
        // Predicated region
        $region21: #{cycle_attn.1} parent=11 // pred_check
          %p369 = pneg %p112
        $region22: #{cycle_attn.1} parent=11 // pred_check_branch
          %371 = sbr.rel (%p369) target = $region24
        $region23: #{cycle_attn.1} parent=11 // pred_region
          _
        $region24: #{cycle_attn.1} parent=11 // pred_fallthru
          _
        // Predicated region
        $region25: #{cycle_attn.1} parent=11 // pred_check
          %p372 = pneg %p133
        $region26: #{cycle_attn.1} parent=11 // pred_check_branch
          %374 = sbr.rel (%p372) target = $region28
        $region27: #{cycle_attn.1} parent=11 // pred_region
          _
        $region28: #{cycle_attn.1} parent=11 // pred_fallthru
          _
        // Predicated region
        $region29: #{cycle_attn.1} parent=11 // pred_check
          %p375 = pneg %p154
        $region30: #{cycle_attn.1} parent=11 // pred_check_branch
          %377 = sbr.rel (%p375) target = $region32
        $region31: #{cycle_attn.1} parent=11 // pred_region
          _
        $region32: #{cycle_attn.1} parent=11 // pred_fallthru
          _
        // Predicated region
        $region33: #{cycle_attn.1} parent=11 // pred_check
          %p378 = pneg %p175
        $region34: #{cycle_attn.1} parent=11 // pred_check_branch
          %380 = sbr.rel (%p378) target = $region36
        $region35: #{cycle_attn.1} parent=11 // pred_region
          _
        $region36: #{cycle_attn.1} parent=11 // pred_fallthru
          _
        // Predicated region
        $region37: #{cycle_attn.1} parent=11 // pred_check
          %p381 = pneg %p196
        $region38: #{cycle_attn.1} parent=11 // pred_check_branch
          %383 = sbr.rel (%p381) target = $region40
        $region39: #{cycle_attn.1} parent=11 // pred_region
          _
        $region40: #{cycle_attn.1} parent=11 // pred_fallthru
          _
        // Predicated region
        $region41: #{cycle_attn.1} parent=11 // pred_check
          %p384 = pneg %p217
        $region42: #{cycle_attn.1} parent=11 // pred_check_branch
          %386 = sbr.rel (%p384) target = $region44
        $region43: #{cycle_attn.1} parent=11 // pred_region
          _
        $region44: #{cycle_attn.1} parent=11 // pred_fallthru
          _
        // Predicated region
        $region45: #{cycle_attn.1} parent=11 // pred_check
          %p387 = pneg %p238
        $region46: #{cycle_attn.1} parent=11 // pred_check_branch
          %389 = sbr.rel (%p387) target = $region48
        $region47: #{cycle_attn.1} parent=11 // pred_region
          _
        $region48: #{cycle_attn.1} parent=11 // pred_fallthru
          _
        // Predicated region
        $region49: #{cycle_attn.1} parent=11 // pred_check
          %p390 = pneg %p259
        $region50: #{cycle_attn.1} parent=11 // pred_check_branch
          %392 = sbr.rel (%p390) target = $region52
        $region51: #{cycle_attn.1} parent=11 // pred_region
          _
        $region52: #{cycle_attn.1} parent=11 // pred_fallthru
          _
        // Predicated region
        $region53: #{cycle_attn.1} parent=11 // pred_check
          %p393 = pneg %p280
        $region54: #{cycle_attn.1} parent=11 // pred_check_branch
          %395 = sbr.rel (%p393) target = $region56
        $region55: #{cycle_attn.1} parent=11 // pred_region
          _
        $region56: #{cycle_attn.1} parent=11 // pred_fallthru
          _
        // Predicated region
        $region57: #{cycle_attn.1} parent=11 // pred_check
          %p396 = pneg %p301
        $region58: #{cycle_attn.1} parent=11 // pred_check_branch
          %398 = sbr.rel (%p396) target = $region60
        $region59: #{cycle_attn.1} parent=11 // pred_region
          _
        $region60: #{cycle_attn.1} parent=11 // pred_fallthru
          _
        // Predicated region
        $region61: #{cycle_attn.1} parent=11 // pred_check
          %p399 = pneg %p322
        $region62: #{cycle_attn.1} parent=11 // pred_check_branch
          %401 = sbr.rel (%p399) target = $region64
        $region63: #{cycle_attn.1} parent=11 // pred_region
          _
        $region64: #{cycle_attn.1} parent=11 // pred_fallthru
          _
      $region12: #{cycle_attn.1} parent=5 // pred_fallthru
        _
      %p402 = scmp.lt.s32.totalorder %s23, 2
      // Predicated region
      $region65: #{cycle_attn.1} parent=5 // pred_check
        %p403 = pneg %p402
      $region66: #{cycle_attn.1} parent=5 // pred_check_branch
        %405 = sbr.rel (%p403) target = $region68
      $region67: #{cycle_attn.1} parent=5 // pred_region
        // Predicated region
        $region69: #{cycle_attn.1} parent=67 // pred_check
          %p406 = pneg %p43
        $region70: #{cycle_attn.1} parent=67 // pred_check_branch
          %408 = sbr.rel (%p406) target = $region72
        $region71: #{cycle_attn.1} parent=67 // pred_region
          %p409 = scmp.lt.s32.totalorder %s23, 1
          %s410 = scalar_select %p409, %s23, 1
          %s411 = smul.addr %s410, 32
          %s412 = smul.addr %s411, 4
          %s413 = scalar_lea.vmem %s0, %s412
        $region72: #{cycle_attn.1} parent=67 // pred_fallthru
          _
      $region68: #{cycle_attn.1} parent=5 // pred_fallthru
        _
      %p414 = scmp.le.s32.totalorder 1, %s23
      %p415 = scmp.lt.s32.totalorder %s23, 3
      %p416 = pnand %p414, %p415
      %p417 = pneg %p416
      // Predicated region
      $region73: #{cycle_attn.1} parent=5 // pred_check
        _
      $region74: #{cycle_attn.1} parent=5 // pred_check_branch
        %419 = sbr.rel (%p416) target = $region76
      $region75: #{cycle_attn.1} parent=5 // pred_region
        %s420 = ssub.s32 %s23, 1
        %p421 = scmp.lt.s32.totalorder %s28, 1
        %s422 = scalar_select %p421, %s28, 1
        %s423 = smul.addr %s422, 32
        %s424 = smul.addr %s423, 4
        %s425 = scalar_lea.vmem %s0, %s424
        %p426 = pneg %p49
        %p427 = pneg %p46
        %p428 = pneg %p70
        %p429 = pneg %p67
        %p430 = pneg %p91
        %p431 = pneg %p88
        %p432 = pneg %p112
        %p433 = pneg %p109
        %p434 = pneg %p133
        %p435 = pneg %p130
        %p436 = pneg %p154
        %p437 = pneg %p151
        %p438 = pneg %p175
        %p439 = pneg %p172
        %p440 = pneg %p196
        %p441 = pneg %p193
        %p442 = pneg %p217
        %p443 = pneg %p214
        %p444 = pneg %p238
        %p445 = pneg %p235
        %p446 = pneg %p259
        %p447 = pneg %p256
        %p448 = pneg %p280
        %p449 = pneg %p277
        %p450 = pneg %p301
        %p451 = pneg %p298
        %p452 = pneg %p322
        %p453 = pneg %p319
        %p454 = pneg %p348
        %p455 = pneg %p345
        %s456 = sand.u32 %s335, 1
        %s457 = scalar_lea.sflag [#allocation3], %s456
        %s458 = sand.u32 %s335, 1
        %s459 = smul.addr %s458, 256
        %s460 = scalar_lea.vmem [#allocation2], %s459
        %p461 = scmp.lt.s32.totalorder %s28, 1
        %s462 = scalar_select %p461, %s28, 1
        %s463 = smul.addr %s462, 32
        %s464 = smul.addr %s463, 4
        %s465 = scalar_lea.vmem %s0, %s464
        %v467 = vld [vmem:[%s465] sm:$0xf]
        %v468 = vld [vmem:[%s465 + $0x4] sm:$0xf]
        %v469 = vld [vmem:[%s465 + $0x8] sm:$0xf]
        %v470 = vld [vmem:[%s465 + $0xc] sm:$0xf]
        %v471 = vld [vmem:[%s465 + $0x10] sm:$0xf]
        %v472 = vld [vmem:[%s465 + $0x14] sm:$0xf]
        %v473 = vld [vmem:[%s465 + $0x18] sm:$0xf]
        %v474 = vld [vmem:[%s465 + $0x1c] sm:$0xf]
        %v475 = vld [vmem:[%s465 + $0x20] sm:$0xf]
        %v476 = vld [vmem:[%s465 + $0x24] sm:$0xf]
        %v477 = vld [vmem:[%s465 + $0x28] sm:$0xf]
        %v478 = vld [vmem:[%s465 + $0x2c] sm:$0xf]
        %v479 = vld [vmem:[%s465 + $0x30] sm:$0xf]
        %v480 = vld [vmem:[%s465 + $0x34] sm:$0xf]
        %v481 = vld [vmem:[%s465 + $0x38] sm:$0xf]
        %v482 = vld [vmem:[%s465 + $0x3c] sm:$0xf]
        %v483 = vld [vmem:[%s465 + $0x40] sm:$0xf]
        %v484 = vld [vmem:[%s465 + $0x44] sm:$0xf]
        %v485 = vld [vmem:[%s465 + $0x48] sm:$0xf]
        %v486 = vld [vmem:[%s465 + $0x4c] sm:$0xf]
        %v487 = vld [vmem:[%s465 + $0x50] sm:$0xf]
        %v488 = vld [vmem:[%s465 + $0x54] sm:$0xf]
        %v489 = vld [vmem:[%s465 + $0x58] sm:$0xf]
        %v490 = vld [vmem:[%s465 + $0x5c] sm:$0xf]
        %v491 = vld [vmem:[%s465 + $0x60] sm:$0xf]
        %v492 = vld [vmem:[%s465 + $0x64] sm:$0xf]
        %v493 = vld [vmem:[%s465 + $0x68] sm:$0xf]
        %v494 = vld [vmem:[%s465 + $0x6c] sm:$0xf]
        %v495 = vld [vmem:[%s465 + $0x70] sm:$0xf]
        %v496 = vld [vmem:[%s465 + $0x74] sm:$0xf]
        %v497 = vld [vmem:[%s465 + $0x78] sm:$0xf]
        %v498 = vld [vmem:[%s465 + $0x7c] sm:$0xf]
        %v499 = vunpack.c.l.bf16 %v467
        %v500 = vunpack.c.l.bf16 %v468
        %v501 = vunpack.c.l.bf16 %v469
        %v502 = vunpack.c.l.bf16 %v470
        %v503 = vunpack.c.l.bf16 %v471
        %v504 = vunpack.c.l.bf16 %v472
        %v505 = vunpack.c.l.bf16 %v473
        %v506 = vunpack.c.l.bf16 %v474
        %v507 = vunpack.c.l.bf16 %v475
        %v508 = vunpack.c.l.bf16 %v476
        %v509 = vunpack.c.l.bf16 %v477
        %v510 = vunpack.c.l.bf16 %v478
        %v511 = vunpack.c.l.bf16 %v479
        %v512 = vunpack.c.l.bf16 %v480
        %v513 = vunpack.c.l.bf16 %v481
        %v514 = vunpack.c.l.bf16 %v482
        %v515 = vunpack.c.l.bf16 %v483
        %v516 = vunpack.c.l.bf16 %v484
        %v517 = vunpack.c.l.bf16 %v485
        %v518 = vunpack.c.l.bf16 %v486
        %v519 = vunpack.c.l.bf16 %v487
        %v520 = vunpack.c.l.bf16 %v488
        %v521 = vunpack.c.l.bf16 %v489
        %v522 = vunpack.c.l.bf16 %v490
        %v523 = vunpack.c.l.bf16 %v491
        %v524 = vunpack.c.l.bf16 %v492
        %v525 = vunpack.c.l.bf16 %v493
        %v526 = vunpack.c.l.bf16 %v494
        %v527 = vunpack.c.l.bf16 %v495
        %v528 = vunpack.c.l.bf16 %v496
        %v529 = vunpack.c.l.bf16 %v497
        %v530 = vunpack.c.l.bf16 %v498
        %v531 = vld [vmem:[%s2] sm:$0x1]
        %v532 = vld [vmem:[%s2 + $0x1] sm:$0x1]
        %v533 = vld [vmem:[%s2 + $0x2] sm:$0x1]
        %v534 = vld [vmem:[%s1] sm:$0xff]
        %v535 = vld [vmem:[%s1 + $0x8] sm:$0xff]
        %v536 = vld [vmem:[%s1 + $0x10] sm:$0xff]
        %v537 = vld [vmem:[%s1 + $0x18] sm:$0xff]
        %v538 = vld [vmem:[%s1 + $0x20] sm:$0xff]
        %v539 = vld [vmem:[%s1 + $0x28] sm:$0xff]
        %v540 = vld [vmem:[%s1 + $0x30] sm:$0xff]
        %v541 = vld [vmem:[%s1 + $0x38] sm:$0xff]
        %v542 = vld [vmem:[%s1 + $0x40] sm:$0xff]
        %v543 = vld [vmem:[%s1 + $0x48] sm:$0xff]
        %v544 = vld [vmem:[%s1 + $0x50] sm:$0xff]
        %v545 = vld [vmem:[%s1 + $0x58] sm:$0xff]
        %v546 = vld [vmem:[%s1 + $0x60] sm:$0xff]
        %v547 = vld [vmem:[%s1 + $0x68] sm:$0xff]
        %v548 = vld [vmem:[%s1 + $0x70] sm:$0xff]
        %v549 = vld [vmem:[%s1 + $0x78] sm:$0xff]
        %v550 = vld [vmem:[%s1 + $0x80] sm:$0xff]
        %v551 = vld [vmem:[%s1 + $0x88] sm:$0xff]
        %v552 = vld [vmem:[%s1 + $0x90] sm:$0xff]
        %v553 = vld [vmem:[%s1 + $0x98] sm:$0xff]
        %v554 = vld [vmem:[%s1 + $0xa0] sm:$0xff]
        %v555 = vld [vmem:[%s1 + $0xa8] sm:$0xff]
        %v556 = vld [vmem:[%s1 + $0xb0] sm:$0xff]
        %v557 = vld [vmem:[%s1 + $0xb8] sm:$0xff]
        %v558 = vld [vmem:[%s1 + $0xc0] sm:$0xff]
        %v559 = vld [vmem:[%s1 + $0xc8] sm:$0xff]
        %v560 = vld [vmem:[%s1 + $0xd0] sm:$0xff]
        %v561 = vld [vmem:[%s1 + $0xd8] sm:$0xff]
        %v562 = vld [vmem:[%s1 + $0xe0] sm:$0xff]
        %v563 = vld [vmem:[%s1 + $0xe8] sm:$0xff]
        %v564 = vld [vmem:[%s1 + $0xf0] sm:$0xff]
        %v565 = vld [vmem:[%s1 + $0xf8] sm:$0xff]
        %v566 = vlaneseq
        %v567 = vshrl.u32 %v566, 7
        %v568 = vsub.s32 0, %v567
        %v569 = vrot.slane %v531, %v568
        %v570 = vmul.f32 %v499, %v569
        %v571 = vmul.f32 %v500, %v569
        %v572 = vmul.f32 %v501, %v569
        %v573 = vmul.f32 %v502, %v569
        %v574 = vmul.f32 %v503, %v569
        %v575 = vmul.f32 %v504, %v569
        %v576 = vmul.f32 %v505, %v569
        %v577 = vmul.f32 %v506, %v569
        %v578 = vmul.f32 %v507, %v569
        %v579 = vmul.f32 %v508, %v569
        %v580 = vmul.f32 %v509, %v569
        %v581 = vmul.f32 %v510, %v569
        %v582 = vmul.f32 %v511, %v569
        %v583 = vmul.f32 %v512, %v569
        %v584 = vmul.f32 %v513, %v569
        %v585 = vmul.f32 %v514, %v569
        %v586 = vmul.f32 %v515, %v569
        %v587 = vmul.f32 %v516, %v569
        %v588 = vmul.f32 %v517, %v569
        %v589 = vmul.f32 %v518, %v569
        %v590 = vmul.f32 %v519, %v569
        %v591 = vmul.f32 %v520, %v569
        %v592 = vmul.f32 %v521, %v569
        %v593 = vmul.f32 %v522, %v569
        %v594 = vmul.f32 %v523, %v569
        %v595 = vmul.f32 %v524, %v569
        %v596 = vmul.f32 %v525, %v569
        %v597 = vmul.f32 %v526, %v569
        %v598 = vmul.f32 %v527, %v569
        %v599 = vmul.f32 %v528, %v569
        %v600 = vmul.f32 %v529, %v569
        %v601 = vmul.f32 %v530, %v569
        %vm634 = vcmask 1046528
        %v635 = vrot.slane %v499, 1
        %v636 = vrot.slane %v500, 1
        %v637 = vsel %vm634, %v635, %v636
        %v638 = vrot.slane %v501, 1
        %v639 = vsel %vm634, %v636, %v638
        %v640 = vrot.slane %v502, 1
        %v641 = vsel %vm634, %v638, %v640
        %v642 = vrot.slane %v503, 1
        %v643 = vsel %vm634, %v640, %v642
        %v644 = vrot.slane %v504, 1
        %v645 = vsel %vm634, %v642, %v644
        %v646 = vrot.slane %v505, 1
        %v647 = vsel %vm634, %v644, %v646
        %v648 = vrot.slane %v506, 1
        %v649 = vsel %vm634, %v646, %v648
        %v650 = vrot.slane %v507, 1
        %v651 = vsel %vm634, %v648, %v650
        %v652 = vrot.slane %v508, 1
        %v653 = vsel %vm634, %v650, %v652
        %v654 = vrot.slane %v509, 1
        %v655 = vsel %vm634, %v652, %v654
        %v656 = vrot.slane %v510, 1
        %v657 = vsel %vm634, %v654, %v656
        %v658 = vrot.slane %v511, 1
        %v659 = vsel %vm634, %v656, %v658
        %v660 = vrot.slane %v512, 1
        %v661 = vsel %vm634, %v658, %v660
        %v662 = vrot.slane %v513, 1
        %v663 = vsel %vm634, %v660, %v662
        %v664 = vrot.slane %v514, 1
        %v665 = vsel %vm634, %v662, %v664
        %v666 = vrot.slane %v515, 1
        %v667 = vsel %vm634, %v664, %v666
        %v668 = vrot.slane %v516, 1
        %v669 = vsel %vm634, %v666, %v668
        %v670 = vrot.slane %v517, 1
        %v671 = vsel %vm634, %v668, %v670
        %v672 = vrot.slane %v518, 1
        %v673 = vsel %vm634, %v670, %v672
        %v674 = vrot.slane %v519, 1
        %v675 = vsel %vm634, %v672, %v674
        %v676 = vrot.slane %v520, 1
        %v677 = vsel %vm634, %v674, %v676
        %v678 = vrot.slane %v521, 1
        %v679 = vsel %vm634, %v676, %v678
        %v680 = vrot.slane %v522, 1
        %v681 = vsel %vm634, %v678, %v680
        %v682 = vrot.slane %v523, 1
        %v683 = vsel %vm634, %v680, %v682
        %v684 = vrot.slane %v524, 1
        %v685 = vsel %vm634, %v682, %v684
        %v686 = vrot.slane %v525, 1
        %v687 = vsel %vm634, %v684, %v686
        %v688 = vrot.slane %v526, 1
        %v689 = vsel %vm634, %v686, %v688
        %v690 = vrot.slane %v527, 1
        %v691 = vsel %vm634, %v688, %v690
        %v692 = vrot.slane %v528, 1
        %v693 = vsel %vm634, %v690, %v692
        %v694 = vrot.slane %v529, 1
        %v695 = vsel %vm634, %v692, %v694
        %v696 = vrot.slane %v530, 1
        %v697 = vsel %vm634, %v694, %v696
        %v730 = vsel %vm634, %v696, 0.0
        %732 = vset.pattern.permute.xlu0 0
        %733 = vperm.xlu0 %732, %v534
        %v734 = vpop.permute.xlu0 %733
        %737 = vset.pattern.permute.xlu0 0
        %738 = vperm.xlu0 %737, %v535
        %v739 = vpop.permute.xlu0 %738
        %742 = vset.pattern.permute.xlu0 0
        %743 = vperm.xlu0 %742, %v536
        %v744 = vpop.permute.xlu0 %743
        %747 = vset.pattern.permute.xlu0 0
        %748 = vperm.xlu0 %747, %v537
        %v749 = vpop.permute.xlu0 %748
        %752 = vset.pattern.permute.xlu0 0
        %753 = vperm.xlu0 %752, %v538
        %v754 = vpop.permute.xlu0 %753
        %757 = vset.pattern.permute.xlu0 0
        %758 = vperm.xlu0 %757, %v539
        %v759 = vpop.permute.xlu0 %758
        %762 = vset.pattern.permute.xlu0 0
        %763 = vperm.xlu0 %762, %v540
        %v764 = vpop.permute.xlu0 %763
        %767 = vset.pattern.permute.xlu0 0
        %768 = vperm.xlu0 %767, %v541
        %v769 = vpop.permute.xlu0 %768
        %772 = vset.pattern.permute.xlu0 0
        %773 = vperm.xlu0 %772, %v542
        %v774 = vpop.permute.xlu0 %773
        %777 = vset.pattern.permute.xlu0 0
        %778 = vperm.xlu0 %777, %v543
        %v779 = vpop.permute.xlu0 %778
        %782 = vset.pattern.permute.xlu0 0
        %783 = vperm.xlu0 %782, %v544
        %v784 = vpop.permute.xlu0 %783
        %787 = vset.pattern.permute.xlu0 0
        %788 = vperm.xlu0 %787, %v545
        %v789 = vpop.permute.xlu0 %788
        %792 = vset.pattern.permute.xlu0 0
        %793 = vperm.xlu0 %792, %v546
        %v794 = vpop.permute.xlu0 %793
        %797 = vset.pattern.permute.xlu0 0
        %798 = vperm.xlu0 %797, %v547
        %v799 = vpop.permute.xlu0 %798
        %802 = vset.pattern.permute.xlu0 0
        %803 = vperm.xlu0 %802, %v548
        %v804 = vpop.permute.xlu0 %803
        %807 = vset.pattern.permute.xlu0 0
        %808 = vperm.xlu0 %807, %v549
        %v809 = vpop.permute.xlu0 %808
        %812 = vset.pattern.permute.xlu0 0
        %813 = vperm.xlu0 %812, %v550
        %v814 = vpop.permute.xlu0 %813
        %817 = vset.pattern.permute.xlu0 0
        %818 = vperm.xlu0 %817, %v551
        %v819 = vpop.permute.xlu0 %818
        %822 = vset.pattern.permute.xlu0 0
        %823 = vperm.xlu0 %822, %v552
        %v824 = vpop.permute.xlu0 %823
        %827 = vset.pattern.permute.xlu0 0
        %828 = vperm.xlu0 %827, %v553
        %v829 = vpop.permute.xlu0 %828
        %832 = vset.pattern.permute.xlu0 0
        %833 = vperm.xlu0 %832, %v554
        %v834 = vpop.permute.xlu0 %833
        %837 = vset.pattern.permute.xlu0 0
        %838 = vperm.xlu0 %837, %v555
        %v839 = vpop.permute.xlu0 %838
        %842 = vset.pattern.permute.xlu0 0
        %843 = vperm.xlu0 %842, %v556
        %v844 = vpop.permute.xlu0 %843
        %847 = vset.pattern.permute.xlu0 0
        %848 = vperm.xlu0 %847, %v557
        %v849 = vpop.permute.xlu0 %848
        %852 = vset.pattern.permute.xlu0 0
        %853 = vperm.xlu0 %852, %v558
        %v854 = vpop.permute.xlu0 %853
        %857 = vset.pattern.permute.xlu0 0
        %858 = vperm.xlu0 %857, %v559
        %v859 = vpop.permute.xlu0 %858
        %862 = vset.pattern.permute.xlu0 0
        %863 = vperm.xlu0 %862, %v560
        %v864 = vpop.permute.xlu0 %863
        %867 = vset.pattern.permute.xlu0 0
        %868 = vperm.xlu0 %867, %v561
        %v869 = vpop.permute.xlu0 %868
        %872 = vset.pattern.permute.xlu0 0
        %873 = vperm.xlu0 %872, %v562
        %v874 = vpop.permute.xlu0 %873
        %877 = vset.pattern.permute.xlu0 0
        %878 = vperm.xlu0 %877, %v563
        %v879 = vpop.permute.xlu0 %878
        %882 = vset.pattern.permute.xlu0 0
        %883 = vperm.xlu0 %882, %v564
        %v884 = vpop.permute.xlu0 %883
        %887 = vset.pattern.permute.xlu0 0
        %888 = vperm.xlu0 %887, %v565
        %v889 = vpop.permute.xlu0 %888
        %v891 = vmul.f32 %v637, %v734
        %v892 = vmul.f32 %v639, %v739
        %v893 = vmul.f32 %v641, %v744
        %v894 = vmul.f32 %v643, %v749
        %v895 = vmul.f32 %v645, %v754
        %v896 = vmul.f32 %v647, %v759
        %v897 = vmul.f32 %v649, %v764
        %v898 = vmul.f32 %v651, %v769
        %v899 = vmul.f32 %v653, %v774
        %v900 = vmul.f32 %v655, %v779
        %v901 = vmul.f32 %v657, %v784
        %v902 = vmul.f32 %v659, %v789
        %v903 = vmul.f32 %v661, %v794
        %v904 = vmul.f32 %v663, %v799
        %v905 = vmul.f32 %v665, %v804
        %v906 = vmul.f32 %v667, %v809
        %v907 = vmul.f32 %v669, %v814
        %v908 = vmul.f32 %v671, %v819
        %v909 = vmul.f32 %v673, %v824
        %v910 = vmul.f32 %v675, %v829
        %v911 = vmul.f32 %v677, %v834
        %v912 = vmul.f32 %v679, %v839
        %v913 = vmul.f32 %v681, %v844
        %v914 = vmul.f32 %v683, %v849
        %v915 = vmul.f32 %v685, %v854
        %v916 = vmul.f32 %v687, %v859
        %v917 = vmul.f32 %v689, %v864
        %v918 = vmul.f32 %v691, %v869
        %v919 = vmul.f32 %v693, %v874
        %v920 = vmul.f32 %v695, %v879
        %v921 = vmul.f32 %v697, %v884
        %v922 = vmul.f32 %v730, %v889
        %v923 = vlaneseq
        %v924 = vshrl.u32 %v923, 7
        %v925 = vsub.s32 0, %v924
        %v926 = vrot.slane %v532, %v925
        %v927 = vmul.f32 %v891, %v926
        %v928 = vmul.f32 %v892, %v926
        %v929 = vmul.f32 %v893, %v926
        %v930 = vmul.f32 %v894, %v926
        %v931 = vmul.f32 %v895, %v926
        %v932 = vmul.f32 %v896, %v926
        %v933 = vmul.f32 %v897, %v926
        %v934 = vmul.f32 %v898, %v926
        %v935 = vmul.f32 %v899, %v926
        %v936 = vmul.f32 %v900, %v926
        %v937 = vmul.f32 %v901, %v926
        %v938 = vmul.f32 %v902, %v926
        %v939 = vmul.f32 %v903, %v926
        %v940 = vmul.f32 %v904, %v926
        %v941 = vmul.f32 %v905, %v926
        %v942 = vmul.f32 %v906, %v926
        %v943 = vmul.f32 %v907, %v926
        %v944 = vmul.f32 %v908, %v926
        %v945 = vmul.f32 %v909, %v926
        %v946 = vmul.f32 %v910, %v926
        %v947 = vmul.f32 %v911, %v926
        %v948 = vmul.f32 %v912, %v926
        %v949 = vmul.f32 %v913, %v926
        %v950 = vmul.f32 %v914, %v926
        %v951 = vmul.f32 %v915, %v926
        %v952 = vmul.f32 %v916, %v926
        %v953 = vmul.f32 %v917, %v926
        %v954 = vmul.f32 %v918, %v926
        %v955 = vmul.f32 %v919, %v926
        %v956 = vmul.f32 %v920, %v926
        %v957 = vmul.f32 %v921, %v926
        %v958 = vmul.f32 %v922, %v926
        %v959 = vadd.f32 %v570, %v927
        %v960 = vadd.f32 %v571, %v928
        %v961 = vadd.f32 %v572, %v929
        %v962 = vadd.f32 %v573, %v930
        %v963 = vadd.f32 %v574, %v931
        %v964 = vadd.f32 %v575, %v932
        %v965 = vadd.f32 %v576, %v933
        %v966 = vadd.f32 %v577, %v934
        %v967 = vadd.f32 %v578, %v935
        %v968 = vadd.f32 %v579, %v936
        %v969 = vadd.f32 %v580, %v937
        %v970 = vadd.f32 %v581, %v938
        %v971 = vadd.f32 %v582, %v939
        %v972 = vadd.f32 %v583, %v940
        %v973 = vadd.f32 %v584, %v941
        %v974 = vadd.f32 %v585, %v942
        %v975 = vadd.f32 %v586, %v943
        %v976 = vadd.f32 %v587, %v944
        %v977 = vadd.f32 %v588, %v945
        %v978 = vadd.f32 %v589, %v946
        %v979 = vadd.f32 %v590, %v947
        %v980 = vadd.f32 %v591, %v948
        %v981 = vadd.f32 %v592, %v949
        %v982 = vadd.f32 %v593, %v950
        %v983 = vadd.f32 %v594, %v951
        %v984 = vadd.f32 %v595, %v952
        %v985 = vadd.f32 %v596, %v953
        %v986 = vadd.f32 %v597, %v954
        %v987 = vadd.f32 %v598, %v955
        %v988 = vadd.f32 %v599, %v956
        %v989 = vadd.f32 %v600, %v957
        %v990 = vadd.f32 %v601, %v958
        %vm991 = vcmask 1040384
        %v992 = vrot.slane %v499, 7
        %v993 = vrot.slane %v500, 7
        %v994 = vsel %vm991, %v992, %v993
        %v995 = vrot.slane %v501, 7
        %v996 = vsel %vm991, %v993, %v995
        %v997 = vrot.slane %v502, 7
        %v998 = vsel %vm991, %v995, %v997
        %v999 = vrot.slane %v503, 7
        %v1000 = vsel %vm991, %v997, %v999
        %v1001 = vrot.slane %v504, 7
        %v1002 = vsel %vm991, %v999, %v1001
        %v1003 = vrot.slane %v505, 7
        %v1004 = vsel %vm991, %v1001, %v1003
        %v1005 = vrot.slane %v506, 7
        %v1006 = vsel %vm991, %v1003, %v1005
        %v1007 = vrot.slane %v507, 7
        %v1008 = vsel %vm991, %v1005, %v1007
        %v1009 = vrot.slane %v508, 7
        %v1010 = vsel %vm991, %v1007, %v1009
        %v1011 = vrot.slane %v509, 7
        %v1012 = vsel %vm991, %v1009, %v1011
        %v1013 = vrot.slane %v510, 7
        %v1014 = vsel %vm991, %v1011, %v1013
        %v1015 = vrot.slane %v511, 7
        %v1016 = vsel %vm991, %v1013, %v1015
        %v1017 = vrot.slane %v512, 7
        %v1018 = vsel %vm991, %v1015, %v1017
        %v1019 = vrot.slane %v513, 7
        %v1020 = vsel %vm991, %v1017, %v1019
        %v1021 = vrot.slane %v514, 7
        %v1022 = vsel %vm991, %v1019, %v1021
        %v1023 = vrot.slane %v515, 7
        %v1024 = vsel %vm991, %v1021, %v1023
        %v1025 = vrot.slane %v516, 7
        %v1026 = vsel %vm991, %v1023, %v1025
        %v1027 = vrot.slane %v517, 7
        %v1028 = vsel %vm991, %v1025, %v1027
        %v1029 = vrot.slane %v518, 7
        %v1030 = vsel %vm991, %v1027, %v1029
        %v1031 = vrot.slane %v519, 7
        %v1032 = vsel %vm991, %v1029, %v1031
        %v1033 = vrot.slane %v520, 7
        %v1034 = vsel %vm991, %v1031, %v1033
        %v1035 = vrot.slane %v521, 7
        %v1036 = vsel %vm991, %v1033, %v1035
        %v1037 = vrot.slane %v522, 7
        %v1038 = vsel %vm991, %v1035, %v1037
        %v1039 = vrot.slane %v523, 7
        %v1040 = vsel %vm991, %v1037, %v1039
        %v1041 = vrot.slane %v524, 7
        %v1042 = vsel %vm991, %v1039, %v1041
        %v1043 = vrot.slane %v525, 7
        %v1044 = vsel %vm991, %v1041, %v1043
        %v1045 = vrot.slane %v526, 7
        %v1046 = vsel %vm991, %v1043, %v1045
        %v1047 = vrot.slane %v527, 7
        %v1048 = vsel %vm991, %v1045, %v1047
        %v1049 = vrot.slane %v528, 7
        %v1050 = vsel %vm991, %v1047, %v1049
        %v1051 = vrot.slane %v529, 7
        %v1052 = vsel %vm991, %v1049, %v1051
        %v1053 = vrot.slane %v530, 7
        %v1054 = vsel %vm991, %v1051, %v1053
        %v1087 = vsel %vm991, 0.0, %v992
        %1088 = vset.pattern.permute.xlu0 1
        %1089 = vperm.xlu0 %1088, %v534
        %v1090 = vpop.permute.xlu0 %1089
        %1092 = vset.pattern.permute.xlu0 1
        %1093 = vperm.xlu0 %1092, %v535
        %v1094 = vpop.permute.xlu0 %1093
        %1096 = vset.pattern.permute.xlu0 1
        %1097 = vperm.xlu0 %1096, %v536
        %v1098 = vpop.permute.xlu0 %1097
        %1100 = vset.pattern.permute.xlu0 1
        %1101 = vperm.xlu0 %1100, %v537
        %v1102 = vpop.permute.xlu0 %1101
        %1104 = vset.pattern.permute.xlu0 1
        %1105 = vperm.xlu0 %1104, %v538
        %v1106 = vpop.permute.xlu0 %1105
        %1108 = vset.pattern.permute.xlu0 1
        %1109 = vperm.xlu0 %1108, %v539
        %v1110 = vpop.permute.xlu0 %1109
        %1112 = vset.pattern.permute.xlu0 1
        %1113 = vperm.xlu0 %1112, %v540
        %v1114 = vpop.permute.xlu0 %1113
        %1116 = vset.pattern.permute.xlu0 1
        %1117 = vperm.xlu0 %1116, %v541
        %v1118 = vpop.permute.xlu0 %1117
        %1120 = vset.pattern.permute.xlu0 1
        %1121 = vperm.xlu0 %1120, %v542
        %v1122 = vpop.permute.xlu0 %1121
        %1124 = vset.pattern.permute.xlu0 1
        %1125 = vperm.xlu0 %1124, %v543
        %v1126 = vpop.permute.xlu0 %1125
        %1128 = vset.pattern.permute.xlu0 1
        %1129 = vperm.xlu0 %1128, %v544
        %v1130 = vpop.permute.xlu0 %1129
        %1132 = vset.pattern.permute.xlu0 1
        %1133 = vperm.xlu0 %1132, %v545
        %v1134 = vpop.permute.xlu0 %1133
        %1136 = vset.pattern.permute.xlu0 1
        %1137 = vperm.xlu0 %1136, %v546
        %v1138 = vpop.permute.xlu0 %1137
        %1140 = vset.pattern.permute.xlu0 1
        %1141 = vperm.xlu0 %1140, %v547
        %v1142 = vpop.permute.xlu0 %1141
        %1144 = vset.pattern.permute.xlu0 1
        %1145 = vperm.xlu0 %1144, %v548
        %v1146 = vpop.permute.xlu0 %1145
        %1148 = vset.pattern.permute.xlu0 1
        %1149 = vperm.xlu0 %1148, %v549
        %v1150 = vpop.permute.xlu0 %1149
        %1152 = vset.pattern.permute.xlu0 1
        %1153 = vperm.xlu0 %1152, %v550
        %v1154 = vpop.permute.xlu0 %1153
        %1156 = vset.pattern.permute.xlu0 1
        %1157 = vperm.xlu0 %1156, %v551
        %v1158 = vpop.permute.xlu0 %1157
        %1160 = vset.pattern.permute.xlu0 1
        %1161 = vperm.xlu0 %1160, %v552
        %v1162 = vpop.permute.xlu0 %1161
        %1164 = vset.pattern.permute.xlu0 1
        %1165 = vperm.xlu0 %1164, %v553
        %v1166 = vpop.permute.xlu0 %1165
        %1168 = vset.pattern.permute.xlu0 1
        %1169 = vperm.xlu0 %1168, %v554
        %v1170 = vpop.permute.xlu0 %1169
        %1172 = vset.pattern.permute.xlu0 1
        %1173 = vperm.xlu0 %1172, %v555
        %v1174 = vpop.permute.xlu0 %1173
        %1176 = vset.pattern.permute.xlu0 1
        %1177 = vperm.xlu0 %1176, %v556
        %v1178 = vpop.permute.xlu0 %1177
        %1180 = vset.pattern.permute.xlu0 1
        %1181 = vperm.xlu0 %1180, %v557
        %v1182 = vpop.permute.xlu0 %1181
        %1184 = vset.pattern.permute.xlu0 1
        %1185 = vperm.xlu0 %1184, %v558
        %v1186 = vpop.permute.xlu0 %1185
        %1188 = vset.pattern.permute.xlu0 1
        %1189 = vperm.xlu0 %1188, %v559
        %v1190 = vpop.permute.xlu0 %1189
        %1192 = vset.pattern.permute.xlu0 1
        %1193 = vperm.xlu0 %1192, %v560
        %v1194 = vpop.permute.xlu0 %1193
        %1196 = vset.pattern.permute.xlu0 1
        %1197 = vperm.xlu0 %1196, %v561
        %v1198 = vpop.permute.xlu0 %1197
        %1200 = vset.pattern.permute.xlu0 1
        %1201 = vperm.xlu0 %1200, %v562
        %v1202 = vpop.permute.xlu0 %1201
        %1204 = vset.pattern.permute.xlu0 1
        %1205 = vperm.xlu0 %1204, %v563
        %v1206 = vpop.permute.xlu0 %1205
        %1208 = vset.pattern.permute.xlu0 1
        %1209 = vperm.xlu0 %1208, %v564
        %v1210 = vpop.permute.xlu0 %1209
        %1212 = vset.pattern.permute.xlu0 1
        %1213 = vperm.xlu0 %1212, %v565
        %v1214 = vpop.permute.xlu0 %1213
        %v1216 = vmul.f32 %v1087, %v1090
        %v1217 = vmul.f32 %v994, %v1094
        %v1218 = vmul.f32 %v996, %v1098
        %v1219 = vmul.f32 %v998, %v1102
        %v1220 = vmul.f32 %v1000, %v1106
        %v1221 = vmul.f32 %v1002, %v1110
        %v1222 = vmul.f32 %v1004, %v1114
        %v1223 = vmul.f32 %v1006, %v1118
        %v1224 = vmul.f32 %v1008, %v1122
        %v1225 = vmul.f32 %v1010, %v1126
        %v1226 = vmul.f32 %v1012, %v1130
        %v1227 = vmul.f32 %v1014, %v1134
        %v1228 = vmul.f32 %v1016, %v1138
        %v1229 = vmul.f32 %v1018, %v1142
        %v1230 = vmul.f32 %v1020, %v1146
        %v1231 = vmul.f32 %v1022, %v1150
        %v1232 = vmul.f32 %v1024, %v1154
        %v1233 = vmul.f32 %v1026, %v1158
        %v1234 = vmul.f32 %v1028, %v1162
        %v1235 = vmul.f32 %v1030, %v1166
        %v1236 = vmul.f32 %v1032, %v1170
        %v1237 = vmul.f32 %v1034, %v1174
        %v1238 = vmul.f32 %v1036, %v1178
        %v1239 = vmul.f32 %v1038, %v1182
        %v1240 = vmul.f32 %v1040, %v1186
        %v1241 = vmul.f32 %v1042, %v1190
        %v1242 = vmul.f32 %v1044, %v1194
        %v1243 = vmul.f32 %v1046, %v1198
        %v1244 = vmul.f32 %v1048, %v1202
        %v1245 = vmul.f32 %v1050, %v1206
        %v1246 = vmul.f32 %v1052, %v1210
        %v1247 = vmul.f32 %v1054, %v1214
        %v1248 = vlaneseq
        %v1249 = vshrl.u32 %v1248, 7
        %v1250 = vsub.s32 0, %v1249
        %v1251 = vrot.slane %v533, %v1250
        %v1252 = vmul.f32 %v1216, %v1251
        %v1253 = vmul.f32 %v1217, %v1251
        %v1254 = vmul.f32 %v1218, %v1251
        %v1255 = vmul.f32 %v1219, %v1251
        %v1256 = vmul.f32 %v1220, %v1251
        %v1257 = vmul.f32 %v1221, %v1251
        %v1258 = vmul.f32 %v1222, %v1251
        %v1259 = vmul.f32 %v1223, %v1251
        %v1260 = vmul.f32 %v1224, %v1251
        %v1261 = vmul.f32 %v1225, %v1251
        %v1262 = vmul.f32 %v1226, %v1251
        %v1263 = vmul.f32 %v1227, %v1251
        %v1264 = vmul.f32 %v1228, %v1251
        %v1265 = vmul.f32 %v1229, %v1251
        %v1266 = vmul.f32 %v1230, %v1251
        %v1267 = vmul.f32 %v1231, %v1251
        %v1268 = vmul.f32 %v1232, %v1251
        %v1269 = vmul.f32 %v1233, %v1251
        %v1270 = vmul.f32 %v1234, %v1251
        %v1271 = vmul.f32 %v1235, %v1251
        %v1272 = vmul.f32 %v1236, %v1251
        %v1273 = vmul.f32 %v1237, %v1251
        %v1274 = vmul.f32 %v1238, %v1251
        %v1275 = vmul.f32 %v1239, %v1251
        %v1276 = vmul.f32 %v1240, %v1251
        %v1277 = vmul.f32 %v1241, %v1251
        %v1278 = vmul.f32 %v1242, %v1251
        %v1279 = vmul.f32 %v1243, %v1251
        %v1280 = vmul.f32 %v1244, %v1251
        %v1281 = vmul.f32 %v1245, %v1251
        %v1282 = vmul.f32 %v1246, %v1251
        %v1283 = vmul.f32 %v1247, %v1251
        %v1284 = vadd.f32 %v959, %v1252
        %v1285 = vadd.f32 %v960, %v1253
        %v1286 = vadd.f32 %v961, %v1254
        %v1287 = vadd.f32 %v962, %v1255
        %v1288 = vadd.f32 %v963, %v1256
        %v1289 = vadd.f32 %v964, %v1257
        %v1290 = vadd.f32 %v965, %v1258
        %v1291 = vadd.f32 %v966, %v1259
        %v1292 = vadd.f32 %v967, %v1260
        %v1293 = vadd.f32 %v968, %v1261
        %v1294 = vadd.f32 %v969, %v1262
        %v1295 = vadd.f32 %v970, %v1263
        %v1296 = vadd.f32 %v971, %v1264
        %v1297 = vadd.f32 %v972, %v1265
        %v1298 = vadd.f32 %v973, %v1266
        %v1299 = vadd.f32 %v974, %v1267
        %v1300 = vadd.f32 %v975, %v1268
        %v1301 = vadd.f32 %v976, %v1269
        %v1302 = vadd.f32 %v977, %v1270
        %v1303 = vadd.f32 %v978, %v1271
        %v1304 = vadd.f32 %v979, %v1272
        %v1305 = vadd.f32 %v980, %v1273
        %v1306 = vadd.f32 %v981, %v1274
        %v1307 = vadd.f32 %v982, %v1275
        %v1308 = vadd.f32 %v983, %v1276
        %v1309 = vadd.f32 %v984, %v1277
        %v1310 = vadd.f32 %v985, %v1278
        %v1311 = vadd.f32 %v986, %v1279
        %v1312 = vadd.f32 %v987, %v1280
        %v1313 = vadd.f32 %v988, %v1281
        %v1314 = vadd.f32 %v989, %v1282
        %v1315 = vadd.f32 %v990, %v1283
        %v1316 = vmul.f32 %v501, %v926
        %v1317 = vmul.f32 %v502, %v926
        %v1318 = vmul.f32 %v503, %v926
        %v1319 = vmul.f32 %v504, %v926
        %v1320 = vmul.f32 %v505, %v926
        %v1321 = vmul.f32 %v506, %v926
        %v1322 = vmul.f32 %v507, %v926
        %v1323 = vmul.f32 %v508, %v926
        %v1324 = vmul.f32 %v509, %v926
        %v1325 = vmul.f32 %v510, %v926
        %v1326 = vmul.f32 %v511, %v926
        %v1327 = vmul.f32 %v512, %v926
        %v1328 = vmul.f32 %v513, %v926
        %v1329 = vmul.f32 %v514, %v926
        %v1330 = vmul.f32 %v515, %v926
        %v1331 = vmul.f32 %v516, %v926
        %v1332 = vmul.f32 %v517, %v926
        %v1333 = vmul.f32 %v518, %v926
        %v1334 = vmul.f32 %v519, %v926
        %v1335 = vmul.f32 %v520, %v926
        %v1336 = vmul.f32 %v521, %v926
        %v1337 = vmul.f32 %v522, %v926
        %v1338 = vmul.f32 %v523, %v926
        %v1339 = vmul.f32 %v524, %v926
        %v1340 = vmul.f32 %v525, %v926
        %v1341 = vmul.f32 %v526, %v926
        %v1342 = vmul.f32 %v527, %v926
        %v1343 = vmul.f32 %v528, %v926
        %v1344 = vmul.f32 %v529, %v926
        %v1345 = vmul.f32 %v530, %v926
        %v1346 = vmul.f32 %v926, 0.0
        %v1347 = vadd.f32 %v570, %v1316
        %v1348 = vadd.f32 %v571, %v1317
        %v1349 = vadd.f32 %v572, %v1318
        %v1350 = vadd.f32 %v573, %v1319
        %v1351 = vadd.f32 %v574, %v1320
        %v1352 = vadd.f32 %v575, %v1321
        %v1353 = vadd.f32 %v576, %v1322
        %v1354 = vadd.f32 %v577, %v1323
        %v1355 = vadd.f32 %v578, %v1324
        %v1356 = vadd.f32 %v579, %v1325
        %v1357 = vadd.f32 %v580, %v1326
        %v1358 = vadd.f32 %v581, %v1327
        %v1359 = vadd.f32 %v582, %v1328
        %v1360 = vadd.f32 %v583, %v1329
        %v1361 = vadd.f32 %v584, %v1330
        %v1362 = vadd.f32 %v585, %v1331
        %v1363 = vadd.f32 %v586, %v1332
        %v1364 = vadd.f32 %v587, %v1333
        %v1365 = vadd.f32 %v588, %v1334
        %v1366 = vadd.f32 %v589, %v1335
        %v1367 = vadd.f32 %v590, %v1336
        %v1368 = vadd.f32 %v591, %v1337
        %v1369 = vadd.f32 %v592, %v1338
        %v1370 = vadd.f32 %v593, %v1339
        %v1371 = vadd.f32 %v594, %v1340
        %v1372 = vadd.f32 %v595, %v1341
        %v1373 = vadd.f32 %v596, %v1342
        %v1374 = vadd.f32 %v597, %v1343
        %v1375 = vadd.f32 %v598, %v1344
        %v1376 = vadd.f32 %v599, %v1345
        %v1377 = vadd.f32 %v600, %v1346
        %v1378 = vadd.f32 %v601, %v1346
        %v1379 = vmul.f32 %v1251, 0.0
        %v1380 = vmul.f32 %v499, %v1251
        %v1381 = vmul.f32 %v500, %v1251
        %v1382 = vmul.f32 %v501, %v1251
        %v1383 = vmul.f32 %v502, %v1251
        %v1384 = vmul.f32 %v503, %v1251
        %v1385 = vmul.f32 %v504, %v1251
        %v1386 = vmul.f32 %v505, %v1251
        %v1387 = vmul.f32 %v506, %v1251
        %v1388 = vmul.f32 %v507, %v1251
        %v1389 = vmul.f32 %v508, %v1251
        %v1390 = vmul.f32 %v509, %v1251
        %v1391 = vmul.f32 %v510, %v1251
        %v1392 = vmul.f32 %v511, %v1251
        %v1393 = vmul.f32 %v512, %v1251
        %v1394 = vmul.f32 %v513, %v1251
        %v1395 = vmul.f32 %v514, %v1251
        %v1396 = vmul.f32 %v515, %v1251
        %v1397 = vmul.f32 %v516, %v1251
        %v1398 = vmul.f32 %v517, %v1251
        %v1399 = vmul.f32 %v518, %v1251
        %v1400 = vmul.f32 %v519, %v1251
        %v1401 = vmul.f32 %v520, %v1251
        %v1402 = vmul.f32 %v521, %v1251
        %v1403 = vmul.f32 %v522, %v1251
        %v1404 = vmul.f32 %v523, %v1251
        %v1405 = vmul.f32 %v524, %v1251
        %v1406 = vmul.f32 %v525, %v1251
        %v1407 = vmul.f32 %v526, %v1251
        %v1408 = vmul.f32 %v527, %v1251
        %v1409 = vmul.f32 %v528, %v1251
        %v1410 = vadd.f32 %v1347, %v1379
        %v1411 = vadd.f32 %v1348, %v1379
        %v1412 = vadd.f32 %v1349, %v1380
        %v1413 = vadd.f32 %v1350, %v1381
        %v1414 = vadd.f32 %v1351, %v1382
        %v1415 = vadd.f32 %v1352, %v1383
        %v1416 = vadd.f32 %v1353, %v1384
        %v1417 = vadd.f32 %v1354, %v1385
        %v1418 = vadd.f32 %v1355, %v1386
        %v1419 = vadd.f32 %v1356, %v1387
        %v1420 = vadd.f32 %v1357, %v1388
        %v1421 = vadd.f32 %v1358, %v1389
        %v1422 = vadd.f32 %v1359, %v1390
        %v1423 = vadd.f32 %v1360, %v1391
        %v1424 = vadd.f32 %v1361, %v1392
        %v1425 = vadd.f32 %v1362, %v1393
        %v1426 = vadd.f32 %v1363, %v1394
        %v1427 = vadd.f32 %v1364, %v1395
        %v1428 = vadd.f32 %v1365, %v1396
        %v1429 = vadd.f32 %v1366, %v1397
        %v1430 = vadd.f32 %v1367, %v1398
        %v1431 = vadd.f32 %v1368, %v1399
        %v1432 = vadd.f32 %v1369, %v1400
        %v1433 = vadd.f32 %v1370, %v1401
        %v1434 = vadd.f32 %v1371, %v1402
        %v1435 = vadd.f32 %v1372, %v1403
        %v1436 = vadd.f32 %v1373, %v1404
        %v1437 = vadd.f32 %v1374, %v1405
        %v1438 = vadd.f32 %v1375, %v1406
        %v1439 = vadd.f32 %v1376, %v1407
        %v1440 = vadd.f32 %v1377, %v1408
        %v1441 = vadd.f32 %v1378, %v1409
        %vm1442 = vcmask 261120
        %v1443 = vsel %vm1442, %v499, 0.0
        %v1444 = vsel %vm1442, %v500, 0.0
        %v1445 = vadd.f32 %v1443, %v1444
        %v1446 = vsel %vm1442, %v501, 0.0
        %v1447 = vadd.f32 %v1445, %v1446
        %v1448 = vsel %vm1442, %v502, 0.0
        %v1449 = vadd.f32 %v1447, %v1448
        %v1450 = vsel %vm1442, %v503, 0.0
        %v1451 = vadd.f32 %v1449, %v1450
        %v1452 = vsel %vm1442, %v504, 0.0
        %v1453 = vadd.f32 %v1451, %v1452
        %v1454 = vsel %vm1442, %v505, 0.0
        %v1455 = vadd.f32 %v1453, %v1454
        %v1456 = vsel %vm1442, %v506, 0.0
        %v1457 = vadd.f32 %v1455, %v1456
        %v1458 = vsel %vm1442, %v507, 0.0
        %v1459 = vadd.f32 %v1457, %v1458
        %v1460 = vsel %vm1442, %v508, 0.0
        %v1461 = vadd.f32 %v1459, %v1460
        %v1462 = vsel %vm1442, %v509, 0.0
        %v1463 = vadd.f32 %v1461, %v1462
        %v1464 = vsel %vm1442, %v510, 0.0
        %v1465 = vadd.f32 %v1463, %v1464
        %v1466 = vsel %vm1442, %v511, 0.0
        %v1467 = vadd.f32 %v1465, %v1466
        %v1468 = vsel %vm1442, %v512, 0.0
        %v1469 = vadd.f32 %v1467, %v1468
        %v1470 = vsel %vm1442, %v513, 0.0
        %v1471 = vadd.f32 %v1469, %v1470
        %v1472 = vsel %vm1442, %v514, 0.0
        %v1473 = vadd.f32 %v1471, %v1472
        %v1474 = vsel %vm1442, %v515, 0.0
        %v1475 = vadd.f32 %v1473, %v1474
        %v1476 = vsel %vm1442, %v516, 0.0
        %v1477 = vadd.f32 %v1475, %v1476
        %v1478 = vsel %vm1442, %v517, 0.0
        %v1479 = vadd.f32 %v1477, %v1478
        %v1480 = vsel %vm1442, %v518, 0.0
        %v1481 = vadd.f32 %v1479, %v1480
        %v1482 = vsel %vm1442, %v519, 0.0
        %v1483 = vadd.f32 %v1481, %v1482
        %v1484 = vsel %vm1442, %v520, 0.0
        %v1485 = vadd.f32 %v1483, %v1484
        %v1486 = vsel %vm1442, %v521, 0.0
        %v1487 = vadd.f32 %v1485, %v1486
        %v1488 = vsel %vm1442, %v522, 0.0
        %v1489 = vadd.f32 %v1487, %v1488
        %v1490 = vsel %vm1442, %v523, 0.0
        %v1491 = vadd.f32 %v1489, %v1490
        %v1492 = vsel %vm1442, %v524, 0.0
        %v1493 = vadd.f32 %v1491, %v1492
        %v1494 = vsel %vm1442, %v525, 0.0
        %v1495 = vadd.f32 %v1493, %v1494
        %v1496 = vsel %vm1442, %v526, 0.0
        %v1497 = vadd.f32 %v1495, %v1496
        %v1498 = vsel %vm1442, %v527, 0.0
        %v1499 = vadd.f32 %v1497, %v1498
        %v1500 = vsel %vm1442, %v528, 0.0
        %v1501 = vadd.f32 %v1499, %v1500
        %v1502 = vsel %vm1442, %v529, 0.0
        %v1503 = vadd.f32 %v1501, %v1502
        %v1504 = vsel %vm1442, %v530, 0.0
        %v1505 = vadd.f32 %v1503, %v1504
        %v1506 = vrot.slane %v1505, 4
        %v1507 = vadd.f32 %v1505, %v1506
        %v1508 = vrot.slane %v1507, 2
        %v1509 = vadd.f32 %v1507, %v1508
        %v1510 = vrot.slane %v1509, 1
        %v1511 = vadd.f32 %v1509, %v1510
        %v1512 = vrcp.pop 256.0
        %v1513 = vmul.f32 %v1511, %v1512
        %v1514 = vsel %vm1442, %v1284, 0.0
        %v1515 = vsel %vm1442, %v1285, 0.0
        %v1516 = vadd.f32 %v1514, %v1515
        %v1517 = vsel %vm1442, %v1286, 0.0
        %v1518 = vadd.f32 %v1516, %v1517
        %v1519 = vsel %vm1442, %v1287, 0.0
        %v1520 = vadd.f32 %v1518, %v1519
        %v1521 = vsel %vm1442, %v1288, 0.0
        %v1522 = vadd.f32 %v1520, %v1521
        %v1523 = vsel %vm1442, %v1289, 0.0
        %v1524 = vadd.f32 %v1522, %v1523
        %v1525 = vsel %vm1442, %v1290, 0.0
        %v1526 = vadd.f32 %v1524, %v1525
        %v1527 = vsel %vm1442, %v1291, 0.0
        %v1528 = vadd.f32 %v1526, %v1527
        %v1529 = vsel %vm1442, %v1292, 0.0
        %v1530 = vadd.f32 %v1528, %v1529
        %v1531 = vsel %vm1442, %v1293, 0.0
        %v1532 = vadd.f32 %v1530, %v1531
        %v1533 = vsel %vm1442, %v1294, 0.0
        %v1534 = vadd.f32 %v1532, %v1533
        %v1535 = vsel %vm1442, %v1295, 0.0
        %v1536 = vadd.f32 %v1534, %v1535
        %v1537 = vsel %vm1442, %v1296, 0.0
        %v1538 = vadd.f32 %v1536, %v1537
        %v1539 = vsel %vm1442, %v1297, 0.0
        %v1540 = vadd.f32 %v1538, %v1539
        %v1541 = vsel %vm1442, %v1298, 0.0
        %v1542 = vadd.f32 %v1540, %v1541
        %v1543 = vsel %vm1442, %v1299, 0.0
        %v1544 = vadd.f32 %v1542, %v1543
        %v1545 = vsel %vm1442, %v1300, 0.0
        %v1546 = vadd.f32 %v1544, %v1545
        %v1547 = vsel %vm1442, %v1301, 0.0
        %v1548 = vadd.f32 %v1546, %v1547
        %v1549 = vsel %vm1442, %v1302, 0.0
        %v1550 = vadd.f32 %v1548, %v1549
        %v1551 = vsel %vm1442, %v1303, 0.0
        %v1552 = vadd.f32 %v1550, %v1551
        %v1553 = vsel %vm1442, %v1304, 0.0
        %v1554 = vadd.f32 %v1552, %v1553
        %v1555 = vsel %vm1442, %v1305, 0.0
        %v1556 = vadd.f32 %v1554, %v1555
        %v1557 = vsel %vm1442, %v1306, 0.0
        %v1558 = vadd.f32 %v1556, %v1557
        %v1559 = vsel %vm1442, %v1307, 0.0
        %v1560 = vadd.f32 %v1558, %v1559
        %v1561 = vsel %vm1442, %v1308, 0.0
        %v1562 = vadd.f32 %v1560, %v1561
        %v1563 = vsel %vm1442, %v1309, 0.0
        %v1564 = vadd.f32 %v1562, %v1563
        %v1565 = vsel %vm1442, %v1310, 0.0
        %v1566 = vadd.f32 %v1564, %v1565
        %v1567 = vsel %vm1442, %v1311, 0.0
        %v1568 = vadd.f32 %v1566, %v1567
        %v1569 = vsel %vm1442, %v1312, 0.0
        %v1570 = vadd.f32 %v1568, %v1569
        %v1571 = vsel %vm1442, %v1313, 0.0
        %v1572 = vadd.f32 %v1570, %v1571
        %v1573 = vsel %vm1442, %v1314, 0.0
        %v1574 = vadd.f32 %v1572, %v1573
        %v1575 = vsel %vm1442, %v1315, 0.0
        %v1576 = vadd.f32 %v1574, %v1575
        %v1577 = vrot.slane %v1576, 4
        %v1578 = vadd.f32 %v1576, %v1577
        %v1579 = vrot.slane %v1578, 2
        %v1580 = vadd.f32 %v1578, %v1579
        %v1581 = vrot.slane %v1580, 1
        %v1582 = vadd.f32 %v1580, %v1581
        %v1583 = vmul.f32 %v1582, %v1512
        %v1584 = vsel %vm1442, %v1410, 0.0
        %v1585 = vsel %vm1442, %v1411, 0.0
        %v1586 = vadd.f32 %v1584, %v1585
        %v1587 = vsel %vm1442, %v1412, 0.0
        %v1588 = vadd.f32 %v1586, %v1587
        %v1589 = vsel %vm1442, %v1413, 0.0
        %v1590 = vadd.f32 %v1588, %v1589
        %v1591 = vsel %vm1442, %v1414, 0.0
        %v1592 = vadd.f32 %v1590, %v1591
        %v1593 = vsel %vm1442, %v1415, 0.0
        %v1594 = vadd.f32 %v1592, %v1593
        %v1595 = vsel %vm1442, %v1416, 0.0
        %v1596 = vadd.f32 %v1594, %v1595
        %v1597 = vsel %vm1442, %v1417, 0.0
        %v1598 = vadd.f32 %v1596, %v1597
        %v1599 = vsel %vm1442, %v1418, 0.0
        %v1600 = vadd.f32 %v1598, %v1599
        %v1601 = vsel %vm1442, %v1419, 0.0
        %v1602 = vadd.f32 %v1600, %v1601
        %v1603 = vsel %vm1442, %v1420, 0.0
        %v1604 = vadd.f32 %v1602, %v1603
        %v1605 = vsel %vm1442, %v1421, 0.0
        %v1606 = vadd.f32 %v1604, %v1605
        %v1607 = vsel %vm1442, %v1422, 0.0
        %v1608 = vadd.f32 %v1606, %v1607
        %v1609 = vsel %vm1442, %v1423, 0.0
        %v1610 = vadd.f32 %v1608, %v1609
        %v1611 = vsel %vm1442, %v1424, 0.0
        %v1612 = vadd.f32 %v1610, %v1611
        %v1613 = vsel %vm1442, %v1425, 0.0
        %v1614 = vadd.f32 %v1612, %v1613
        %v1615 = vsel %vm1442, %v1426, 0.0
        %v1616 = vadd.f32 %v1614, %v1615
        %v1617 = vsel %vm1442, %v1427, 0.0
        %v1618 = vadd.f32 %v1616, %v1617
        %v1619 = vsel %vm1442, %v1428, 0.0
        %v1620 = vadd.f32 %v1618, %v1619
        %v1621 = vsel %vm1442, %v1429, 0.0
        %v1622 = vadd.f32 %v1620, %v1621
        %v1623 = vsel %vm1442, %v1430, 0.0
        %v1624 = vadd.f32 %v1622, %v1623
        %v1625 = vsel %vm1442, %v1431, 0.0
        %v1626 = vadd.f32 %v1624, %v1625
        %v1627 = vsel %vm1442, %v1432, 0.0
        %v1628 = vadd.f32 %v1626, %v1627
        %v1629 = vsel %vm1442, %v1433, 0.0
        %v1630 = vadd.f32 %v1628, %v1629
        %v1631 = vsel %vm1442, %v1434, 0.0
        %v1632 = vadd.f32 %v1630, %v1631
        %v1633 = vsel %vm1442, %v1435, 0.0
        %v1634 = vadd.f32 %v1632, %v1633
        %v1635 = vsel %vm1442, %v1436, 0.0
        %v1636 = vadd.f32 %v1634, %v1635
        %v1637 = vsel %vm1442, %v1437, 0.0
        %v1638 = vadd.f32 %v1636, %v1637
        %v1639 = vsel %vm1442, %v1438, 0.0
        %v1640 = vadd.f32 %v1638, %v1639
        %v1641 = vsel %vm1442, %v1439, 0.0
        %v1642 = vadd.f32 %v1640, %v1641
        %v1643 = vsel %vm1442, %v1440, 0.0
        %v1644 = vadd.f32 %v1642, %v1643
        %v1645 = vsel %vm1442, %v1441, 0.0
        %v1646 = vadd.f32 %v1644, %v1645
        %v1647 = vrot.slane %v1646, 4
        %v1648 = vadd.f32 %v1646, %v1647
        %v1649 = vrot.slane %v1648, 2
        %v1650 = vadd.f32 %v1648, %v1649
        %v1651 = vrot.slane %v1650, 1
        %v1652 = vadd.f32 %v1650, %v1651
        %v1653 = vmul.f32 %v1652, %v1512
        %v1654 = vld [vmem:[%s3] sm:$0xf]
        %v1655 = vld [vmem:[%s3 + $0x4] sm:$0xf]
        %v1656 = vld [vmem:[%s3 + $0x8] sm:$0xf]
        %v1657 = vld [vmem:[%s3 + $0xc] sm:$0xf]
        %v1658 = vunpack.c.l.bf16 %v1654
        %v1659 = vunpack.c.l.bf16 %v1655
        %v1660 = vunpack.c.l.bf16 %v1656
        %v1661 = vunpack.c.l.bf16 %v1657
        %v1662 = vld [vmem:[%s4] sm:$0xf]
        %v1663 = vld [vmem:[%s4 + $0x4] sm:$0xf]
        %v1664 = vld [vmem:[%s4 + $0x8] sm:$0xf]
        %v1665 = vld [vmem:[%s4 + $0xc] sm:$0xf]
        %v1666 = vunpack.c.l.bf16 %v1662
        %v1667 = vunpack.c.l.bf16 %v1663
        %v1668 = vunpack.c.l.bf16 %v1664
        %v1669 = vunpack.c.l.bf16 %v1665
        %v1670 = vld [vmem:[%s5] sm:$0xf]
        %v1671 = vld [vmem:[%s5 + $0x4] sm:$0xf]
        %v1672 = vld [vmem:[%s5 + $0x8] sm:$0xf]
        %v1673 = vld [vmem:[%s5 + $0xc] sm:$0xf]
        %v1674 = vunpack.c.l.bf16 %v1670
        %v1675 = vunpack.c.l.bf16 %v1671
        %v1676 = vunpack.c.l.bf16 %v1672
        %v1677 = vunpack.c.l.bf16 %v1673
        %v1679 = vsel %vm1442, %v1653, 0
        %1681 = vmatprep.subr.mxu0 0.0
        %1682 = vmatpush1.msra.mxu0 %v1674
        %1683 = vmatprep.subr.mxu0 0.0
        %1684 = vmatpush1.msra.mxu0 %v1675
        %1685 = vmatprep.subr.mxu0 0.0
        %1686 = vmatpush1.msra.mxu0 %v1676
        %1687 = vmatprep.subr.mxu0 0.0
        %1688 = vmatpush1.msra.mxu0 %v1677
        %1689 = vmatprep.subr.mxu0 0.0
        %1690 = vmatpush1.msra.mxu0 0.0
        %1691 = vmatprep.subr.mxu0 0.0
        %1692 = vmatpush1.msra.mxu0 0.0
        %1693 = vmatprep.subr.mxu0 0.0
        %1694 = vmatpush1.msra.mxu0 0.0
        %1695 = vmatprep.subr.mxu0 0.0
        %1696 = vmatpush1.msra.mxu0 0.0
        %1697 = vmatprep.subr.mxu0 0.0
        %1698 = vmatpush1.msra.mxu0 0.0
        %1699 = vmatprep.subr.mxu0 0.0
        %1700 = vmatpush1.msra.mxu0 0.0
        %1701 = vmatprep.subr.mxu0 0.0
        %1702 = vmatpush1.msra.mxu0 0.0
        %1703 = vmatprep.subr.mxu0 0.0
        %1704 = vmatpush1.msra.mxu0 0.0
        %1705 = vmatprep.subr.mxu0 0.0
        %1706 = vmatpush1.msra.mxu0 0.0
        %1707 = vmatprep.subr.mxu0 0.0
        %1708 = vmatpush1.msra.mxu0 0.0
        %1709 = vmatprep.subr.mxu0 0.0
        %1710 = vmatpush1.msra.mxu0 0.0
        %1711 = vmatprep.subr.mxu0 0.0
        %1712 = vmatpush1.msra.mxu0 0.0
        %1713 = vmatprep.subr.mxu0 0.0
        %1714 = vmatpush1.msra.mxu0 0.0
        %1715 = vmatprep.subr.mxu0 0.0
        %1716 = vmatpush1.msra.mxu0 0.0
        %1717 = vmatprep.subr.mxu0 0.0
        %1718 = vmatpush1.msra.mxu0 0.0
        %1719 = vmatprep.subr.mxu0 0.0
        %1720 = vmatpush1.msra.mxu0 0.0
        %1721 = vmatprep.subr.mxu0 0.0
        %1722 = vmatpush1.msra.mxu0 0.0
        %1723 = vmatprep.subr.mxu0 0.0
        %1724 = vmatpush1.msra.mxu0 0.0
        %1725 = vmatprep.subr.mxu0 0.0
        %1726 = vmatpush1.msra.mxu0 0.0
        %1727 = vmatprep.subr.mxu0 0.0
        %1728 = vmatpush1.msra.mxu0 0.0
        %1729 = vmatprep.subr.mxu0 0.0
        %1730 = vmatpush1.msra.mxu0 0.0
        %1731 = vmatprep.subr.mxu0 0.0
        %1732 = vmatpush1.msra.mxu0 0.0
        %1733 = vmatprep.subr.mxu0 0.0
        %1734 = vmatpush1.msra.mxu0 0.0
        %1735 = vmatprep.subr.mxu0 0.0
        %1736 = vmatpush1.msra.mxu0 0.0
        %1737 = vmatprep.subr.mxu0 0.0
        %1738 = vmatpush1.msra.mxu0 0.0
        %1739 = vmatprep.subr.mxu0 0.0
        %1740 = vmatpush1.msra.mxu0 0.0
        %1741 = vmatprep.subr.mxu0 0.0
        %1742 = vmatpush1.msra.mxu0 0.0
        %1743 = vmatprep.subr.mxu0 0.0
        %1744 = vmatpush1.msra.mxu0 0.0
        %1745 = vmatprep.mubr.f32.mxu0 0.0
        %1746 = vmatmul.mubr.f32.gmra.mrb[0].mxu0 %v1679
        %v1747 = vpop.f32.mrb[0].mxu0
        %v1748 = vadd.f32 0.0, %v1747
        %v1749 = vpop.f32.mrb[0].mxu0
        %1750 = vdwg.mxu0
        %v1752 = vsel %vm1442, %v1583, 0
        %1754 = vmatprep.subr.mxu0 0.0
        %1755 = vmatpush1.msra.mxu0 %v1666
        %1756 = vmatprep.subr.mxu0 0.0
        %1757 = vmatpush1.msra.mxu0 %v1667
        %1758 = vmatprep.subr.mxu0 0.0
        %1759 = vmatpush1.msra.mxu0 %v1668
        %1760 = vmatprep.subr.mxu0 0.0
        %1761 = vmatpush1.msra.mxu0 %v1669
        %1762 = vmatprep.subr.mxu0 0.0
        %1763 = vmatpush1.msra.mxu0 0.0
        %1764 = vmatprep.subr.mxu0 0.0
        %1765 = vmatpush1.msra.mxu0 0.0
        %1766 = vmatprep.subr.mxu0 0.0
        %1767 = vmatpush1.msra.mxu0 0.0
        %1768 = vmatprep.subr.mxu0 0.0
        %1769 = vmatpush1.msra.mxu0 0.0
        %1770 = vmatprep.subr.mxu0 0.0
        %1771 = vmatpush1.msra.mxu0 0.0
        %1772 = vmatprep.subr.mxu0 0.0
        %1773 = vmatpush1.msra.mxu0 0.0
        %1774 = vmatprep.subr.mxu0 0.0
        %1775 = vmatpush1.msra.mxu0 0.0
        %1776 = vmatprep.subr.mxu0 0.0
        %1777 = vmatpush1.msra.mxu0 0.0
        %1778 = vmatprep.subr.mxu0 0.0
        %1779 = vmatpush1.msra.mxu0 0.0
        %1780 = vmatprep.subr.mxu0 0.0
        %1781 = vmatpush1.msra.mxu0 0.0
        %1782 = vmatprep.subr.mxu0 0.0
        %1783 = vmatpush1.msra.mxu0 0.0
        %1784 = vmatprep.subr.mxu0 0.0
        %1785 = vmatpush1.msra.mxu0 0.0
        %1786 = vmatprep.subr.mxu0 0.0
        %1787 = vmatpush1.msra.mxu0 0.0
        %1788 = vmatprep.subr.mxu0 0.0
        %1789 = vmatpush1.msra.mxu0 0.0
        %1790 = vmatprep.subr.mxu0 0.0
        %1791 = vmatpush1.msra.mxu0 0.0
        %1792 = vmatprep.subr.mxu0 0.0
        %1793 = vmatpush1.msra.mxu0 0.0
        %1794 = vmatprep.subr.mxu0 0.0
        %1795 = vmatpush1.msra.mxu0 0.0
        %1796 = vmatprep.subr.mxu0 0.0
        %1797 = vmatpush1.msra.mxu0 0.0
        %1798 = vmatprep.subr.mxu0 0.0
        %1799 = vmatpush1.msra.mxu0 0.0
        %1800 = vmatprep.subr.mxu0 0.0
        %1801 = vmatpush1.msra.mxu0 0.0
        %1802 = vmatprep.subr.mxu0 0.0
        %1803 = vmatpush1.msra.mxu0 0.0
        %1804 = vmatprep.subr.mxu0 0.0
        %1805 = vmatpush1.msra.mxu0 0.0
        %1806 = vmatprep.subr.mxu0 0.0
        %1807 = vmatpush1.msra.mxu0 0.0
        %1808 = vmatprep.subr.mxu0 0.0
        %1809 = vmatpush1.msra.mxu0 0.0
        %1810 = vmatprep.subr.mxu0 0.0
        %1811 = vmatpush1.msra.mxu0 0.0
        %1812 = vmatprep.subr.mxu0 0.0
        %1813 = vmatpush1.msra.mxu0 0.0
        %1814 = vmatprep.subr.mxu0 0.0
        %1815 = vmatpush1.msra.mxu0 0.0
        %1816 = vmatprep.subr.mxu0 0.0
        %1817 = vmatpush1.msra.mxu0 0.0
        %1818 = vmatprep.mubr.f32.mxu0 0.0
        %1819 = vmatmul.mubr.f32.gmra.mrb[0].mxu0 %v1752
        %v1820 = vpop.f32.mrb[0].mxu0
        %v1821 = vadd.f32 %v1748, %v1820
        %v1822 = vpop.f32.mrb[0].mxu0
        %1823 = vdwg.mxu0
        %v1825 = vsel %vm1442, %v1513, 0
        %1827 = vmatprep.subr.mxu0 0.0
        %1828 = vmatpush1.msra.mxu0 %v1658
        %1829 = vmatprep.subr.mxu0 0.0
        %1830 = vmatpush1.msra.mxu0 %v1659
        %1831 = vmatprep.subr.mxu0 0.0
        %1832 = vmatpush1.msra.mxu0 %v1660
        %1833 = vmatprep.subr.mxu0 0.0
        %1834 = vmatpush1.msra.mxu0 %v1661
        %1835 = vmatprep.subr.mxu0 0.0
        %1836 = vmatpush1.msra.mxu0 0.0
        %1837 = vmatprep.subr.mxu0 0.0
        %1838 = vmatpush1.msra.mxu0 0.0
        %1839 = vmatprep.subr.mxu0 0.0
        %1840 = vmatpush1.msra.mxu0 0.0
        %1841 = vmatprep.subr.mxu0 0.0
        %1842 = vmatpush1.msra.mxu0 0.0
        %1843 = vmatprep.subr.mxu0 0.0
        %1844 = vmatpush1.msra.mxu0 0.0
        %1845 = vmatprep.subr.mxu0 0.0
        %1846 = vmatpush1.msra.mxu0 0.0
        %1847 = vmatprep.subr.mxu0 0.0
        %1848 = vmatpush1.msra.mxu0 0.0
        %1849 = vmatprep.subr.mxu0 0.0
        %1850 = vmatpush1.msra.mxu0 0.0
        %1851 = vmatprep.subr.mxu0 0.0
        %1852 = vmatpush1.msra.mxu0 0.0
        %1853 = vmatprep.subr.mxu0 0.0
        %1854 = vmatpush1.msra.mxu0 0.0
        %1855 = vmatprep.subr.mxu0 0.0
        %1856 = vmatpush1.msra.mxu0 0.0
        %1857 = vmatprep.subr.mxu0 0.0
        %1858 = vmatpush1.msra.mxu0 0.0
        %1859 = vmatprep.subr.mxu0 0.0
        %1860 = vmatpush1.msra.mxu0 0.0
        %1861 = vmatprep.subr.mxu0 0.0
        %1862 = vmatpush1.msra.mxu0 0.0
        %1863 = vmatprep.subr.mxu0 0.0
        %1864 = vmatpush1.msra.mxu0 0.0
        %1865 = vmatprep.subr.mxu0 0.0
        %1866 = vmatpush1.msra.mxu0 0.0
        %1867 = vmatprep.subr.mxu0 0.0
        %1868 = vmatpush1.msra.mxu0 0.0
        %1869 = vmatprep.subr.mxu0 0.0
        %1870 = vmatpush1.msra.mxu0 0.0
        %1871 = vmatprep.subr.mxu0 0.0
        %1872 = vmatpush1.msra.mxu0 0.0
        %1873 = vmatprep.subr.mxu0 0.0
        %1874 = vmatpush1.msra.mxu0 0.0
        %1875 = vmatprep.subr.mxu0 0.0
        %1876 = vmatpush1.msra.mxu0 0.0
        %1877 = vmatprep.subr.mxu0 0.0
        %1878 = vmatpush1.msra.mxu0 0.0
        %1879 = vmatprep.subr.mxu0 0.0
        %1880 = vmatpush1.msra.mxu0 0.0
        %1881 = vmatprep.subr.mxu0 0.0
        %1882 = vmatpush1.msra.mxu0 0.0
        %1883 = vmatprep.subr.mxu0 0.0
        %1884 = vmatpush1.msra.mxu0 0.0
        %1885 = vmatprep.subr.mxu0 0.0
        %1886 = vmatpush1.msra.mxu0 0.0
        %1887 = vmatprep.subr.mxu0 0.0
        %1888 = vmatpush1.msra.mxu0 0.0
        %1889 = vmatprep.subr.mxu0 0.0
        %1890 = vmatpush1.msra.mxu0 0.0
        %1891 = vmatprep.mubr.f32.mxu0 0.0
        %1892 = vmatmul.mubr.f32.gmra.mrb[0].mxu0 %v1825
        %v1893 = vpop.f32.mrb[0].mxu0
        %v1894 = vadd.f32 0.0, %v1893
        %v1895 = vpop.f32.mrb[0].mxu0
        %1896 = vdwg.mxu0
        %v1897 = vadd.f32 %v1821, %v1894
        %v1898 = vld [vmem:[%s6] sm:$0x1]
        %v1899 = vadd.f32 %v1897, %v1898
        %v1900 = vld [vmem:[%s7] sm:$0x1]
        %v1901 = vadd.f32 %v1899, %v1900
        %v1902 = vld [vmem:[%s8] sm:$0xff]
        %v1903 = vld [vmem:[%s8 + $0x8] sm:$0xff]
        %v1904 = vld [vmem:[%s8 + $0x10] sm:$0xff]
        %v1905 = vld [vmem:[%s8 + $0x18] sm:$0xff]
        %v1906 = vld [vmem:[%s9] sm:$0x1]
        %v1908 = vsel %vm1442, %v1901, 0
        %1910 = vmatprep.subr.mxu0 0.0
        %1911 = vmatpush1.msra.mxu0 %v1902
        %1912 = vmatprep.subr.mxu0 0.0
        %1913 = vmatpush1.msra.mxu0 %v1903
        %1914 = vmatprep.subr.mxu0 0.0
        %1915 = vmatpush1.msra.mxu0 %v1904
        %1916 = vmatprep.subr.mxu0 0.0
        %1917 = vmatpush1.msra.mxu0 %v1905
        %1918 = vmatprep.subr.mxu0 0.0
        %1919 = vmatpush1.msra.mxu0 0.0
        %1920 = vmatprep.subr.mxu0 0.0
        %1921 = vmatpush1.msra.mxu0 0.0
        %1922 = vmatprep.subr.mxu0 0.0
        %1923 = vmatpush1.msra.mxu0 0.0
        %1924 = vmatprep.subr.mxu0 0.0
        %1925 = vmatpush1.msra.mxu0 0.0
        %1926 = vmatprep.subr.mxu0 0.0
        %1927 = vmatpush1.msra.mxu0 0.0
        %1928 = vmatprep.subr.mxu0 0.0
        %1929 = vmatpush1.msra.mxu0 0.0
        %1930 = vmatprep.subr.mxu0 0.0
        %1931 = vmatpush1.msra.mxu0 0.0
        %1932 = vmatprep.subr.mxu0 0.0
        %1933 = vmatpush1.msra.mxu0 0.0
        %1934 = vmatprep.subr.mxu0 0.0
        %1935 = vmatpush1.msra.mxu0 0.0
        %1936 = vmatprep.subr.mxu0 0.0
        %1937 = vmatpush1.msra.mxu0 0.0
        %1938 = vmatprep.subr.mxu0 0.0
        %1939 = vmatpush1.msra.mxu0 0.0
        %1940 = vmatprep.subr.mxu0 0.0
        %1941 = vmatpush1.msra.mxu0 0.0
        %1942 = vmatprep.subr.mxu0 0.0
        %1943 = vmatpush1.msra.mxu0 0.0
        %1944 = vmatprep.subr.mxu0 0.0
        %1945 = vmatpush1.msra.mxu0 0.0
        %1946 = vmatprep.subr.mxu0 0.0
        %1947 = vmatpush1.msra.mxu0 0.0
        %1948 = vmatprep.subr.mxu0 0.0
        %1949 = vmatpush1.msra.mxu0 0.0
        %1950 = vmatprep.subr.mxu0 0.0
        %1951 = vmatpush1.msra.mxu0 0.0
        %1952 = vmatprep.subr.mxu0 0.0
        %1953 = vmatpush1.msra.mxu0 0.0
        %1954 = vmatprep.subr.mxu0 0.0
        %1955 = vmatpush1.msra.mxu0 0.0
        %1956 = vmatprep.subr.mxu0 0.0
        %1957 = vmatpush1.msra.mxu0 0.0
        %1958 = vmatprep.subr.mxu0 0.0
        %1959 = vmatpush1.msra.mxu0 0.0
        %1960 = vmatprep.subr.mxu0 0.0
        %1961 = vmatpush1.msra.mxu0 0.0
        %1962 = vmatprep.subr.mxu0 0.0
        %1963 = vmatpush1.msra.mxu0 0.0
        %1964 = vmatprep.subr.mxu0 0.0
        %1965 = vmatpush1.msra.mxu0 0.0
        %1966 = vmatprep.subr.mxu0 0.0
        %1967 = vmatpush1.msra.mxu0 0.0
        %1968 = vmatprep.subr.mxu0 0.0
        %1969 = vmatpush1.msra.mxu0 0.0
        %1970 = vmatprep.subr.mxu0 0.0
        %1971 = vmatpush1.msra.mxu0 0.0
        %1972 = vmatprep.subr.mxu0 0.0
        %1973 = vmatpush1.msra.mxu0 0.0
        %1974 = vmatprep.mubr.f32.mxu0 0.0
        %1975 = vmatmul.mubr.f32.gmra.mrb[0].mxu0 %v1908
        %v1976 = vpop.f32.mrb[0].mxu0
        %v1977 = vadd.f32 %v1906, %v1976
        %v1978 = vpop.f32.mrb[0].mxu0
        %1979 = vdwg.mxu0
        %v1980 = vmul.f32 %v1977, 0.5
        %v1981 = vmul.f32 %v1977, 0.044715
        %v1982 = vmul.f32 %v1981, %v1977
        %v1983 = vmul.f32 %v1982, %v1977
        %v1984 = vadd.f32 %v1977, %v1983
        %v1985 = vmul.f32 %v1984, 0.7978846
        %v1986 = vtanh.pop %v1985
        %v1987 = vadd.f32 %v1986, 1.0
        %v1988 = vmul.f32 %v1980, %v1987
        %v1989 = vld [vmem:[%s10] sm:$0xff]
        %v1990 = vld [vmem:[%s11] sm:$0x1]
        %vm1991 = vcmask 64512
        %v1993 = vsel %vm1991, %v1988, 0
        %1995 = vmatprep.subr.mxu0 0.0
        %1996 = vmatpush1.msra.mxu0 %v1989
        %1997 = vmatprep.subr.mxu0 0.0
        %1998 = vmatpush1.msra.mxu0 0.0
        %1999 = vmatprep.subr.mxu0 0.0
        %2000 = vmatpush1.msra.mxu0 0.0
        %2001 = vmatprep.subr.mxu0 0.0
        %2002 = vmatpush1.msra.mxu0 0.0
        %2003 = vmatprep.subr.mxu0 0.0
        %2004 = vmatpush1.msra.mxu0 0.0
        %2005 = vmatprep.subr.mxu0 0.0
        %2006 = vmatpush1.msra.mxu0 0.0
        %2007 = vmatprep.subr.mxu0 0.0
        %2008 = vmatpush1.msra.mxu0 0.0
        %2009 = vmatprep.subr.mxu0 0.0
        %2010 = vmatpush1.msra.mxu0 0.0
        %2011 = vmatprep.subr.mxu0 0.0
        %2012 = vmatpush1.msra.mxu0 0.0
        %2013 = vmatprep.subr.mxu0 0.0
        %2014 = vmatpush1.msra.mxu0 0.0
        %2015 = vmatprep.subr.mxu0 0.0
        %2016 = vmatpush1.msra.mxu0 0.0
        %2017 = vmatprep.subr.mxu0 0.0
        %2018 = vmatpush1.msra.mxu0 0.0
        %2019 = vmatprep.subr.mxu0 0.0
        %2020 = vmatpush1.msra.mxu0 0.0
        %2021 = vmatprep.subr.mxu0 0.0
        %2022 = vmatpush1.msra.mxu0 0.0
        %2023 = vmatprep.subr.mxu0 0.0
        %2024 = vmatpush1.msra.mxu0 0.0
        %2025 = vmatprep.subr.mxu0 0.0
        %2026 = vmatpush1.msra.mxu0 0.0
        %2027 = vmatprep.subr.mxu0 0.0
        %2028 = vmatpush1.msra.mxu0 0.0
        %2029 = vmatprep.subr.mxu0 0.0
        %2030 = vmatpush1.msra.mxu0 0.0
        %2031 = vmatprep.subr.mxu0 0.0
        %2032 = vmatpush1.msra.mxu0 0.0
        %2033 = vmatprep.subr.mxu0 0.0
        %2034 = vmatpush1.msra.mxu0 0.0
        %2035 = vmatprep.subr.mxu0 0.0
        %2036 = vmatpush1.msra.mxu0 0.0
        %2037 = vmatprep.subr.mxu0 0.0
        %2038 = vmatpush1.msra.mxu0 0.0
        %2039 = vmatprep.subr.mxu0 0.0
        %2040 = vmatpush1.msra.mxu0 0.0
        %2041 = vmatprep.subr.mxu0 0.0
        %2042 = vmatpush1.msra.mxu0 0.0
        %2043 = vmatprep.subr.mxu0 0.0
        %2044 = vmatpush1.msra.mxu0 0.0
        %2045 = vmatprep.subr.mxu0 0.0
        %2046 = vmatpush1.msra.mxu0 0.0
        %2047 = vmatprep.subr.mxu0 0.0
        %2048 = vmatpush1.msra.mxu0 0.0
        %2049 = vmatprep.subr.mxu0 0.0
        %2050 = vmatpush1.msra.mxu0 0.0
        %2051 = vmatprep.subr.mxu0 0.0
        %2052 = vmatpush1.msra.mxu0 0.0
        %2053 = vmatprep.subr.mxu0 0.0
        %2054 = vmatpush1.msra.mxu0 0.0
        %2055 = vmatprep.subr.mxu0 0.0
        %2056 = vmatpush1.msra.mxu0 0.0
        %2057 = vmatprep.subr.mxu0 0.0
        %2058 = vmatpush1.msra.mxu0 0.0
        %2059 = vmatprep.mubr.f32.mxu0 0.0
        %2060 = vmatmul.mubr.f32.gmra.mrb[0].mxu0 %v1993
        %v2061 = vpop.f32.mrb[0].mxu0
        %v2062 = vadd.f32 %v1990, %v2061
        %v2063 = vpop.f32.mrb[0].mxu0
        %2064 = vdwg.mxu0
        %2066 = vrot.lane.b32.xlu0 %v2062, 96
        %v2067 = vpop.permute.xlu0 %2066
        %v2069 = vmax.f32 %v2062, %v2067
        %2070 = vrot.lane.b32.xlu0 %v2062, 64
        %v2071 = vpop.permute.xlu0 %2070
        %v2073 = vmax.f32 %v2069, %v2071
        %v2074 = vsub.f32 %v2062, %v2073
        %v2075 = vmul.f32 %v2074, 1.442695
        %v2076 = vpow.pop %v2075
        %2078 = vrot.lane.b32.xlu0 %v2073, 32
        %v2079 = vpop.permute.xlu0 %2078
        %v2081 = vsub.f32 %v2062, %v2079
        %v2082 = vmul.f32 %v2081, 1.442695
        %v2083 = vpow.pop %v2082
        %2084 = vrot.lane.b32.xlu0 %v2073, 64
        %v2085 = vpop.permute.xlu0 %2084
        %v2087 = vsub.f32 %v2062, %v2085
        %v2088 = vmul.f32 %v2087, 1.442695
        %v2089 = vpow.pop %v2088
        %2091 = vrot.lane.b32.xlu0 %v2083, 96
        %v2092 = vpop.permute.xlu0 %2091
        %v2094 = vadd.f32 %v2076, %v2092
        %2096 = vrot.lane.b32.xlu0 %v2089, 64
        %v2097 = vpop.permute.xlu0 %2096
        %v2099 = vadd.f32 %v2094, %v2097
        %v2100 = vrcp.pop %v2099
        %v2101 = vmul.f32 %v2076, %v2100
        %2103 = vrot.lane.b32.xlu0 %v2099, 32
        %v2104 = vpop.permute.xlu0 %2103
        %v2106 = vrcp.pop %v2104
        %v2107 = vmul.f32 %v2083, %v2106
        %2108 = vrot.lane.b32.xlu0 %v2099, 64
        %v2109 = vpop.permute.xlu0 %2108
        %v2111 = vrcp.pop %v2109
        %v2112 = vmul.f32 %v2089, %v2111
        %v2113 = vld [vmem:[%s12] sm:$0xff]
        %v2114 = vld [vmem:[%s12 + $0x8] sm:$0xff]
        %v2115 = vld [vmem:[%s12 + $0x10] sm:$0xff]
        %v2116 = vld [vmem:[%s12 + $0x18] sm:$0xff]
        %v2117 = vlaneseq
        %v2118 = vshrl.u32 %v2117, 7
        %v2119 = vsub.s32 0, %v2118
        %v2120 = vrot.slane %v2101, %v2119
        %v2121 = vmul.f32 %v1666, %v2120
        %v2122 = vmul.f32 %v1667, %v2120
        %v2123 = vmul.f32 %v1668, %v2120
        %v2124 = vmul.f32 %v1669, %v2120
        %v2126 = vsel %vm1442, %v2121, 0
        %v2129 = vsel %vm1442, %v2122, 0
        %v2132 = vsel %vm1442, %v2123, 0
        %v2135 = vsel %vm1442, %v2124, 0
        %2137 = vmatprep.subr.mxu0 0.0
        %2138 = vmatpush1.msra.mxu0 %v2113
        %2139 = vmatprep.subr.mxu0 0.0
        %2140 = vmatpush1.msra.mxu0 %v2114
        %2141 = vmatprep.subr.mxu0 0.0
        %2142 = vmatpush1.msra.mxu0 %v2115
        %2143 = vmatprep.subr.mxu0 0.0
        %2144 = vmatpush1.msra.mxu0 %v2116
        %2145 = vmatprep.subr.mxu0 0.0
        %2146 = vmatpush1.msra.mxu0 0.0
        %2147 = vmatprep.subr.mxu0 0.0
        %2148 = vmatpush1.msra.mxu0 0.0
        %2149 = vmatprep.subr.mxu0 0.0
        %2150 = vmatpush1.msra.mxu0 0.0
        %2151 = vmatprep.subr.mxu0 0.0
        %2152 = vmatpush1.msra.mxu0 0.0
        %2153 = vmatprep.subr.mxu0 0.0
        %2154 = vmatpush1.msra.mxu0 0.0
        %2155 = vmatprep.subr.mxu0 0.0
        %2156 = vmatpush1.msra.mxu0 0.0
        %2157 = vmatprep.subr.mxu0 0.0
        %2158 = vmatpush1.msra.mxu0 0.0
        %2159 = vmatprep.subr.mxu0 0.0
        %2160 = vmatpush1.msra.mxu0 0.0
        %2161 = vmatprep.subr.mxu0 0.0
        %2162 = vmatpush1.msra.mxu0 0.0
        %2163 = vmatprep.subr.mxu0 0.0
        %2164 = vmatpush1.msra.mxu0 0.0
        %2165 = vmatprep.subr.mxu0 0.0
        %2166 = vmatpush1.msra.mxu0 0.0
        %2167 = vmatprep.subr.mxu0 0.0
        %2168 = vmatpush1.msra.mxu0 0.0
        %2169 = vmatprep.subr.mxu0 0.0
        %2170 = vmatpush1.msra.mxu0 0.0
        %2171 = vmatprep.subr.mxu0 0.0
        %2172 = vmatpush1.msra.mxu0 0.0
        %2173 = vmatprep.subr.mxu0 0.0
        %2174 = vmatpush1.msra.mxu0 0.0
        %2175 = vmatprep.subr.mxu0 0.0
        %2176 = vmatpush1.msra.mxu0 0.0
        %2177 = vmatprep.subr.mxu0 0.0
        %2178 = vmatpush1.msra.mxu0 0.0
        %2179 = vmatprep.subr.mxu0 0.0
        %2180 = vmatpush1.msra.mxu0 0.0
        %2181 = vmatprep.subr.mxu0 0.0
        %2182 = vmatpush1.msra.mxu0 0.0
        %2183 = vmatprep.subr.mxu0 0.0
        %2184 = vmatpush1.msra.mxu0 0.0
        %2185 = vmatprep.subr.mxu0 0.0
        %2186 = vmatpush1.msra.mxu0 0.0
        %2187 = vmatprep.subr.mxu0 0.0
        %2188 = vmatpush1.msra.mxu0 0.0
        %2189 = vmatprep.subr.mxu0 0.0
        %2190 = vmatpush1.msra.mxu0 0.0
        %2191 = vmatprep.subr.mxu0 0.0
        %2192 = vmatpush1.msra.mxu0 0.0
        %2193 = vmatprep.subr.mxu0 0.0
        %2194 = vmatpush1.msra.mxu0 0.0
        %2195 = vmatprep.subr.mxu0 0.0
        %2196 = vmatpush1.msra.mxu0 0.0
        %2197 = vmatprep.subr.mxu0 0.0
        %2198 = vmatpush1.msra.mxu0 0.0
        %2199 = vmatprep.subr.mxu0 0.0
        %2200 = vmatpush1.msra.mxu0 0.0
        %2201 = vmatprep.mubr.f32.mxu0 0.0
        %2202 = vmatmul.mubr.f32.gmra.mrb[0].mxu0 %v2126
        %v2203 = vpop.f32.mrb[0].mxu0
        %v2204 = vadd.f32 0.0, %v2203
        %v2205 = vpop.f32.mrb[0].mxu0
        %2206 = vmatprep.mubr.f32.mxu0 0.0
        %2207 = vmatmul.mubr.f32.gmra.mrb[0].mxu0 %v2129
        %v2208 = vpop.f32.mrb[0].mxu0
        %v2209 = vadd.f32 0.0, %v2208
        %v2210 = vpop.f32.mrb[0].mxu0
        %2211 = vmatprep.mubr.f32.mxu0 0.0
        %2212 = vmatmul.mubr.f32.gmra.mrb[0].mxu0 %v2132
        %v2213 = vpop.f32.mrb[0].mxu0
        %v2214 = vadd.f32 0.0, %v2213
        %v2215 = vpop.f32.mrb[0].mxu0
        %2216 = vmatprep.mubr.f32.mxu0 0.0
        %2217 = vmatmul.mubr.f32.gmra.mrb[0].mxu0 %v2135
        %v2218 = vpop.f32.mrb[0].mxu0
        %v2219 = vadd.f32 0.0, %v2218
        %v2220 = vpop.f32.mrb[0].mxu0
        %2221 = vdwg.mxu0
        %v2222 = vpack.c.bf16 %v2209, %v2204
        %v2223 = vpack.c.bf16 %v2219, %v2214
        %v2224 = vlaneseq
        %v2225 = vshrl.u32 %v2224, 7
        %v2226 = vsub.s32 0, %v2225
        %v2227 = vrot.slane %v2107, %v2226
        %2229 = vrot.lane.b32.xlu0 %v2227, 96
        %v2230 = vpop.permute.xlu0 %2229
        %v2232 = vmul.f32 %v1674, %v2230
        %v2233 = vmul.f32 %v1675, %v2230
        %v2234 = vmul.f32 %v1676, %v2230
        %v2235 = vmul.f32 %v1677, %v2230
        %v2237 = vsel %vm1442, %v2232, 0
        %v2240 = vsel %vm1442, %v2233, 0
        %v2243 = vsel %vm1442, %v2234, 0
        %v2246 = vsel %vm1442, %v2235, 0
        %2248 = vmatprep.subr.mxu0 0.0
        %2249 = vmatpush1.msra.mxu0 %v2113
        %2250 = vmatprep.subr.mxu0 0.0
        %2251 = vmatpush1.msra.mxu0 %v2114
        %2252 = vmatprep.subr.mxu0 0.0
        %2253 = vmatpush1.msra.mxu0 %v2115
        %2254 = vmatprep.subr.mxu0 0.0
        %2255 = vmatpush1.msra.mxu0 %v2116
        %2256 = vmatprep.subr.mxu0 0.0
        %2257 = vmatpush1.msra.mxu0 0.0
        %2258 = vmatprep.subr.mxu0 0.0
        %2259 = vmatpush1.msra.mxu0 0.0
        %2260 = vmatprep.subr.mxu0 0.0
        %2261 = vmatpush1.msra.mxu0 0.0
        %2262 = vmatprep.subr.mxu0 0.0
        %2263 = vmatpush1.msra.mxu0 0.0
        %2264 = vmatprep.subr.mxu0 0.0
        %2265 = vmatpush1.msra.mxu0 0.0
        %2266 = vmatprep.subr.mxu0 0.0
        %2267 = vmatpush1.msra.mxu0 0.0
        %2268 = vmatprep.subr.mxu0 0.0
        %2269 = vmatpush1.msra.mxu0 0.0
        %2270 = vmatprep.subr.mxu0 0.0
        %2271 = vmatpush1.msra.mxu0 0.0
        %2272 = vmatprep.subr.mxu0 0.0
        %2273 = vmatpush1.msra.mxu0 0.0
        %2274 = vmatprep.subr.mxu0 0.0
        %2275 = vmatpush1.msra.mxu0 0.0
        %2276 = vmatprep.subr.mxu0 0.0
        %2277 = vmatpush1.msra.mxu0 0.0
        %2278 = vmatprep.subr.mxu0 0.0
        %2279 = vmatpush1.msra.mxu0 0.0
        %2280 = vmatprep.subr.mxu0 0.0
        %2281 = vmatpush1.msra.mxu0 0.0
        %2282 = vmatprep.subr.mxu0 0.0
        %2283 = vmatpush1.msra.mxu0 0.0
        %2284 = vmatprep.subr.mxu0 0.0
        %2285 = vmatpush1.msra.mxu0 0.0
        %2286 = vmatprep.subr.mxu0 0.0
        %2287 = vmatpush1.msra.mxu0 0.0
        %2288 = vmatprep.subr.mxu0 0.0
        %2289 = vmatpush1.msra.mxu0 0.0
        %2290 = vmatprep.subr.mxu0 0.0
        %2291 = vmatpush1.msra.mxu0 0.0
        %2292 = vmatprep.subr.mxu0 0.0
        %2293 = vmatpush1.msra.mxu0 0.0
        %2294 = vmatprep.subr.mxu0 0.0
        %2295 = vmatpush1.msra.mxu0 0.0
        %2296 = vmatprep.subr.mxu0 0.0
        %2297 = vmatpush1.msra.mxu0 0.0
        %2298 = vmatprep.subr.mxu0 0.0
        %2299 = vmatpush1.msra.mxu0 0.0
        %2300 = vmatprep.subr.mxu0 0.0
        %2301 = vmatpush1.msra.mxu0 0.0
        %2302 = vmatprep.subr.mxu0 0.0
        %2303 = vmatpush1.msra.mxu0 0.0
        %2304 = vmatprep.subr.mxu0 0.0
        %2305 = vmatpush1.msra.mxu0 0.0
        %2306 = vmatprep.subr.mxu0 0.0
        %2307 = vmatpush1.msra.mxu0 0.0
        %2308 = vmatprep.subr.mxu0 0.0
        %2309 = vmatpush1.msra.mxu0 0.0
        %2310 = vmatprep.subr.mxu0 0.0
        %2311 = vmatpush1.msra.mxu0 0.0
        %2312 = vmatprep.mubr.f32.mxu0 0.0
        %2313 = vmatmul.mubr.f32.gmra.mrb[0].mxu0 %v2237
        %v2314 = vpop.f32.mrb[0].mxu0
        %v2315 = vadd.f32 0.0, %v2314
        %v2316 = vpop.f32.mrb[0].mxu0
        %2317 = vmatprep.mubr.f32.mxu0 0.0
        %2318 = vmatmul.mubr.f32.gmra.mrb[0].mxu0 %v2240
        %v2319 = vpop.f32.mrb[0].mxu0
        %v2320 = vadd.f32 0.0, %v2319
        %v2321 = vpop.f32.mrb[0].mxu0
        %2322 = vmatprep.mubr.f32.mxu0 0.0
        %2323 = vmatmul.mubr.f32.gmra.mrb[0].mxu0 %v2243
        %v2324 = vpop.f32.mrb[0].mxu0
        %v2325 = vadd.f32 0.0, %v2324
        %v2326 = vpop.f32.mrb[0].mxu0
        %2327 = vmatprep.mubr.f32.mxu0 0.0
        %2328 = vmatmul.mubr.f32.gmra.mrb[0].mxu0 %v2246
        %v2329 = vpop.f32.mrb[0].mxu0
        %v2330 = vadd.f32 0.0, %v2329
        %v2331 = vpop.f32.mrb[0].mxu0
        %2332 = vdwg.mxu0
        %v2333 = vpack.c.bf16 %v2320, %v2315
        %v2334 = vpack.c.bf16 %v2330, %v2325
        %v2335 = vlaneseq
        %v2336 = vshrl.u32 %v2335, 7
        %v2337 = vsub.s32 0, %v2336
        %v2338 = vrot.slane %v2112, %v2337
        %2340 = vrot.lane.b32.xlu0 %v2338, 64
        %v2341 = vpop.permute.xlu0 %2340
        %v2343 = vmul.f32 %v1658, %v2341
        %v2344 = vmul.f32 %v1659, %v2341
        %v2345 = vmul.f32 %v1660, %v2341
        %v2346 = vmul.f32 %v1661, %v2341
        %v2348 = vsel %vm1442, %v2343, 0
        %v2351 = vsel %vm1442, %v2344, 0
        %v2354 = vsel %vm1442, %v2345, 0
        %v2357 = vsel %vm1442, %v2346, 0
        %2359 = vmatprep.subr.mxu0 0.0
        %2360 = vmatpush1.msra.mxu0 %v2113
        %2361 = vmatprep.subr.mxu0 0.0
        %2362 = vmatpush1.msra.mxu0 %v2114
        %2363 = vmatprep.subr.mxu0 0.0
        %2364 = vmatpush1.msra.mxu0 %v2115
        %2365 = vmatprep.subr.mxu0 0.0
        %2366 = vmatpush1.msra.mxu0 %v2116
        %2367 = vmatprep.subr.mxu0 0.0
        %2368 = vmatpush1.msra.mxu0 0.0
        %2369 = vmatprep.subr.mxu0 0.0
        %2370 = vmatpush1.msra.mxu0 0.0
        %2371 = vmatprep.subr.mxu0 0.0
        %2372 = vmatpush1.msra.mxu0 0.0
        %2373 = vmatprep.subr.mxu0 0.0
        %2374 = vmatpush1.msra.mxu0 0.0
        %2375 = vmatprep.subr.mxu0 0.0
        %2376 = vmatpush1.msra.mxu0 0.0
        %2377 = vmatprep.subr.mxu0 0.0
        %2378 = vmatpush1.msra.mxu0 0.0
        %2379 = vmatprep.subr.mxu0 0.0
        %2380 = vmatpush1.msra.mxu0 0.0
        %2381 = vmatprep.subr.mxu0 0.0
        %2382 = vmatpush1.msra.mxu0 0.0
        %2383 = vmatprep.subr.mxu0 0.0
        %2384 = vmatpush1.msra.mxu0 0.0
        %2385 = vmatprep.subr.mxu0 0.0
        %2386 = vmatpush1.msra.mxu0 0.0
        %2387 = vmatprep.subr.mxu0 0.0
        %2388 = vmatpush1.msra.mxu0 0.0
        %2389 = vmatprep.subr.mxu0 0.0
        %2390 = vmatpush1.msra.mxu0 0.0
        %2391 = vmatprep.subr.mxu0 0.0
        %2392 = vmatpush1.msra.mxu0 0.0
        %2393 = vmatprep.subr.mxu0 0.0
        %2394 = vmatpush1.msra.mxu0 0.0
        %2395 = vmatprep.subr.mxu0 0.0
        %2396 = vmatpush1.msra.mxu0 0.0
        %2397 = vmatprep.subr.mxu0 0.0
        %2398 = vmatpush1.msra.mxu0 0.0
        %2399 = vmatprep.subr.mxu0 0.0
        %2400 = vmatpush1.msra.mxu0 0.0
        %2401 = vmatprep.subr.mxu0 0.0
        %2402 = vmatpush1.msra.mxu0 0.0
        %2403 = vmatprep.subr.mxu0 0.0
        %2404 = vmatpush1.msra.mxu0 0.0
        %2405 = vmatprep.subr.mxu0 0.0
        %2406 = vmatpush1.msra.mxu0 0.0
        %2407 = vmatprep.subr.mxu0 0.0
        %2408 = vmatpush1.msra.mxu0 0.0
        %2409 = vmatprep.subr.mxu0 0.0
        %2410 = vmatpush1.msra.mxu0 0.0
        %2411 = vmatprep.subr.mxu0 0.0
        %2412 = vmatpush1.msra.mxu0 0.0
        %2413 = vmatprep.subr.mxu0 0.0
        %2414 = vmatpush1.msra.mxu0 0.0
        %2415 = vmatprep.subr.mxu0 0.0
        %2416 = vmatpush1.msra.mxu0 0.0
        %2417 = vmatprep.subr.mxu0 0.0
        %2418 = vmatpush1.msra.mxu0 0.0
        %2419 = vmatprep.subr.mxu0 0.0
        %2420 = vmatpush1.msra.mxu0 0.0
        %2421 = vmatprep.subr.mxu0 0.0
        %2422 = vmatpush1.msra.mxu0 0.0
        %2423 = vmatprep.mubr.f32.mxu0 0.0
        %2424 = vmatmul.mubr.f32.gmra.mrb[0].mxu0 %v2348
        %v2425 = vpop.f32.mrb[0].mxu0
        %v2426 = vadd.f32 0.0, %v2425
        %v2427 = vpop.f32.mrb[0].mxu0
        %2428 = vmatprep.mubr.f32.mxu0 0.0
        %2429 = vmatmul.mubr.f32.gmra.mrb[0].mxu0 %v2351
        %v2430 = vpop.f32.mrb[0].mxu0
        %v2431 = vadd.f32 0.0, %v2430
        %v2432 = vpop.f32.mrb[0].mxu0
        %2433 = vmatprep.mubr.f32.mxu0 0.0
        %2434 = vmatmul.mubr.f32.gmra.mrb[0].mxu0 %v2354
        %v2435 = vpop.f32.mrb[0].mxu0
        %v2436 = vadd.f32 0.0, %v2435
        %v2437 = vpop.f32.mrb[0].mxu0
        %2438 = vmatprep.mubr.f32.mxu0 0.0
        %2439 = vmatmul.mubr.f32.gmra.mrb[0].mxu0 %v2357
        %v2440 = vpop.f32.mrb[0].mxu0
        %v2441 = vadd.f32 0.0, %v2440
        %v2442 = vpop.f32.mrb[0].mxu0
        %2443 = vdwg.mxu0
        %v2444 = vpack.c.bf16 %v2431, %v2426
        %v2445 = vpack.c.bf16 %v2441, %v2436
        %v2446 = vmul.f32 %v2101, %v1898
        %v2448 = vlaneseq
        %v2449 = vshrl.u32 %v2448, 7
        %v2450 = vsub.s32 0, %v2449
        %v2451 = vrot.slane %v1900, %v2450
        %2452 = vrot.lane.b32.xlu0 %v2451, 32
        %v2453 = vpop.permute.xlu0 %2452
        %v2455 = vmul.f32 %v2107, %v2453
        %2457 = vrot.lane.b32.xlu0 %v2455, 96
        %v2458 = vpop.permute.xlu0 %2457
        %v2460 = vadd.f32 %v2446, %v2458
        %v2461 = vld [vmem:[%s13] sm:$0x1]
        %v2463 = vsel %vm1442, %v2460, 0
        %2465 = vmatprep.subr.mxu0 0.0
        %2466 = vmatpush1.msra.mxu0 %v2113
        %2467 = vmatprep.subr.mxu0 0.0
        %2468 = vmatpush1.msra.mxu0 %v2114
        %2469 = vmatprep.subr.mxu0 0.0
        %2470 = vmatpush1.msra.mxu0 %v2115
        %2471 = vmatprep.subr.mxu0 0.0
        %2472 = vmatpush1.msra.mxu0 %v2116
        %2473 = vmatprep.subr.mxu0 0.0
        %2474 = vmatpush1.msra.mxu0 0.0
        %2475 = vmatprep.subr.mxu0 0.0
        %2476 = vmatpush1.msra.mxu0 0.0
        %2477 = vmatprep.subr.mxu0 0.0
        %2478 = vmatpush1.msra.mxu0 0.0
        %2479 = vmatprep.subr.mxu0 0.0
        %2480 = vmatpush1.msra.mxu0 0.0
        %2481 = vmatprep.subr.mxu0 0.0
        %2482 = vmatpush1.msra.mxu0 0.0
        %2483 = vmatprep.subr.mxu0 0.0
        %2484 = vmatpush1.msra.mxu0 0.0
        %2485 = vmatprep.subr.mxu0 0.0
        %2486 = vmatpush1.msra.mxu0 0.0
        %2487 = vmatprep.subr.mxu0 0.0
        %2488 = vmatpush1.msra.mxu0 0.0
        %2489 = vmatprep.subr.mxu0 0.0
        %2490 = vmatpush1.msra.mxu0 0.0
        %2491 = vmatprep.subr.mxu0 0.0
        %2492 = vmatpush1.msra.mxu0 0.0
        %2493 = vmatprep.subr.mxu0 0.0
        %2494 = vmatpush1.msra.mxu0 0.0
        %2495 = vmatprep.subr.mxu0 0.0
        %2496 = vmatpush1.msra.mxu0 0.0
        %2497 = vmatprep.subr.mxu0 0.0
        %2498 = vmatpush1.msra.mxu0 0.0
        %2499 = vmatprep.subr.mxu0 0.0
        %2500 = vmatpush1.msra.mxu0 0.0
        %2501 = vmatprep.subr.mxu0 0.0
        %2502 = vmatpush1.msra.mxu0 0.0
        %2503 = vmatprep.subr.mxu0 0.0
        %2504 = vmatpush1.msra.mxu0 0.0
        %2505 = vmatprep.subr.mxu0 0.0
        %2506 = vmatpush1.msra.mxu0 0.0
        %2507 = vmatprep.subr.mxu0 0.0
        %2508 = vmatpush1.msra.mxu0 0.0
        %2509 = vmatprep.subr.mxu0 0.0
        %2510 = vmatpush1.msra.mxu0 0.0
        %2511 = vmatprep.subr.mxu0 0.0
        %2512 = vmatpush1.msra.mxu0 0.0
        %2513 = vmatprep.subr.mxu0 0.0
        %2514 = vmatpush1.msra.mxu0 0.0
        %2515 = vmatprep.subr.mxu0 0.0
        %2516 = vmatpush1.msra.mxu0 0.0
        %2517 = vmatprep.subr.mxu0 0.0
        %2518 = vmatpush1.msra.mxu0 0.0
        %2519 = vmatprep.subr.mxu0 0.0
        %2520 = vmatpush1.msra.mxu0 0.0
        %2521 = vmatprep.subr.mxu0 0.0
        %2522 = vmatpush1.msra.mxu0 0.0
        %2523 = vmatprep.subr.mxu0 0.0
        %2524 = vmatpush1.msra.mxu0 0.0
        %2525 = vmatprep.subr.mxu0 0.0
        %2526 = vmatpush1.msra.mxu0 0.0
        %2527 = vmatprep.subr.mxu0 0.0
        %2528 = vmatpush1.msra.mxu0 0.0
        %2529 = vmatprep.mubr.f32.mxu0 0.0
        %2530 = vmatmul.mubr.f32.gmra.mrb[0].mxu0 %v2463
        %v2531 = vpop.f32.mrb[0].mxu0
        %v2532 = vadd.f32 %v2461, %v2531
        %v2533 = vpop.f32.mrb[0].mxu0
        %2534 = vdwg.mxu0
        %v2535 = vpack.c.bf16 %v1285, %v1284
        %v2536 = vpack.c.bf16 %v1287, %v1286
        %v2537 = vpack.c.bf16 %v1289, %v1288
        %v2538 = vpack.c.bf16 %v1291, %v1290
        %v2539 = vpack.c.bf16 %v1293, %v1292
        %v2540 = vpack.c.bf16 %v1295, %v1294
        %v2541 = vpack.c.bf16 %v1297, %v1296
        %v2542 = vpack.c.bf16 %v1299, %v1298
        %v2543 = vpack.c.bf16 %v1301, %v1300
        %v2544 = vpack.c.bf16 %v1303, %v1302
        %v2545 = vpack.c.bf16 %v1305, %v1304
        %v2546 = vpack.c.bf16 %v1307, %v1306
        %v2547 = vpack.c.bf16 %v1309, %v1308
        %v2548 = vpack.c.bf16 %v1311, %v1310
        %v2549 = vpack.c.bf16 %v1313, %v1312
        %v2550 = vpack.c.bf16 %v1315, %v1314
        %v2552 = vsel %vm1442, %v2535, 0
        %v2555 = vsel %vm1442, %v2536, 0
        %v2558 = vsel %vm1442, %v2537, 0
        %v2561 = vsel %vm1442, %v2538, 0
        %v2564 = vsel %vm1442, %v2539, 0
        %v2567 = vsel %vm1442, %v2540, 0
        %v2570 = vsel %vm1442, %v2541, 0
        %v2573 = vsel %vm1442, %v2542, 0
        %v2576 = vsel %vm1442, %v2543, 0
        %v2579 = vsel %vm1442, %v2544, 0
        %v2582 = vsel %vm1442, %v2545, 0
        %v2585 = vsel %vm1442, %v2546, 0
        %v2588 = vsel %vm1442, %v2547, 0
        %v2591 = vsel %vm1442, %v2548, 0
        %v2594 = vsel %vm1442, %v2549, 0
        %v2597 = vsel %vm1442, %v2550, 0
        %2599 = vmatprep.subr.bf16.mxu0 0
        %2600 = vmatpush1.bf16.msra.mxu0 %v2222
        %2601 = vmatprep.subr.bf16.mxu0 0
        %2602 = vmatpush1.bf16.msra.mxu0 %v2223
        %2603 = vmatprep.subr.bf16.mxu0 0
        %2604 = vmatpush1.bf16.msra.mxu0 0
        %2605 = vmatprep.subr.bf16.mxu0 0
        %2606 = vmatpush1.bf16.msra.mxu0 0
        %2607 = vmatprep.subr.bf16.mxu0 0
        %2608 = vmatpush1.bf16.msra.mxu0 0
        %2609 = vmatprep.subr.bf16.mxu0 0
        %2610 = vmatpush1.bf16.msra.mxu0 0
        %2611 = vmatprep.subr.bf16.mxu0 0
        %2612 = vmatpush1.bf16.msra.mxu0 0
        %2613 = vmatprep.subr.bf16.mxu0 0
        %2614 = vmatpush1.bf16.msra.mxu0 0
        %2615 = vmatprep.subr.bf16.mxu0 0
        %2616 = vmatpush1.bf16.msra.mxu0 0
        %2617 = vmatprep.subr.bf16.mxu0 0
        %2618 = vmatpush1.bf16.msra.mxu0 0
        %2619 = vmatprep.subr.bf16.mxu0 0
        %2620 = vmatpush1.bf16.msra.mxu0 0
        %2621 = vmatprep.subr.bf16.mxu0 0
        %2622 = vmatpush1.bf16.msra.mxu0 0
        %2623 = vmatprep.subr.bf16.mxu0 0
        %2624 = vmatpush1.bf16.msra.mxu0 0
        %2625 = vmatprep.subr.bf16.mxu0 0
        %2626 = vmatpush1.bf16.msra.mxu0 0
        %2627 = vmatprep.subr.bf16.mxu0 0
        %2628 = vmatpush1.bf16.msra.mxu0 0
        %2629 = vmatprep.subr.bf16.mxu0 0
        %2630 = vmatpush1.bf16.msra.mxu0 0
        %2631 = vmatprep.mubr.bf16.mxu0 0
        %2632 = vmatmul.mubr.bf16.gmra.mrb[0].mxu0 %v2552
        %v2633 = vpop.f32.mrb[0].mxu0
        %v2634 = vadd.f32 0.0, %v2633
        %v2635 = vpop.f32.mrb[0].mxu0
        %v2636 = vpop.f32.mrb[0].mxu0
        %v2637 = vadd.f32 0.0, %v2636
        %v2638 = vpop.f32.mrb[0].mxu0
        %2639 = vmatprep.mubr.bf16.mxu0 0
        %2640 = vmatmul.mubr.bf16.gmra.mrb[0].mxu0 %v2555
        %v2641 = vpop.f32.mrb[0].mxu0
        %v2642 = vadd.f32 0.0, %v2641
        %v2643 = vpop.f32.mrb[0].mxu0
        %v2644 = vpop.f32.mrb[0].mxu0
        %v2645 = vadd.f32 0.0, %v2644
        %v2646 = vpop.f32.mrb[0].mxu0
        %2647 = vmatprep.mubr.bf16.mxu0 0
        %2648 = vmatmul.mubr.bf16.gmra.mrb[0].mxu0 %v2558
        %v2649 = vpop.f32.mrb[0].mxu0
        %v2650 = vadd.f32 0.0, %v2649
        %v2651 = vpop.f32.mrb[0].mxu0
        %v2652 = vpop.f32.mrb[0].mxu0
        %v2653 = vadd.f32 0.0, %v2652
        %v2654 = vpop.f32.mrb[0].mxu0
        %2655 = vmatprep.mubr.bf16.mxu0 0
        %2656 = vmatmul.mubr.bf16.gmra.mrb[0].mxu0 %v2561
        %v2657 = vpop.f32.mrb[0].mxu0
        %v2658 = vadd.f32 0.0, %v2657
        %v2659 = vpop.f32.mrb[0].mxu0
        %v2660 = vpop.f32.mrb[0].mxu0
        %v2661 = vadd.f32 0.0, %v2660
        %v2662 = vpop.f32.mrb[0].mxu0
        %2663 = vmatprep.mubr.bf16.mxu0 0
        %2664 = vmatmul.mubr.bf16.gmra.mrb[0].mxu0 %v2564
        %v2665 = vpop.f32.mrb[0].mxu0
        %v2666 = vadd.f32 0.0, %v2665
        %v2667 = vpop.f32.mrb[0].mxu0
        %v2668 = vpop.f32.mrb[0].mxu0
        %v2669 = vadd.f32 0.0, %v2668
        %v2670 = vpop.f32.mrb[0].mxu0
        %2671 = vmatprep.mubr.bf16.mxu0 0
        %2672 = vmatmul.mubr.bf16.gmra.mrb[0].mxu0 %v2567
        %v2673 = vpop.f32.mrb[0].mxu0
        %v2674 = vadd.f32 0.0, %v2673
        %v2675 = vpop.f32.mrb[0].mxu0
        %v2676 = vpop.f32.mrb[0].mxu0
        %v2677 = vadd.f32 0.0, %v2676
        %v2678 = vpop.f32.mrb[0].mxu0
        %2679 = vmatprep.mubr.bf16.mxu0 0
        %2680 = vmatmul.mubr.bf16.gmra.mrb[0].mxu0 %v2570
        %v2681 = vpop.f32.mrb[0].mxu0
        %v2682 = vadd.f32 0.0, %v2681
        %v2683 = vpop.f32.mrb[0].mxu0
        %v2684 = vpop.f32.mrb[0].mxu0
        %v2685 = vadd.f32 0.0, %v2684
        %v2686 = vpop.f32.mrb[0].mxu0
        %2687 = vmatprep.mubr.bf16.mxu0 0
        %2688 = vmatmul.mubr.bf16.gmra.mrb[0].mxu0 %v2573
        %v2689 = vpop.f32.mrb[0].mxu0
        %v2690 = vadd.f32 0.0, %v2689
        %v2691 = vpop.f32.mrb[0].mxu0
        %v2692 = vpop.f32.mrb[0].mxu0
        %v2693 = vadd.f32 0.0, %v2692
        %v2694 = vpop.f32.mrb[0].mxu0
        %2695 = vmatprep.mubr.bf16.mxu0 0
        %2696 = vmatmul.mubr.bf16.gmra.mrb[0].mxu0 %v2576
        %v2697 = vpop.f32.mrb[0].mxu0
        %v2698 = vadd.f32 0.0, %v2697
        %v2699 = vpop.f32.mrb[0].mxu0
        %v2700 = vpop.f32.mrb[0].mxu0
        %v2701 = vadd.f32 0.0, %v2700
        %v2702 = vpop.f32.mrb[0].mxu0
        %2703 = vmatprep.mubr.bf16.mxu0 0
        %2704 = vmatmul.mubr.bf16.gmra.mrb[0].mxu0 %v2579
        %v2705 = vpop.f32.mrb[0].mxu0
        %v2706 = vadd.f32 0.0, %v2705
        %v2707 = vpop.f32.mrb[0].mxu0
        %v2708 = vpop.f32.mrb[0].mxu0
        %v2709 = vadd.f32 0.0, %v2708
        %v2710 = vpop.f32.mrb[0].mxu0
        %2711 = vmatprep.mubr.bf16.mxu0 0
        %2712 = vmatmul.mubr.bf16.gmra.mrb[0].mxu0 %v2582
        %v2713 = vpop.f32.mrb[0].mxu0
        %v2714 = vadd.f32 0.0, %v2713
        %v2715 = vpop.f32.mrb[0].mxu0
        %v2716 = vpop.f32.mrb[0].mxu0
        %v2717 = vadd.f32 0.0, %v2716
        %v2718 = vpop.f32.mrb[0].mxu0
        %2719 = vmatprep.mubr.bf16.mxu0 0
        %2720 = vmatmul.mubr.bf16.gmra.mrb[0].mxu0 %v2585
        %v2721 = vpop.f32.mrb[0].mxu0
        %v2722 = vadd.f32 0.0, %v2721
        %v2723 = vpop.f32.mrb[0].mxu0
        %v2724 = vpop.f32.mrb[0].mxu0
        %v2725 = vadd.f32 0.0, %v2724
        %v2726 = vpop.f32.mrb[0].mxu0
        %2727 = vmatprep.mubr.bf16.mxu0 0
        %2728 = vmatmul.mubr.bf16.gmra.mrb[0].mxu0 %v2588
        %v2729 = vpop.f32.mrb[0].mxu0
        %v2730 = vadd.f32 0.0, %v2729
        %v2731 = vpop.f32.mrb[0].mxu0
        %v2732 = vpop.f32.mrb[0].mxu0
        %v2733 = vadd.f32 0.0, %v2732
        %v2734 = vpop.f32.mrb[0].mxu0
        %2735 = vmatprep.mubr.bf16.mxu0 0
        %2736 = vmatmul.mubr.bf16.gmra.mrb[0].mxu0 %v2591
        %v2737 = vpop.f32.mrb[0].mxu0
        %v2738 = vadd.f32 0.0, %v2737
        %v2739 = vpop.f32.mrb[0].mxu0
        %v2740 = vpop.f32.mrb[0].mxu0
        %v2741 = vadd.f32 0.0, %v2740
        %v2742 = vpop.f32.mrb[0].mxu0
        %2743 = vmatprep.mubr.bf16.mxu0 0
        %2744 = vmatmul.mubr.bf16.gmra.mrb[0].mxu0 %v2594
        %v2745 = vpop.f32.mrb[0].mxu0
        %v2746 = vadd.f32 0.0, %v2745
        %v2747 = vpop.f32.mrb[0].mxu0
        %v2748 = vpop.f32.mrb[0].mxu0
        %v2749 = vadd.f32 0.0, %v2748
        %v2750 = vpop.f32.mrb[0].mxu0
        %2751 = vmatprep.mubr.bf16.mxu0 0
        %2752 = vmatmul.mubr.bf16.gmra.mrb[0].mxu0 %v2597
        %v2753 = vpop.f32.mrb[0].mxu0
        %v2754 = vadd.f32 0.0, %v2753
        %v2755 = vpop.f32.mrb[0].mxu0
        %v2756 = vpop.f32.mrb[0].mxu0
        %v2757 = vadd.f32 0.0, %v2756
        %v2758 = vpop.f32.mrb[0].mxu0
        %2759 = vdwg.mxu0
        %v2792 = vunpack.c.l.b16 %v467
        %v2793 = vunpack.c.l.b16 %v468
        %v2794 = vunpack.c.l.b16 %v469
        %v2795 = vunpack.c.l.b16 %v470
        %v2796 = vunpack.c.l.b16 %v471
        %v2797 = vunpack.c.l.b16 %v472
        %v2798 = vunpack.c.l.b16 %v473
        %v2799 = vunpack.c.l.b16 %v474
        %v2800 = vunpack.c.l.b16 %v475
        %v2801 = vunpack.c.l.b16 %v476
        %v2802 = vunpack.c.l.b16 %v477
        %v2803 = vunpack.c.l.b16 %v478
        %v2804 = vunpack.c.l.b16 %v479
        %v2805 = vunpack.c.l.b16 %v480
        %v2806 = vunpack.c.l.b16 %v481
        %v2807 = vunpack.c.l.b16 %v482
        %v2808 = vunpack.c.l.b16 %v483
        %v2809 = vunpack.c.l.b16 %v484
        %v2810 = vunpack.c.l.b16 %v485
        %v2811 = vunpack.c.l.b16 %v486
        %v2812 = vunpack.c.l.b16 %v487
        %v2813 = vunpack.c.l.b16 %v488
        %v2814 = vunpack.c.l.b16 %v489
        %v2815 = vunpack.c.l.b16 %v490
        %v2816 = vunpack.c.l.b16 %v491
        %v2817 = vunpack.c.l.b16 %v492
        %v2818 = vunpack.c.l.b16 %v493
        %v2819 = vunpack.c.l.b16 %v494
        %v2820 = vunpack.c.l.b16 %v495
        %v2821 = vunpack.c.l.b16 %v496
        %v2822 = vunpack.c.l.b16 %v497
        %v2823 = vunpack.c.l.b16 %v498
        %v2824 = vpack.c.b16 %v2793, %v2792
        %v2825 = vpack.c.b16 %v2795, %v2794
        %v2826 = vpack.c.b16 %v2797, %v2796
        %v2827 = vpack.c.b16 %v2799, %v2798
        %v2828 = vpack.c.b16 %v2801, %v2800
        %v2829 = vpack.c.b16 %v2803, %v2802
        %v2830 = vpack.c.b16 %v2805, %v2804
        %v2831 = vpack.c.b16 %v2807, %v2806
        %v2832 = vpack.c.b16 %v2809, %v2808
        %v2833 = vpack.c.b16 %v2811, %v2810
        %v2834 = vpack.c.b16 %v2813, %v2812
        %v2835 = vpack.c.b16 %v2815, %v2814
        %v2836 = vpack.c.b16 %v2817, %v2816
        %v2837 = vpack.c.b16 %v2819, %v2818
        %v2838 = vpack.c.b16 %v2821, %v2820
        %v2839 = vpack.c.b16 %v2823, %v2822
        %v2841 = vsel %vm1442, %v2824, 0
        %v2844 = vsel %vm1442, %v2825, 0
        %v2847 = vsel %vm1442, %v2826, 0
        %v2850 = vsel %vm1442, %v2827, 0
        %v2853 = vsel %vm1442, %v2828, 0
        %v2856 = vsel %vm1442, %v2829, 0
        %v2859 = vsel %vm1442, %v2830, 0
        %v2862 = vsel %vm1442, %v2831, 0
        %v2865 = vsel %vm1442, %v2832, 0
        %v2868 = vsel %vm1442, %v2833, 0
        %v2871 = vsel %vm1442, %v2834, 0
        %v2874 = vsel %vm1442, %v2835, 0
        %v2877 = vsel %vm1442, %v2836, 0
        %v2880 = vsel %vm1442, %v2837, 0
        %v2883 = vsel %vm1442, %v2838, 0
        %v2886 = vsel %vm1442, %v2839, 0
        %2888 = vmatprep.subr.bf16.mxu0 0
        %2889 = vmatpush1.bf16.msra.mxu0 %v2444
        %2890 = vmatprep.subr.bf16.mxu0 0
        %2891 = vmatpush1.bf16.msra.mxu0 %v2445
        %2892 = vmatprep.subr.bf16.mxu0 0
        %2893 = vmatpush1.bf16.msra.mxu0 0
        %2894 = vmatprep.subr.bf16.mxu0 0
        %2895 = vmatpush1.bf16.msra.mxu0 0
        %2896 = vmatprep.subr.bf16.mxu0 0
        %2897 = vmatpush1.bf16.msra.mxu0 0
        %2898 = vmatprep.subr.bf16.mxu0 0
        %2899 = vmatpush1.bf16.msra.mxu0 0
        %2900 = vmatprep.subr.bf16.mxu0 0
        %2901 = vmatpush1.bf16.msra.mxu0 0
        %2902 = vmatprep.subr.bf16.mxu0 0
        %2903 = vmatpush1.bf16.msra.mxu0 0
        %2904 = vmatprep.subr.bf16.mxu0 0
        %2905 = vmatpush1.bf16.msra.mxu0 0
        %2906 = vmatprep.subr.bf16.mxu0 0
        %2907 = vmatpush1.bf16.msra.mxu0 0
        %2908 = vmatprep.subr.bf16.mxu0 0
        %2909 = vmatpush1.bf16.msra.mxu0 0
        %2910 = vmatprep.subr.bf16.mxu0 0
        %2911 = vmatpush1.bf16.msra.mxu0 0
        %2912 = vmatprep.subr.bf16.mxu0 0
        %2913 = vmatpush1.bf16.msra.mxu0 0
        %2914 = vmatprep.subr.bf16.mxu0 0
        %2915 = vmatpush1.bf16.msra.mxu0 0
        %2916 = vmatprep.subr.bf16.mxu0 0
        %2917 = vmatpush1.bf16.msra.mxu0 0
        %2918 = vmatprep.subr.bf16.mxu0 0
        %2919 = vmatpush1.bf16.msra.mxu0 0
        %2920 = vmatprep.mubr.bf16.mxu0 0
        %2921 = vmatmul.mubr.bf16.gmra.mrb[0].mxu0 %v2841
        %v2922 = vpop.f32.mrb[0].mxu0
        %v2923 = vadd.f32 %v2634, %v2922
        %v2924 = vpop.f32.mrb[0].mxu0
        %v2925 = vpop.f32.mrb[0].mxu0
        %v2926 = vadd.f32 %v2637, %v2925
        %v2927 = vpop.f32.mrb[0].mxu0
        %2928 = vmatprep.mubr.bf16.mxu0 0
        %2929 = vmatmul.mubr.bf16.gmra.mrb[0].mxu0 %v2844
        %v2930 = vpop.f32.mrb[0].mxu0
        %v2931 = vadd.f32 %v2642, %v2930
        %v2932 = vpop.f32.mrb[0].mxu0
        %v2933 = vpop.f32.mrb[0].mxu0
        %v2934 = vadd.f32 %v2645, %v2933
        %v2935 = vpop.f32.mrb[0].mxu0
        %2936 = vmatprep.mubr.bf16.mxu0 0
        %2937 = vmatmul.mubr.bf16.gmra.mrb[0].mxu0 %v2847
        %v2938 = vpop.f32.mrb[0].mxu0
        %v2939 = vadd.f32 %v2650, %v2938
        %v2940 = vpop.f32.mrb[0].mxu0
        %v2941 = vpop.f32.mrb[0].mxu0
        %v2942 = vadd.f32 %v2653, %v2941
        %v2943 = vpop.f32.mrb[0].mxu0
        %2944 = vmatprep.mubr.bf16.mxu0 0
        %2945 = vmatmul.mubr.bf16.gmra.mrb[0].mxu0 %v2850
        %v2946 = vpop.f32.mrb[0].mxu0
        %v2947 = vadd.f32 %v2658, %v2946
        %v2948 = vpop.f32.mrb[0].mxu0
        %v2949 = vpop.f32.mrb[0].mxu0
        %v2950 = vadd.f32 %v2661, %v2949
        %v2951 = vpop.f32.mrb[0].mxu0
        %2952 = vmatprep.mubr.bf16.mxu0 0
        %2953 = vmatmul.mubr.bf16.gmra.mrb[0].mxu0 %v2853
        %v2954 = vpop.f32.mrb[0].mxu0
        %v2955 = vadd.f32 %v2666, %v2954
        %v2956 = vpop.f32.mrb[0].mxu0
        %v2957 = vpop.f32.mrb[0].mxu0
        %v2958 = vadd.f32 %v2669, %v2957
        %v2959 = vpop.f32.mrb[0].mxu0
        %2960 = vmatprep.mubr.bf16.mxu0 0
        %2961 = vmatmul.mubr.bf16.gmra.mrb[0].mxu0 %v2856
        %v2962 = vpop.f32.mrb[0].mxu0
        %v2963 = vadd.f32 %v2674, %v2962
        %v2964 = vpop.f32.mrb[0].mxu0
        %v2965 = vpop.f32.mrb[0].mxu0
        %v2966 = vadd.f32 %v2677, %v2965
        %v2967 = vpop.f32.mrb[0].mxu0
        %2968 = vmatprep.mubr.bf16.mxu0 0
        %2969 = vmatmul.mubr.bf16.gmra.mrb[0].mxu0 %v2859
        %v2970 = vpop.f32.mrb[0].mxu0
        %v2971 = vadd.f32 %v2682, %v2970
        %v2972 = vpop.f32.mrb[0].mxu0
        %v2973 = vpop.f32.mrb[0].mxu0
        %v2974 = vadd.f32 %v2685, %v2973
        %v2975 = vpop.f32.mrb[0].mxu0
        %2976 = vmatprep.mubr.bf16.mxu0 0
        %2977 = vmatmul.mubr.bf16.gmra.mrb[0].mxu0 %v2862
        %v2978 = vpop.f32.mrb[0].mxu0
        %v2979 = vadd.f32 %v2690, %v2978
        %v2980 = vpop.f32.mrb[0].mxu0
        %v2981 = vpop.f32.mrb[0].mxu0
        %v2982 = vadd.f32 %v2693, %v2981
        %v2983 = vpop.f32.mrb[0].mxu0
        %2984 = vmatprep.mubr.bf16.mxu0 0
        %2985 = vmatmul.mubr.bf16.gmra.mrb[0].mxu0 %v2865
        %v2986 = vpop.f32.mrb[0].mxu0
        %v2987 = vadd.f32 %v2698, %v2986
        %v2988 = vpop.f32.mrb[0].mxu0
        %v2989 = vpop.f32.mrb[0].mxu0
        %v2990 = vadd.f32 %v2701, %v2989
        %v2991 = vpop.f32.mrb[0].mxu0
        %2992 = vmatprep.mubr.bf16.mxu0 0
        %2993 = vmatmul.mubr.bf16.gmra.mrb[0].mxu0 %v2868
        %v2994 = vpop.f32.mrb[0].mxu0
        %v2995 = vadd.f32 %v2706, %v2994
        %v2996 = vpop.f32.mrb[0].mxu0
        %v2997 = vpop.f32.mrb[0].mxu0
        %v2998 = vadd.f32 %v2709, %v2997
        %v2999 = vpop.f32.mrb[0].mxu0
        %3000 = vmatprep.mubr.bf16.mxu0 0
        %3001 = vmatmul.mubr.bf16.gmra.mrb[0].mxu0 %v2871
        %v3002 = vpop.f32.mrb[0].mxu0
        %v3003 = vadd.f32 %v2714, %v3002
        %v3004 = vpop.f32.mrb[0].mxu0
        %v3005 = vpop.f32.mrb[0].mxu0
        %v3006 = vadd.f32 %v2717, %v3005
        %v3007 = vpop.f32.mrb[0].mxu0
        %3008 = vmatprep.mubr.bf16.mxu0 0
        %3009 = vmatmul.mubr.bf16.gmra.mrb[0].mxu0 %v2874
        %v3010 = vpop.f32.mrb[0].mxu0
        %v3011 = vadd.f32 %v2722, %v3010
        %v3012 = vpop.f32.mrb[0].mxu0
        %v3013 = vpop.f32.mrb[0].mxu0
        %v3014 = vadd.f32 %v2725, %v3013
        %v3015 = vpop.f32.mrb[0].mxu0
        %3016 = vmatprep.mubr.bf16.mxu0 0
        %3017 = vmatmul.mubr.bf16.gmra.mrb[0].mxu0 %v2877
        %v3018 = vpop.f32.mrb[0].mxu0
        %v3019 = vadd.f32 %v2730, %v3018
        %v3020 = vpop.f32.mrb[0].mxu0
        %v3021 = vpop.f32.mrb[0].mxu0
        %v3022 = vadd.f32 %v2733, %v3021
        %v3023 = vpop.f32.mrb[0].mxu0
        %3024 = vmatprep.mubr.bf16.mxu0 0
        %3025 = vmatmul.mubr.bf16.gmra.mrb[0].mxu0 %v2880
        %v3026 = vpop.f32.mrb[0].mxu0
        %v3027 = vadd.f32 %v2738, %v3026
        %v3028 = vpop.f32.mrb[0].mxu0
        %v3029 = vpop.f32.mrb[0].mxu0
        %v3030 = vadd.f32 %v2741, %v3029
        %v3031 = vpop.f32.mrb[0].mxu0
        %3032 = vmatprep.mubr.bf16.mxu0 0
        %3033 = vmatmul.mubr.bf16.gmra.mrb[0].mxu0 %v2883
        %v3034 = vpop.f32.mrb[0].mxu0
        %v3035 = vadd.f32 %v2746, %v3034
        %v3036 = vpop.f32.mrb[0].mxu0
        %v3037 = vpop.f32.mrb[0].mxu0
        %v3038 = vadd.f32 %v2749, %v3037
        %v3039 = vpop.f32.mrb[0].mxu0
        %3040 = vmatprep.mubr.bf16.mxu0 0
        %3041 = vmatmul.mubr.bf16.gmra.mrb[0].mxu0 %v2886
        %v3042 = vpop.f32.mrb[0].mxu0
        %v3043 = vadd.f32 %v2754, %v3042
        %v3044 = vpop.f32.mrb[0].mxu0
        %v3045 = vpop.f32.mrb[0].mxu0
        %v3046 = vadd.f32 %v2757, %v3045
        %v3047 = vpop.f32.mrb[0].mxu0
        %3048 = vdwg.mxu0
        %v3049 = vpack.c.bf16 %v1411, %v1410
        %v3050 = vpack.c.bf16 %v1413, %v1412
        %v3051 = vpack.c.bf16 %v1415, %v1414
        %v3052 = vpack.c.bf16 %v1417, %v1416
        %v3053 = vpack.c.bf16 %v1419, %v1418
        %v3054 = vpack.c.bf16 %v1421, %v1420
        %v3055 = vpack.c.bf16 %v1423, %v1422
        %v3056 = vpack.c.bf16 %v1425, %v1424
        %v3057 = vpack.c.bf16 %v1427, %v1426
        %v3058 = vpack.c.bf16 %v1429, %v1428
        %v3059 = vpack.c.bf16 %v1431, %v1430
        %v3060 = vpack.c.bf16 %v1433, %v1432
        %v3061 = vpack.c.bf16 %v1435, %v1434
        %v3062 = vpack.c.bf16 %v1437, %v1436
        %v3063 = vpack.c.bf16 %v1439, %v1438
        %v3064 = vpack.c.bf16 %v1441, %v1440
        %v3066 = vsel %vm1442, %v3049, 0
        %v3069 = vsel %vm1442, %v3050, 0
        %v3072 = vsel %vm1442, %v3051, 0
        %v3075 = vsel %vm1442, %v3052, 0
        %v3078 = vsel %vm1442, %v3053, 0
        %v3081 = vsel %vm1442, %v3054, 0
        %v3084 = vsel %vm1442, %v3055, 0
        %v3087 = vsel %vm1442, %v3056, 0
        %v3090 = vsel %vm1442, %v3057, 0
        %v3093 = vsel %vm1442, %v3058, 0
        %v3096 = vsel %vm1442, %v3059, 0
        %v3099 = vsel %vm1442, %v3060, 0
        %v3102 = vsel %vm1442, %v3061, 0
        %v3105 = vsel %vm1442, %v3062, 0
        %v3108 = vsel %vm1442, %v3063, 0
        %v3111 = vsel %vm1442, %v3064, 0
        %3113 = vmatprep.subr.bf16.mxu0 0
        %3114 = vmatpush1.bf16.msra.mxu0 %v2333
        %3115 = vmatprep.subr.bf16.mxu0 0
        %3116 = vmatpush1.bf16.msra.mxu0 %v2334
        %3117 = vmatprep.subr.bf16.mxu0 0
        %3118 = vmatpush1.bf16.msra.mxu0 0
        %3119 = vmatprep.subr.bf16.mxu0 0
        %3120 = vmatpush1.bf16.msra.mxu0 0
        %3121 = vmatprep.subr.bf16.mxu0 0
        %3122 = vmatpush1.bf16.msra.mxu0 0
        %3123 = vmatprep.subr.bf16.mxu0 0
        %3124 = vmatpush1.bf16.msra.mxu0 0
        %3125 = vmatprep.subr.bf16.mxu0 0
        %3126 = vmatpush1.bf16.msra.mxu0 0
        %3127 = vmatprep.subr.bf16.mxu0 0
        %3128 = vmatpush1.bf16.msra.mxu0 0
        %3129 = vmatprep.subr.bf16.mxu0 0
        %3130 = vmatpush1.bf16.msra.mxu0 0
        %3131 = vmatprep.subr.bf16.mxu0 0
        %3132 = vmatpush1.bf16.msra.mxu0 0
        %3133 = vmatprep.subr.bf16.mxu0 0
        %3134 = vmatpush1.bf16.msra.mxu0 0
        %3135 = vmatprep.subr.bf16.mxu0 0
        %3136 = vmatpush1.bf16.msra.mxu0 0
        %3137 = vmatprep.subr.bf16.mxu0 0
        %3138 = vmatpush1.bf16.msra.mxu0 0
        %3139 = vmatprep.subr.bf16.mxu0 0
        %3140 = vmatpush1.bf16.msra.mxu0 0
        %3141 = vmatprep.subr.bf16.mxu0 0
        %3142 = vmatpush1.bf16.msra.mxu0 0
        %3143 = vmatprep.subr.bf16.mxu0 0
        %3144 = vmatpush1.bf16.msra.mxu0 0
        %3145 = vmatprep.mubr.bf16.mxu0 0
        %3146 = vmatmul.mubr.bf16.gmra.mrb[0].mxu0 %v3066
        %v3147 = vpop.f32.mrb[0].mxu0
        %v3148 = vadd.f32 0.0, %v3147
        %v3149 = vpop.f32.mrb[0].mxu0
        %v3150 = vpop.f32.mrb[0].mxu0
        %v3151 = vadd.f32 0.0, %v3150
        %v3152 = vpop.f32.mrb[0].mxu0
        %3153 = vmatprep.mubr.bf16.mxu0 0
        %3154 = vmatmul.mubr.bf16.gmra.mrb[0].mxu0 %v3069
        %v3155 = vpop.f32.mrb[0].mxu0
        %v3156 = vadd.f32 0.0, %v3155
        %v3157 = vpop.f32.mrb[0].mxu0
        %v3158 = vpop.f32.mrb[0].mxu0
        %v3159 = vadd.f32 0.0, %v3158
        %v3160 = vpop.f32.mrb[0].mxu0
        %3161 = vmatprep.mubr.bf16.mxu0 0
        %3162 = vmatmul.mubr.bf16.gmra.mrb[0].mxu0 %v3072
        %v3163 = vpop.f32.mrb[0].mxu0
        %v3164 = vadd.f32 0.0, %v3163
        %v3165 = vpop.f32.mrb[0].mxu0
        %v3166 = vpop.f32.mrb[0].mxu0
        %v3167 = vadd.f32 0.0, %v3166
        %v3168 = vpop.f32.mrb[0].mxu0
        %3169 = vmatprep.mubr.bf16.mxu0 0
        %3170 = vmatmul.mubr.bf16.gmra.mrb[0].mxu0 %v3075
        %v3171 = vpop.f32.mrb[0].mxu0
        %v3172 = vadd.f32 0.0, %v3171
        %v3173 = vpop.f32.mrb[0].mxu0
        %v3174 = vpop.f32.mrb[0].mxu0
        %v3175 = vadd.f32 0.0, %v3174
        %v3176 = vpop.f32.mrb[0].mxu0
        %3177 = vmatprep.mubr.bf16.mxu0 0
        %3178 = vmatmul.mubr.bf16.gmra.mrb[0].mxu0 %v3078
        %v3179 = vpop.f32.mrb[0].mxu0
        %v3180 = vadd.f32 0.0, %v3179
        %v3181 = vpop.f32.mrb[0].mxu0
        %v3182 = vpop.f32.mrb[0].mxu0
        %v3183 = vadd.f32 0.0, %v3182
        %v3184 = vpop.f32.mrb[0].mxu0
        %3185 = vmatprep.mubr.bf16.mxu0 0
        %3186 = vmatmul.mubr.bf16.gmra.mrb[0].mxu0 %v3081
        %v3187 = vpop.f32.mrb[0].mxu0
        %v3188 = vadd.f32 0.0, %v3187
        %v3189 = vpop.f32.mrb[0].mxu0
        %v3190 = vpop.f32.mrb[0].mxu0
        %v3191 = vadd.f32 0.0, %v3190
        %v3192 = vpop.f32.mrb[0].mxu0
        %3193 = vmatprep.mubr.bf16.mxu0 0
        %3194 = vmatmul.mubr.bf16.gmra.mrb[0].mxu0 %v3084
        %v3195 = vpop.f32.mrb[0].mxu0
        %v3196 = vadd.f32 0.0, %v3195
        %v3197 = vpop.f32.mrb[0].mxu0
        %v3198 = vpop.f32.mrb[0].mxu0
        %v3199 = vadd.f32 0.0, %v3198
        %v3200 = vpop.f32.mrb[0].mxu0
        %3201 = vmatprep.mubr.bf16.mxu0 0
        %3202 = vmatmul.mubr.bf16.gmra.mrb[0].mxu0 %v3087
        %v3203 = vpop.f32.mrb[0].mxu0
        %v3204 = vadd.f32 0.0, %v3203
        %v3205 = vpop.f32.mrb[0].mxu0
        %v3206 = vpop.f32.mrb[0].mxu0
        %v3207 = vadd.f32 0.0, %v3206
        %v3208 = vpop.f32.mrb[0].mxu0
        %3209 = vmatprep.mubr.bf16.mxu0 0
        %3210 = vmatmul.mubr.bf16.gmra.mrb[0].mxu0 %v3090
        %v3211 = vpop.f32.mrb[0].mxu0
        %v3212 = vadd.f32 0.0, %v3211
        %v3213 = vpop.f32.mrb[0].mxu0
        %v3214 = vpop.f32.mrb[0].mxu0
        %v3215 = vadd.f32 0.0, %v3214
        %v3216 = vpop.f32.mrb[0].mxu0
        %3217 = vmatprep.mubr.bf16.mxu0 0
        %3218 = vmatmul.mubr.bf16.gmra.mrb[0].mxu0 %v3093
        %v3219 = vpop.f32.mrb[0].mxu0
        %v3220 = vadd.f32 0.0, %v3219
        %v3221 = vpop.f32.mrb[0].mxu0
        %v3222 = vpop.f32.mrb[0].mxu0
        %v3223 = vadd.f32 0.0, %v3222
        %v3224 = vpop.f32.mrb[0].mxu0
        %3225 = vmatprep.mubr.bf16.mxu0 0
        %3226 = vmatmul.mubr.bf16.gmra.mrb[0].mxu0 %v3096
        %v3227 = vpop.f32.mrb[0].mxu0
        %v3228 = vadd.f32 0.0, %v3227
        %v3229 = vpop.f32.mrb[0].mxu0
        %v3230 = vpop.f32.mrb[0].mxu0
        %v3231 = vadd.f32 0.0, %v3230
        %v3232 = vpop.f32.mrb[0].mxu0
        %3233 = vmatprep.mubr.bf16.mxu0 0
        %3234 = vmatmul.mubr.bf16.gmra.mrb[0].mxu0 %v3099
        %v3235 = vpop.f32.mrb[0].mxu0
        %v3236 = vadd.f32 0.0, %v3235
        %v3237 = vpop.f32.mrb[0].mxu0
        %v3238 = vpop.f32.mrb[0].mxu0
        %v3239 = vadd.f32 0.0, %v3238
        %v3240 = vpop.f32.mrb[0].mxu0
        %3241 = vmatprep.mubr.bf16.mxu0 0
        %3242 = vmatmul.mubr.bf16.gmra.mrb[0].mxu0 %v3102
        %v3243 = vpop.f32.mrb[0].mxu0
        %v3244 = vadd.f32 0.0, %v3243
        %v3245 = vpop.f32.mrb[0].mxu0
        %v3246 = vpop.f32.mrb[0].mxu0
        %v3247 = vadd.f32 0.0, %v3246
        %v3248 = vpop.f32.mrb[0].mxu0
        %3249 = vmatprep.mubr.bf16.mxu0 0
        %3250 = vmatmul.mubr.bf16.gmra.mrb[0].mxu0 %v3105
        %v3251 = vpop.f32.mrb[0].mxu0
        %v3252 = vadd.f32 0.0, %v3251
        %v3253 = vpop.f32.mrb[0].mxu0
        %v3254 = vpop.f32.mrb[0].mxu0
        %v3255 = vadd.f32 0.0, %v3254
        %v3256 = vpop.f32.mrb[0].mxu0
        %3257 = vmatprep.mubr.bf16.mxu0 0
        %3258 = vmatmul.mubr.bf16.gmra.mrb[0].mxu0 %v3108
        %v3259 = vpop.f32.mrb[0].mxu0
        %v3260 = vadd.f32 0.0, %v3259
        %v3261 = vpop.f32.mrb[0].mxu0
        %v3262 = vpop.f32.mrb[0].mxu0
        %v3263 = vadd.f32 0.0, %v3262
        %v3264 = vpop.f32.mrb[0].mxu0
        %3265 = vmatprep.mubr.bf16.mxu0 0
        %3266 = vmatmul.mubr.bf16.gmra.mrb[0].mxu0 %v3111
        %v3267 = vpop.f32.mrb[0].mxu0
        %v3268 = vadd.f32 0.0, %v3267
        %v3269 = vpop.f32.mrb[0].mxu0
        %v3270 = vpop.f32.mrb[0].mxu0
        %v3271 = vadd.f32 0.0, %v3270
        %v3272 = vpop.f32.mrb[0].mxu0
        %3273 = vdwg.mxu0
        %v3274 = vadd.f32 %v2923, %v3148
        %v3275 = vadd.f32 %v2926, %v3151
        %v3276 = vadd.f32 %v2931, %v3156
        %v3277 = vadd.f32 %v2934, %v3159
        %v3278 = vadd.f32 %v2939, %v3164
        %v3279 = vadd.f32 %v2942, %v3167
        %v3280 = vadd.f32 %v2947, %v3172
        %v3281 = vadd.f32 %v2950, %v3175
        %v3282 = vadd.f32 %v2955, %v3180
        %v3283 = vadd.f32 %v2958, %v3183
        %v3284 = vadd.f32 %v2963, %v3188
        %v3285 = vadd.f32 %v2966, %v3191
        %v3286 = vadd.f32 %v2971, %v3196
        %v3287 = vadd.f32 %v2974, %v3199
        %v3288 = vadd.f32 %v2979, %v3204
        %v3289 = vadd.f32 %v2982, %v3207
        %v3290 = vadd.f32 %v2987, %v3212
        %v3291 = vadd.f32 %v2990, %v3215
        %v3292 = vadd.f32 %v2995, %v3220
        %v3293 = vadd.f32 %v2998, %v3223
        %v3294 = vadd.f32 %v3003, %v3228
        %v3295 = vadd.f32 %v3006, %v3231
        %v3296 = vadd.f32 %v3011, %v3236
        %v3297 = vadd.f32 %v3014, %v3239
        %v3298 = vadd.f32 %v3019, %v3244
        %v3299 = vadd.f32 %v3022, %v3247
        %v3300 = vadd.f32 %v3027, %v3252
        %v3301 = vadd.f32 %v3030, %v3255
        %v3302 = vadd.f32 %v3035, %v3260
        %v3303 = vadd.f32 %v3038, %v3263
        %v3304 = vadd.f32 %v3043, %v3268
        %v3305 = vadd.f32 %v3046, %v3271
        %v3306 = vlaneseq
        %v3307 = vshrl.u32 %v3306, 7
        %v3308 = vsub.s32 0, %v3307
        %v3309 = vrot.slane %v2532, %v3308
        %v3310 = vadd.f32 %v3274, %v3309
        %v3311 = vadd.f32 %v3275, %v3309
        %v3312 = vadd.f32 %v3276, %v3309
        %v3313 = vadd.f32 %v3277, %v3309
        %v3314 = vadd.f32 %v3278, %v3309
        %v3315 = vadd.f32 %v3279, %v3309
        %v3316 = vadd.f32 %v3280, %v3309
        %v3317 = vadd.f32 %v3281, %v3309
        %v3318 = vadd.f32 %v3282, %v3309
        %v3319 = vadd.f32 %v3283, %v3309
        %v3320 = vadd.f32 %v3284, %v3309
        %v3321 = vadd.f32 %v3285, %v3309
        %v3322 = vadd.f32 %v3286, %v3309
        %v3323 = vadd.f32 %v3287, %v3309
        %v3324 = vadd.f32 %v3288, %v3309
        %v3325 = vadd.f32 %v3289, %v3309
        %v3326 = vadd.f32 %v3290, %v3309
        %v3327 = vadd.f32 %v3291, %v3309
        %v3328 = vadd.f32 %v3292, %v3309
        %v3329 = vadd.f32 %v3293, %v3309
        %v3330 = vadd.f32 %v3294, %v3309
        %v3331 = vadd.f32 %v3295, %v3309
        %v3332 = vadd.f32 %v3296, %v3309
        %v3333 = vadd.f32 %v3297, %v3309
        %v3334 = vadd.f32 %v3298, %v3309
        %v3335 = vadd.f32 %v3299, %v3309
        %v3336 = vadd.f32 %v3300, %v3309
        %v3337 = vadd.f32 %v3301, %v3309
        %v3338 = vadd.f32 %v3302, %v3309
        %v3339 = vadd.f32 %v3303, %v3309
        %v3340 = vadd.f32 %v3304, %v3309
        %v3341 = vadd.f32 %v3305, %v3309
        %3342 = vst.msk [vmem:[%s460] sm:$0xff] %vm1442, %v3310
        %3343 = vst.msk [vmem:[%s460 + $0x8] sm:$0xff] %vm1442, %v3311
        %3344 = vst.msk [vmem:[%s460 + $0x10] sm:$0xff] %vm1442, %v3312
        %3345 = vst.msk [vmem:[%s460 + $0x18] sm:$0xff] %vm1442, %v3313
        %3346 = vst.msk [vmem:[%s460 + $0x20] sm:$0xff] %vm1442, %v3314
        %3347 = vst.msk [vmem:[%s460 + $0x28] sm:$0xff] %vm1442, %v3315
        %3348 = vst.msk [vmem:[%s460 + $0x30] sm:$0xff] %vm1442, %v3316
        %3349 = vst.msk [vmem:[%s460 + $0x38] sm:$0xff] %vm1442, %v3317
        %3350 = vst.msk [vmem:[%s460 + $0x40] sm:$0xff] %vm1442, %v3318
        %3351 = vst.msk [vmem:[%s460 + $0x48] sm:$0xff] %vm1442, %v3319
        %3352 = vst.msk [vmem:[%s460 + $0x50] sm:$0xff] %vm1442, %v3320
        %3353 = vst.msk [vmem:[%s460 + $0x58] sm:$0xff] %vm1442, %v3321
        %3354 = vst.msk [vmem:[%s460 + $0x60] sm:$0xff] %vm1442, %v3322
        %3355 = vst.msk [vmem:[%s460 + $0x68] sm:$0xff] %vm1442, %v3323
        %3356 = vst.msk [vmem:[%s460 + $0x70] sm:$0xff] %vm1442, %v3324
        %3357 = vst.msk [vmem:[%s460 + $0x78] sm:$0xff] %vm1442, %v3325
        %3358 = vst.msk [vmem:[%s460 + $0x80] sm:$0xff] %vm1442, %v3326
        %3359 = vst.msk [vmem:[%s460 + $0x88] sm:$0xff] %vm1442, %v3327
        %3360 = vst.msk [vmem:[%s460 + $0x90] sm:$0xff] %vm1442, %v3328
        %3361 = vst.msk [vmem:[%s460 + $0x98] sm:$0xff] %vm1442, %v3329
        %3362 = vst.msk [vmem:[%s460 + $0xa0] sm:$0xff] %vm1442, %v3330
        %3363 = vst.msk [vmem:[%s460 + $0xa8] sm:$0xff] %vm1442, %v3331
        %3364 = vst.msk [vmem:[%s460 + $0xb0] sm:$0xff] %vm1442, %v3332
        %3365 = vst.msk [vmem:[%s460 + $0xb8] sm:$0xff] %vm1442, %v3333
        %3366 = vst.msk [vmem:[%s460 + $0xc0] sm:$0xff] %vm1442, %v3334
        %3367 = vst.msk [vmem:[%s460 + $0xc8] sm:$0xff] %vm1442, %v3335
        %3368 = vst.msk [vmem:[%s460 + $0xd0] sm:$0xff] %vm1442, %v3336
        %3369 = vst.msk [vmem:[%s460 + $0xd8] sm:$0xff] %vm1442, %v3337
        %3370 = vst.msk [vmem:[%s460 + $0xe0] sm:$0xff] %vm1442, %v3338
        %3371 = vst.msk [vmem:[%s460 + $0xe8] sm:$0xff] %vm1442, %v3339
        %3372 = vst.msk [vmem:[%s460 + $0xf0] sm:$0xff] %vm1442, %v3340
        %3373 = vst.msk [vmem:[%s460 + $0xf8] sm:$0xff] %vm1442, %v3341
        %s3374 = sand.u32 %s335, 1
        %s3375 = scalar_lea.sflag [#allocation3], %s3374
        %s3376 = sand.u32 %s335, 1
        %s3377 = smul.addr %s3376, 256
        %s3378 = scalar_lea.vmem [#allocation2], %s3377
        // Predicated region
        $region77: #{cycle_attn.1} parent=75 // pred_check
          %p3379 = pneg %p345
        $region78: #{cycle_attn.1} parent=75 // pred_check_branch
          %3381 = sbr.rel (%p3379) target = $region80
        $region79: #{cycle_attn.1} parent=75 // pred_region
          %s3383 = ssub.s32 4096, 4096
          %3384 = vsyncadd %s3375, %s3383
          %s3385 = smul.addr %s28, 32
          %s3386 = smul.addr %s3385, 128
          %s3387 = scalar_lea.hbm %s14, %s3386
          %s3388 = sshll.u32 %s3378, 4
          %s3389 = int_to_ptr.vmem [resolvable:$true] %s3388
          %3394 = dma.vmem_to_hbm [thread:$0]  %s3389, 4096, %s3387, %s3375, 128, 128, 8
        $region80: #{cycle_attn.1} parent=75 // pred_fallthru
          _
      $region76: #{cycle_attn.1} parent=5 // pred_fallthru
        _
      %p3395 = scmp.le.s32.totalorder 2, %s23
      // Predicated region
      $region81: #{cycle_attn.1} parent=5 // pred_check
        %p3396 = pneg %p3395
      $region82: #{cycle_attn.1} parent=5 // pred_check_branch
        %3398 = sbr.rel (%p3396) target = $region84
      $region83: #{cycle_attn.1} parent=5 // pred_region
        %s3399 = ssub.s32 %s23, 2
        // Predicated region
        $region85: #{cycle_attn.1} parent=83 // pred_check
          %p3400 = pneg %p351
        $region86: #{cycle_attn.1} parent=83 // pred_check_branch
          %3402 = sbr.rel (%p3400) target = $region88
        $region87: #{cycle_attn.1} parent=83 // pred_region
          %s3403 = sand.u32 %s336, 1
          %s3404 = scalar_lea.sflag [#allocation3], %s3403
          %s3405 = sand.u32 %s336, 1
          %s3406 = smul.addr %s3405, 256
          %s3407 = scalar_lea.vmem [#allocation2], %s3406
          %3408 = dma.done %s3404, 4096
        $region88: #{cycle_attn.1} parent=83 // pred_fallthru
          _
      $region84: #{cycle_attn.1} parent=5 // pred_fallthru
        _
    $region6: #{cycle_attn.1} parent=1 // loop_footer
      %s27 = sadd.s32 1, %s23
    $region7: #{cycle_attn.1} parent=1 // loop_footer_branch
      %22 = sbr.rel target = $region3
    $region8: #{cycle_attn.1} parent=1 // loop_exit
      _
    %3409 = vsyncpa [#allocation3], 1
    %s3410 = scalar_lea.sflag [#allocation3], 1
    %3411 = vsyncpa %s3410, 1

</llo_original>
